<compile_context>
chip_gen: v5e
topology: v5e:2x2
jax: 0.10.0
libtpu: 0.0.40
codegen_flags: <defaults>
</compile_context>

<pallas_src>
import functools

import jax
import jax.numpy as jnp
from jax import lax
from jax.experimental import pallas as pl
from jax.experimental.pallas import tpu as pltpu


def _round_up(x, m):
    return (x + m - 1) // m * m


def _pick_tco(cp, w_itemsize):
    """Largest output-channel tile (multiple of 128, divisor of cp) whose
    27*cp*tco weight tile stays within a ~12 MiB single-buffer budget."""
    budget = 12 * 1024 * 1024
    for tco in (cp, 512, 384, 256, 128):
        if (tco <= cp and cp % tco == 0 and tco % 128 == 0
                and 27 * cp * tco * w_itemsize <= budget):
            return tco
    return 128


# ----------------------------- Pallas kernel -----------------------------

def _cpe_kernel(x_hbm, w_ref, b_ref, o_ref, ring, sem, *, wp, nrout, dp, d_out):
    # x_hbm : (B*Dp, NRin, Cp)    padded channels-last planes in HBM (pl.ANY)
    # w_ref : (3, 3, 3, Cp, TCO)  all taps for this co tile; resident across (b, d)
    # b_ref : (1, TCO)            f32 bias slice (accumulator init)
    # o_ref : (NRout, TCO)        output plane for (b, d, co)
    # ring  : (4, NRin, Cp)       VMEM rolling depth-halo ring
    # sem   : (4,)                one DMA semaphore per ring slot
    b = pl.program_id(1)
    d = pl.program_id(2)
    base = b * dp                       # first padded plane of this batch item
    tco = o_ref.shape[1]

    def plane_copy(plane_idx, slot):
        return pltpu.make_async_copy(x_hbm.at[base + plane_idx],
                                     ring.at[slot], sem.at[slot])

    # ---- rolling 3-plane halo: need planes d, d+1, d+2; prefetch d+3 ----
    @pl.when(d == 0)
    def _prime_start():                 # new (co, b) sequence: fetch first 3 planes
        for s in range(3):
            plane_copy(s, s).start()

    @pl.when(d <= d_out - 2)            # next step's new plane (d+3 <= Dp-1)
    def _prefetch():
        plane_copy(d + 3, (d + 3) & 3).start()

    @pl.when(d == 0)
    def _prime_wait():
        for s in range(3):
            plane_copy(0, s).wait()     # src index only sets the copy size

    @pl.when(d > 0)
    def _wait_new():
        plane_copy(0, (d + 2) & 3).wait()

    # ---- 27 shifted-window matmuls, f32 accumulation (bias-initialized) ----
    acc = jnp.broadcast_to(b_ref[...], (nrout, tco)).astype(jnp.float32)
    for kd in range(3):
        slot = (d + kd) & 3
        for kh in range(3):
            for kw in range(3):
                off = kh * wp + kw
                win = ring[slot, pl.ds(off, nrout), :]
                acc = acc + jnp.dot(win, w_ref[kd, kh, kw],
                                    preferred_element_type=jnp.float32)
    o_ref[...] = acc.astype(o_ref.dtype)


# ----------------------------- wrappers -----------------------------

def conv_pos_enc_forward_channels_last(x_cl, weight, bias, *,
                                       compute_dtype=jnp.bfloat16,
                                       out_dtype=None):
    """Channels-last fast path.  x_cl: (B, D, H, W, C) -> (B, D, H, W, C)."""
    B, D, H, W, C = x_cl.shape
    assert weight.shape == (C, C, 3, 3, 3)
    if out_dtype is None:
        out_dtype = x_cl.dtype

    Cp = _round_up(C, 128)                       # lane-dense channels
    x_item = jnp.dtype(compute_dtype).itemsize
    out_item = jnp.dtype(out_dtype).itemsize
    tco = _pick_tco(Cp, x_item)
    n_co = Cp // tco

    Dp, Hp, Wp = D + 2, H + 2, W + 2
    nrout = H * Wp                               # output rows per plane
    nrin = _round_up(Hp * Wp + 2, 8)             # plane rows + window slack

    # ---- input layout: pad spatial + channels, flatten each plane ----
    xl = x_cl.astype(compute_dtype)
    xl = jnp.pad(xl, ((0, 0), (1, 1), (1, 1), (1, 1), (0, Cp - C)))
    xl = xl.reshape(B, Dp, Hp * Wp, Cp)
    xl = jnp.pad(xl, ((0, 0), (0, 0), (0, nrin - Hp * Wp), (0, 0)))
    xl = xl.reshape(B * Dp, nrin, Cp)            # (plane, rows, channels)

    # ---- weight (O,I,kd,kh,kw) -> (kd,kh,kw,I,O); fold residual into center tap ----
    wr = jnp.transpose(weight, (2, 3, 4, 1, 0)).astype(jnp.float32)
    wr = wr.at[1, 1, 1].add(jnp.eye(C, dtype=jnp.float32))
    wr = jnp.pad(wr, ((0, 0), (0, 0), (0, 0), (0, Cp - C), (0, Cp - C)))
    wr = wr.astype(compute_dtype)

    b2 = jnp.pad(bias.astype(jnp.float32), (0, Cp - C)).reshape(1, Cp)

    kernel = functools.partial(_cpe_kernel, wp=Wp, nrout=nrout, dp=Dp, d_out=D)

    # cost estimate reflects the reduced HBM traffic (weight once, planes once/co)
    flops = 2 * B * D * nrout * 27 * Cp * Cp
    bytes_accessed = (n_co * B * Dp * nrin * Cp * x_item
                      + 27 * Cp * Cp * x_item
                      + B * D * nrout * Cp * out_item)

    # VMEM footprint: halo ring + 2x weight block + 2x out block + bias.
    footprint = (4 * nrin * Cp * x_item
                 + 2 * 27 * Cp * tco * x_item
                 + 2 * nrout * tco * out_item
                 + 2 * tco * 4)
    vmem_limit = int(min(max(32 * 1024 * 1024, footprint + 16 * 1024 * 1024),
                         112 * 1024 * 1024))

    out = pl.pallas_call(
        kernel,
        out_shape=jax.ShapeDtypeStruct((B, D, nrout, Cp), out_dtype),
        grid_spec=pltpu.PrefetchScalarGridSpec(
            num_scalar_prefetch=0,
            grid=(n_co, B, D),
            in_specs=[
                # raw HBM planes; halo DMA is manual inside the kernel
                pl.BlockSpec(memory_space=pl.ANY),
                # all 27 taps for this co tile; index depends on co only,
                # so the block is fetched once per co and stays resident
                pl.BlockSpec((3, 3, 3, Cp, tco),
                             lambda co, b, d: (0, 0, 0, 0, co)),
                # bias slice (resident per co)
                pl.BlockSpec((1, tco), lambda co, b, d: (0, co)),
            ],
            out_specs=pl.BlockSpec((None, None, nrout, tco),
                                   lambda co, b, d: (b, d, 0, co)),
            scratch_shapes=[
                pltpu.VMEM((4, nrin, Cp), compute_dtype),   # depth-halo ring
                pltpu.SemaphoreType.DMA((4,)),
            ],
        ),
        compiler_params=pltpu.CompilerParams(
            dimension_semantics=("parallel", "parallel", "arbitrary"),
            vmem_limit_bytes=vmem_limit,
        ),
        cost_estimate=pl.CostEstimate(flops=flops, transcendentals=0,
                                      bytes_accessed=bytes_accessed),
    )(xl, wr, b2)

    # (B, D, H*Wp, Cp) -> (B, D, H, W, C): drop garbage width columns & channel pad.
    return out.reshape(B, D, H, Wp, Cp)[:, :, :, :W, :C]


def conv_pos_enc_forward(x, weight, bias, *, compute_dtype=jnp.bfloat16):
    """NCDHW entry point.  x: (B,C,D,H,W); weight: (C,C,3,3,3) OIDHW; bias: (C,)."""
    x_cl = jnp.transpose(x, (0, 2, 3, 4, 1))
    y_cl = conv_pos_enc_forward_channels_last(x_cl, weight, bias,
                                              compute_dtype=compute_dtype,
                                              out_dtype=x.dtype)
    return jnp.transpose(y_cl, (0, 4, 1, 2, 3))


# ----------------------------- Module wrapper -----------------------------

class ConvPosEnc:
    """JAX/Pallas port of timm davit3D ConvPosEnc: x + Conv3d(dim, dim, 3, padding=1)(x)."""

    def __init__(self, dim, k=3, key=None, compute_dtype=jnp.bfloat16):
        if k != 3:
            # The PyTorch module hard-codes padding=1, so only k=3 preserves shape
            # (and makes the residual add well-defined).
            raise NotImplementedError("ConvPosEnc Pallas port supports k=3 only.")
        self.dim = dim
        self.k = k
        self.compute_dtype = compute_dtype
        if key is None:
            key = jax.random.PRNGKey(0)
        kw_, kb_ = jax.random.split(key)
        fan_in = dim * k * k * k
        bound = 1.0 / (fan_in ** 0.5)
        # Conv3d weight (out, in, kd, kh, kw); deterministic init.
        self.proj_weight = jax.random.uniform(
            kw_, (dim, dim, k, k, k), minval=-bound, maxval=bound, dtype=jnp.float32)
        self.proj_bias = jax.random.uniform(
            kb_, (dim,), minval=-bound, maxval=bound, dtype=jnp.float32)

    def __call__(self, x, size):
        # `size` is part of the PyTorch forward signature but unused by it.
        D, H, W = size
        assert x.shape[2:] == (D, H, W), (x.shape, size)
        return conv_pos_enc_forward(x, self.proj_weight, self.proj_bias,
                                    compute_dtype=self.compute_dtype)


# ----------------------------- reference (pure JAX) -----------------------------

def _reference(module, x):
    y = lax.conv_general_dilated(
        x, module.proj_weight, window_strides=(1, 1, 1),
        padding=((1, 1), (1, 1), (1, 1)),
        dimension_numbers=("NCDHW", "OIDHW", "NCDHW"),
        precision=lax.Precision.HIGHEST)
    y = y + module.proj_bias.reshape(1, -1, 1, 1, 1)
    return x + y


if __name__ == "__main__":
    key = jax.random.PRNGKey(0)
    kx, kp = jax.random.split(key)

    # Small shapes; C=96 exercises the 128-lane channel padding path,
    # W=10 exercises the padded-width (garbage-column) flattening,
    # D=4 exercises the rolling depth-halo prime/prefetch logic.
    B, C, D, H, W = 2, 96, 4, 8, 10
    x = jax.random.normal(kx, (B, C, D, H, W), dtype=jnp.float32)

    module = ConvPosEnc(dim=C, k=3, key=kp)            # bf16 compute (default)
    y = jax.block_until_ready(module(x, (D, H, W)))
    y_ref = jax.block_until_ready(_reference(module, x))

    assert y.shape == y_ref.shape, (y.shape, y_ref.shape)
    err_bf16 = float(jnp.max(jnp.abs(y - y_ref)))
    assert jnp.allclose(y, y_ref, atol=1e-1, rtol=1e-1), err_bf16

    # f32 compute path (debug/accuracy) — tight tolerance.
    module_f32 = ConvPosEnc(dim=C, k=3, key=kp, compute_dtype=jnp.float32)
    y_f32 = jax.block_until_ready(module_f32(x, (D, H, W)))
    err_f32 = float(jnp.max(jnp.abs(y_f32 - y_ref)))
    assert jnp.allclose(y_f32, y_ref, atol=2e-2, rtol=2e-2), err_f32

    print("KERNEL_OK")
</pallas_src>

<mosaic_0001>
module attributes {stable_mosaic.version = 11 : i64} {
  func.func @_cpe_kernel(%arg0: i32, %arg1: i32, %arg2: i32, %arg3: memref<12x128x128xbf16, #tpu.memory_space<any>>, %arg4: memref<3x3x3x128x128xbf16, #tpu.memory_space<vmem>>, %arg5: memref<1x128xf32, #tpu.memory_space<vmem>>, %arg6: memref<1x1x96x128xf32, #tpu.memory_space<vmem>>, %arg7: memref<4x128x128xbf16, #tpu.memory_space<vmem>>, %arg8: memref<4x!tpu.dma_semaphore, #tpu.memory_space<semaphore_mem>>) attributes {dimension_semantics = [#tpu.dimension_semantics<parallel>, #tpu.dimension_semantics<parallel>, #tpu.dimension_semantics<arbitrary>], iteration_bounds = array<i64: 1, 2, 4>, scalar_prefetch = 0 : i64, scratch_operands = 2 : i64, tpu.core_type = #tpu.core_type<tc>, window_params = [{}, {transform_indices = @transform_1, window_bounds = array<i64: 3, 3, 3, 128, 128>}, {transform_indices = @transform_2, window_bounds = array<i64: 1, 128>}, {transform_indices = @transform_3, window_bounds = array<i64: 1, 1, 96, 128>}]} {
    %c6_i32 = arith.constant 6 : i32
    %0 = arith.muli %arg1, %c6_i32 : i32
    %c0_i32 = arith.constant 0 : i32
    %1 = arith.cmpi eq, %arg2, %c0_i32 : i32
    %2 = arith.extui %1 : i1 to i32
    %c0_i32_0 = arith.constant 0 : i32
    %3 = arith.cmpi ne, %2, %c0_i32_0 : i32
    scf.if %3 {
      %c0_i32_222 = arith.constant 0 : i32
      %214 = arith.addi %0, %c0_i32_222 : i32
      %c0_i32_223 = arith.constant 0 : i32
      %c0_i32_224 = arith.constant 0 : i32
      %c0_i32_225 = arith.constant 0 : i32
      %c0_i32_226 = arith.constant 0 : i32
      %215 = tpu.memref_slice %arg3[%214, %c0_i32_225, %c0_i32_226] : memref<12x128x128xbf16, #tpu.memory_space<any>> -> memref<1x128x128xbf16, #tpu.memory_space<any>>
      %216 = tpu.memref_squeeze %215 : memref<1x128x128xbf16, #tpu.memory_space<any>> -> memref<128x128xbf16, #tpu.memory_space<any>>
      %c0_i32_227 = arith.constant 0 : i32
      %c0_i32_228 = arith.constant 0 : i32
      %217 = tpu.memref_slice %arg7[%c0_i32_223, %c0_i32_227, %c0_i32_228] : memref<4x128x128xbf16, #tpu.memory_space<vmem>> -> memref<1x128x128xbf16, #tpu.memory_space<vmem>>
      %218 = tpu.memref_squeeze %217 : memref<1x128x128xbf16, #tpu.memory_space<vmem>> -> memref<128x128xbf16, #tpu.memory_space<vmem>>
      %219 = tpu.memref_slice %arg8[%c0_i32_224] : memref<4x!tpu.dma_semaphore, #tpu.memory_space<semaphore_mem>> -> memref<1x!tpu.dma_semaphore, #tpu.memory_space<semaphore_mem>>
      %220 = tpu.memref_squeeze %219 : memref<1x!tpu.dma_semaphore, #tpu.memory_space<semaphore_mem>> -> memref<!tpu.dma_semaphore, #tpu.memory_space<semaphore_mem>>
      tpu.enqueue_dma source(%216 : memref<128x128xbf16, #tpu.memory_space<any>>) target(%218 : memref<128x128xbf16, #tpu.memory_space<vmem>>) target_semaphore(%220 : memref<!tpu.dma_semaphore, #tpu.memory_space<semaphore_mem>>)
      %c1_i32_229 = arith.constant 1 : i32
      %221 = arith.addi %0, %c1_i32_229 : i32
      %c1_i32_230 = arith.constant 1 : i32
      %c1_i32_231 = arith.constant 1 : i32
      %c0_i32_232 = arith.constant 0 : i32
      %c0_i32_233 = arith.constant 0 : i32
      %222 = tpu.memref_slice %arg3[%221, %c0_i32_232, %c0_i32_233] : memref<12x128x128xbf16, #tpu.memory_space<any>> -> memref<1x128x128xbf16, #tpu.memory_space<any>>
      %223 = tpu.memref_squeeze %222 : memref<1x128x128xbf16, #tpu.memory_space<any>> -> memref<128x128xbf16, #tpu.memory_space<any>>
      %c0_i32_234 = arith.constant 0 : i32
      %c0_i32_235 = arith.constant 0 : i32
      %224 = tpu.memref_slice %arg7[%c1_i32_230, %c0_i32_234, %c0_i32_235] : memref<4x128x128xbf16, #tpu.memory_space<vmem>> -> memref<1x128x128xbf16, #tpu.memory_space<vmem>>
      %225 = tpu.memref_squeeze %224 : memref<1x128x128xbf16, #tpu.memory_space<vmem>> -> memref<128x128xbf16, #tpu.memory_space<vmem>>
      %226 = tpu.memref_slice %arg8[%c1_i32_231] : memref<4x!tpu.dma_semaphore, #tpu.memory_space<semaphore_mem>> -> memref<1x!tpu.dma_semaphore, #tpu.memory_space<semaphore_mem>>
      %227 = tpu.memref_squeeze %226 : memref<1x!tpu.dma_semaphore, #tpu.memory_space<semaphore_mem>> -> memref<!tpu.dma_semaphore, #tpu.memory_space<semaphore_mem>>
      tpu.enqueue_dma source(%223 : memref<128x128xbf16, #tpu.memory_space<any>>) target(%225 : memref<128x128xbf16, #tpu.memory_space<vmem>>) target_semaphore(%227 : memref<!tpu.dma_semaphore, #tpu.memory_space<semaphore_mem>>)
      %c2_i32_236 = arith.constant 2 : i32
      %228 = arith.addi %0, %c2_i32_236 : i32
      %c2_i32_237 = arith.constant 2 : i32
      %c2_i32_238 = arith.constant 2 : i32
      %c0_i32_239 = arith.constant 0 : i32
      %c0_i32_240 = arith.constant 0 : i32
      %229 = tpu.memref_slice %arg3[%228, %c0_i32_239, %c0_i32_240] : memref<12x128x128xbf16, #tpu.memory_space<any>> -> memref<1x128x128xbf16, #tpu.memory_space<any>>
      %230 = tpu.memref_squeeze %229 : memref<1x128x128xbf16, #tpu.memory_space<any>> -> memref<128x128xbf16, #tpu.memory_space<any>>
      %c0_i32_241 = arith.constant 0 : i32
      %c0_i32_242 = arith.constant 0 : i32
      %231 = tpu.memref_slice %arg7[%c2_i32_237, %c0_i32_241, %c0_i32_242] : memref<4x128x128xbf16, #tpu.memory_space<vmem>> -> memref<1x128x128xbf16, #tpu.memory_space<vmem>>
      %232 = tpu.memref_squeeze %231 : memref<1x128x128xbf16, #tpu.memory_space<vmem>> -> memref<128x128xbf16, #tpu.memory_space<vmem>>
      %233 = tpu.memref_slice %arg8[%c2_i32_238] : memref<4x!tpu.dma_semaphore, #tpu.memory_space<semaphore_mem>> -> memref<1x!tpu.dma_semaphore, #tpu.memory_space<semaphore_mem>>
      %234 = tpu.memref_squeeze %233 : memref<1x!tpu.dma_semaphore, #tpu.memory_space<semaphore_mem>> -> memref<!tpu.dma_semaphore, #tpu.memory_space<semaphore_mem>>
      tpu.enqueue_dma source(%230 : memref<128x128xbf16, #tpu.memory_space<any>>) target(%232 : memref<128x128xbf16, #tpu.memory_space<vmem>>) target_semaphore(%234 : memref<!tpu.dma_semaphore, #tpu.memory_space<semaphore_mem>>)
    } else {
    }
    %c2_i32 = arith.constant 2 : i32
    %4 = arith.cmpi sle, %arg2, %c2_i32 : i32
    %5 = arith.extui %4 : i1 to i32
    %c0_i32_1 = arith.constant 0 : i32
    %6 = arith.cmpi ne, %5, %c0_i32_1 : i32
    scf.if %6 {
      %c3_i32_222 = arith.constant 3 : i32
      %214 = arith.addi %arg2, %c3_i32_222 : i32
      %c3_i32_223 = arith.constant 3 : i32
      %215 = arith.addi %arg2, %c3_i32_223 : i32
      %c3_i32_224 = arith.constant 3 : i32
      %216 = arith.andi %215, %c3_i32_224 : i32
      %217 = arith.addi %0, %214 : i32
      %c0_i32_225 = arith.constant 0 : i32
      %c0_i32_226 = arith.constant 0 : i32
      %218 = tpu.memref_slice %arg3[%217, %c0_i32_225, %c0_i32_226] : memref<12x128x128xbf16, #tpu.memory_space<any>> -> memref<1x128x128xbf16, #tpu.memory_space<any>>
      %219 = tpu.memref_squeeze %218 : memref<1x128x128xbf16, #tpu.memory_space<any>> -> memref<128x128xbf16, #tpu.memory_space<any>>
      %c0_i32_227 = arith.constant 0 : i32
      %c0_i32_228 = arith.constant 0 : i32
      %220 = tpu.memref_slice %arg7[%216, %c0_i32_227, %c0_i32_228] : memref<4x128x128xbf16, #tpu.memory_space<vmem>> -> memref<1x128x128xbf16, #tpu.memory_space<vmem>>
      %221 = tpu.memref_squeeze %220 : memref<1x128x128xbf16, #tpu.memory_space<vmem>> -> memref<128x128xbf16, #tpu.memory_space<vmem>>
      %222 = tpu.memref_slice %arg8[%216] : memref<4x!tpu.dma_semaphore, #tpu.memory_space<semaphore_mem>> -> memref<1x!tpu.dma_semaphore, #tpu.memory_space<semaphore_mem>>
      %223 = tpu.memref_squeeze %222 : memref<1x!tpu.dma_semaphore, #tpu.memory_space<semaphore_mem>> -> memref<!tpu.dma_semaphore, #tpu.memory_space<semaphore_mem>>
      tpu.enqueue_dma source(%219 : memref<128x128xbf16, #tpu.memory_space<any>>) target(%221 : memref<128x128xbf16, #tpu.memory_space<vmem>>) target_semaphore(%223 : memref<!tpu.dma_semaphore, #tpu.memory_space<semaphore_mem>>)
    } else {
    }
    %c0_i32_2 = arith.constant 0 : i32
    %7 = arith.cmpi eq, %arg2, %c0_i32_2 : i32
    %8 = arith.extui %7 : i1 to i32
    %c0_i32_3 = arith.constant 0 : i32
    %9 = arith.cmpi ne, %8, %c0_i32_3 : i32
    scf.if %9 {
      %c0_i32_222 = arith.constant 0 : i32
      %214 = arith.addi %0, %c0_i32_222 : i32
      %c0_i32_223 = arith.constant 0 : i32
      %c0_i32_224 = arith.constant 0 : i32
      %c0_i32_225 = arith.constant 0 : i32
      %c0_i32_226 = arith.constant 0 : i32
      %215 = tpu.memref_slice %arg3[%214, %c0_i32_225, %c0_i32_226] : memref<12x128x128xbf16, #tpu.memory_space<any>> -> memref<1x128x128xbf16, #tpu.memory_space<any>>
      %216 = tpu.memref_squeeze %215 : memref<1x128x128xbf16, #tpu.memory_space<any>> -> memref<128x128xbf16, #tpu.memory_space<any>>
      %c0_i32_227 = arith.constant 0 : i32
      %c0_i32_228 = arith.constant 0 : i32
      %217 = tpu.memref_slice %arg7[%c0_i32_223, %c0_i32_227, %c0_i32_228] : memref<4x128x128xbf16, #tpu.memory_space<vmem>> -> memref<1x128x128xbf16, #tpu.memory_space<vmem>>
      %218 = tpu.memref_squeeze %217 : memref<1x128x128xbf16, #tpu.memory_space<vmem>> -> memref<128x128xbf16, #tpu.memory_space<vmem>>
      %219 = tpu.memref_slice %arg8[%c0_i32_224] : memref<4x!tpu.dma_semaphore, #tpu.memory_space<semaphore_mem>> -> memref<1x!tpu.dma_semaphore, #tpu.memory_space<semaphore_mem>>
      %220 = tpu.memref_squeeze %219 : memref<1x!tpu.dma_semaphore, #tpu.memory_space<semaphore_mem>> -> memref<!tpu.dma_semaphore, #tpu.memory_space<semaphore_mem>>
      tpu.wait_dma2 semaphore(%220 : memref<!tpu.dma_semaphore, #tpu.memory_space<semaphore_mem>>) src(%216 : memref<128x128xbf16, #tpu.memory_space<any>>) dst(%218 : memref<128x128xbf16, #tpu.memory_space<vmem>>)
      %c0_i32_229 = arith.constant 0 : i32
      %221 = arith.addi %0, %c0_i32_229 : i32
      %c1_i32_230 = arith.constant 1 : i32
      %c1_i32_231 = arith.constant 1 : i32
      %c0_i32_232 = arith.constant 0 : i32
      %c0_i32_233 = arith.constant 0 : i32
      %222 = tpu.memref_slice %arg3[%221, %c0_i32_232, %c0_i32_233] : memref<12x128x128xbf16, #tpu.memory_space<any>> -> memref<1x128x128xbf16, #tpu.memory_space<any>>
      %223 = tpu.memref_squeeze %222 : memref<1x128x128xbf16, #tpu.memory_space<any>> -> memref<128x128xbf16, #tpu.memory_space<any>>
      %c0_i32_234 = arith.constant 0 : i32
      %c0_i32_235 = arith.constant 0 : i32
      %224 = tpu.memref_slice %arg7[%c1_i32_230, %c0_i32_234, %c0_i32_235] : memref<4x128x128xbf16, #tpu.memory_space<vmem>> -> memref<1x128x128xbf16, #tpu.memory_space<vmem>>
      %225 = tpu.memref_squeeze %224 : memref<1x128x128xbf16, #tpu.memory_space<vmem>> -> memref<128x128xbf16, #tpu.memory_space<vmem>>
      %226 = tpu.memref_slice %arg8[%c1_i32_231] : memref<4x!tpu.dma_semaphore, #tpu.memory_space<semaphore_mem>> -> memref<1x!tpu.dma_semaphore, #tpu.memory_space<semaphore_mem>>
      %227 = tpu.memref_squeeze %226 : memref<1x!tpu.dma_semaphore, #tpu.memory_space<semaphore_mem>> -> memref<!tpu.dma_semaphore, #tpu.memory_space<semaphore_mem>>
      tpu.wait_dma2 semaphore(%227 : memref<!tpu.dma_semaphore, #tpu.memory_space<semaphore_mem>>) src(%223 : memref<128x128xbf16, #tpu.memory_space<any>>) dst(%225 : memref<128x128xbf16, #tpu.memory_space<vmem>>)
      %c0_i32_236 = arith.constant 0 : i32
      %228 = arith.addi %0, %c0_i32_236 : i32
      %c2_i32_237 = arith.constant 2 : i32
      %c2_i32_238 = arith.constant 2 : i32
      %c0_i32_239 = arith.constant 0 : i32
      %c0_i32_240 = arith.constant 0 : i32
      %229 = tpu.memref_slice %arg3[%228, %c0_i32_239, %c0_i32_240] : memref<12x128x128xbf16, #tpu.memory_space<any>> -> memref<1x128x128xbf16, #tpu.memory_space<any>>
      %230 = tpu.memref_squeeze %229 : memref<1x128x128xbf16, #tpu.memory_space<any>> -> memref<128x128xbf16, #tpu.memory_space<any>>
      %c0_i32_241 = arith.constant 0 : i32
      %c0_i32_242 = arith.constant 0 : i32
      %231 = tpu.memref_slice %arg7[%c2_i32_237, %c0_i32_241, %c0_i32_242] : memref<4x128x128xbf16, #tpu.memory_space<vmem>> -> memref<1x128x128xbf16, #tpu.memory_space<vmem>>
      %232 = tpu.memref_squeeze %231 : memref<1x128x128xbf16, #tpu.memory_space<vmem>> -> memref<128x128xbf16, #tpu.memory_space<vmem>>
      %233 = tpu.memref_slice %arg8[%c2_i32_238] : memref<4x!tpu.dma_semaphore, #tpu.memory_space<semaphore_mem>> -> memref<1x!tpu.dma_semaphore, #tpu.memory_space<semaphore_mem>>
      %234 = tpu.memref_squeeze %233 : memref<1x!tpu.dma_semaphore, #tpu.memory_space<semaphore_mem>> -> memref<!tpu.dma_semaphore, #tpu.memory_space<semaphore_mem>>
      tpu.wait_dma2 semaphore(%234 : memref<!tpu.dma_semaphore, #tpu.memory_space<semaphore_mem>>) src(%230 : memref<128x128xbf16, #tpu.memory_space<any>>) dst(%232 : memref<128x128xbf16, #tpu.memory_space<vmem>>)
    } else {
    }
    %c0_i32_4 = arith.constant 0 : i32
    %10 = arith.cmpi sgt, %arg2, %c0_i32_4 : i32
    %11 = arith.extui %10 : i1 to i32
    %c0_i32_5 = arith.constant 0 : i32
    %12 = arith.cmpi ne, %11, %c0_i32_5 : i32
    scf.if %12 {
      %c2_i32_222 = arith.constant 2 : i32
      %214 = arith.addi %arg2, %c2_i32_222 : i32
      %c3_i32_223 = arith.constant 3 : i32
      %215 = arith.andi %214, %c3_i32_223 : i32
      %c0_i32_224 = arith.constant 0 : i32
      %216 = arith.addi %0, %c0_i32_224 : i32
      %c0_i32_225 = arith.constant 0 : i32
      %c0_i32_226 = arith.constant 0 : i32
      %217 = tpu.memref_slice %arg3[%216, %c0_i32_225, %c0_i32_226] : memref<12x128x128xbf16, #tpu.memory_space<any>> -> memref<1x128x128xbf16, #tpu.memory_space<any>>
      %218 = tpu.memref_squeeze %217 : memref<1x128x128xbf16, #tpu.memory_space<any>> -> memref<128x128xbf16, #tpu.memory_space<any>>
      %c0_i32_227 = arith.constant 0 : i32
      %c0_i32_228 = arith.constant 0 : i32
      %219 = tpu.memref_slice %arg7[%215, %c0_i32_227, %c0_i32_228] : memref<4x128x128xbf16, #tpu.memory_space<vmem>> -> memref<1x128x128xbf16, #tpu.memory_space<vmem>>
      %220 = tpu.memref_squeeze %219 : memref<1x128x128xbf16, #tpu.memory_space<vmem>> -> memref<128x128xbf16, #tpu.memory_space<vmem>>
      %221 = tpu.memref_slice %arg8[%215] : memref<4x!tpu.dma_semaphore, #tpu.memory_space<semaphore_mem>> -> memref<1x!tpu.dma_semaphore, #tpu.memory_space<semaphore_mem>>
      %222 = tpu.memref_squeeze %221 : memref<1x!tpu.dma_semaphore, #tpu.memory_space<semaphore_mem>> -> memref<!tpu.dma_semaphore, #tpu.memory_space<semaphore_mem>>
      tpu.wait_dma2 semaphore(%222 : memref<!tpu.dma_semaphore, #tpu.memory_space<semaphore_mem>>) src(%218 : memref<128x128xbf16, #tpu.memory_space<any>>) dst(%220 : memref<128x128xbf16, #tpu.memory_space<vmem>>)
    } else {
    }
    %c0 = arith.constant 0 : index
    %c0_6 = arith.constant 0 : index
    %13 = vector.load %arg5[%c0, %c0_6] : memref<1x128xf32, #tpu.memory_space<vmem>>, vector<1x128xf32>
    %14 = vector.shape_cast %13 : vector<1x128xf32> to vector<1x128xf32>
    %15 = vector.broadcast %14 : vector<1x128xf32> to vector<96x128xf32>
    %c0_i32_7 = arith.constant 0 : i32
    %16 = arith.addi %arg2, %c0_i32_7 : i32
    %c3_i32 = arith.constant 3 : i32
    %17 = arith.andi %16, %c3_i32 : i32
    %18 = arith.index_cast %17 : i32 to index
    %c0_8 = arith.constant 0 : index
    %c0_9 = arith.constant 0 : index
    %19 = vector.load %arg7[%18, %c0_8, %c0_9] : memref<4x128x128xbf16, #tpu.memory_space<vmem>>, vector<1x96x128xbf16>
    %20 = vector.shape_cast %19 : vector<1x96x128xbf16> to vector<96x128xbf16>
    %c0_10 = arith.constant 0 : index
    %c0_11 = arith.constant 0 : index
    %c0_12 = arith.constant 0 : index
    %c0_13 = arith.constant 0 : index
    %c0_14 = arith.constant 0 : index
    %21 = vector.load %arg4[%c0_10, %c0_11, %c0_12, %c0_13, %c0_14] : memref<3x3x3x128x128xbf16, #tpu.memory_space<vmem>>, vector<1x1x1x128x128xbf16>
    %22 = vector.shape_cast %21 : vector<1x1x1x128x128xbf16> to vector<128x128xbf16>
    %cst = arith.constant dense<0.000000e+00> : vector<96x128xf32>
    %23 = tpu.matmul %20, %22, %cst {dimension_numbers = #tpu.dot_dimension_numbers<[1], [0], [0], [1], [0, 0, 1, 1], [], []>} : vector<96x128xbf16>, vector<128x128xbf16>, vector<96x128xf32> -> vector<96x128xf32>
    %24 = arith.addf %15, %23 : vector<96x128xf32>
    %25 = arith.index_cast %17 : i32 to index
    %c1 = arith.constant 1 : index
    %c0_15 = arith.constant 0 : index
    %26 = vector.load %arg7[%25, %c1, %c0_15] : memref<4x128x128xbf16, #tpu.memory_space<vmem>>, vector<1x96x128xbf16>
    %27 = vector.shape_cast %26 : vector<1x96x128xbf16> to vector<96x128xbf16>
    %c0_16 = arith.constant 0 : index
    %c0_17 = arith.constant 0 : index
    %c1_18 = arith.constant 1 : index
    %c0_19 = arith.constant 0 : index
    %c0_20 = arith.constant 0 : index
    %28 = vector.load %arg4[%c0_16, %c0_17, %c1_18, %c0_19, %c0_20] : memref<3x3x3x128x128xbf16, #tpu.memory_space<vmem>>, vector<1x1x1x128x128xbf16>
    %29 = vector.shape_cast %28 : vector<1x1x1x128x128xbf16> to vector<128x128xbf16>
    %cst_21 = arith.constant dense<0.000000e+00> : vector<96x128xf32>
    %30 = tpu.matmul %27, %29, %cst_21 {dimension_numbers = #tpu.dot_dimension_numbers<[1], [0], [0], [1], [0, 0, 1, 1], [], []>} : vector<96x128xbf16>, vector<128x128xbf16>, vector<96x128xf32> -> vector<96x128xf32>
    %31 = arith.addf %24, %30 : vector<96x128xf32>
    %32 = arith.index_cast %17 : i32 to index
    %c2 = arith.constant 2 : index
    %c0_22 = arith.constant 0 : index
    %33 = vector.load %arg7[%32, %c2, %c0_22] : memref<4x128x128xbf16, #tpu.memory_space<vmem>>, vector<1x96x128xbf16>
    %34 = vector.shape_cast %33 : vector<1x96x128xbf16> to vector<96x128xbf16>
    %c0_23 = arith.constant 0 : index
    %c0_24 = arith.constant 0 : index
    %c2_25 = arith.constant 2 : index
    %c0_26 = arith.constant 0 : index
    %c0_27 = arith.constant 0 : index
    %35 = vector.load %arg4[%c0_23, %c0_24, %c2_25, %c0_26, %c0_27] : memref<3x3x3x128x128xbf16, #tpu.memory_space<vmem>>, vector<1x1x1x128x128xbf16>
    %36 = vector.shape_cast %35 : vector<1x1x1x128x128xbf16> to vector<128x128xbf16>
    %cst_28 = arith.constant dense<0.000000e+00> : vector<96x128xf32>
    %37 = tpu.matmul %34, %36, %cst_28 {dimension_numbers = #tpu.dot_dimension_numbers<[1], [0], [0], [1], [0, 0, 1, 1], [], []>} : vector<96x128xbf16>, vector<128x128xbf16>, vector<96x128xf32> -> vector<96x128xf32>
    %38 = arith.addf %31, %37 : vector<96x128xf32>
    %39 = arith.index_cast %17 : i32 to index
    %c12 = arith.constant 12 : index
    %c0_29 = arith.constant 0 : index
    %40 = vector.load %arg7[%39, %c12, %c0_29] : memref<4x128x128xbf16, #tpu.memory_space<vmem>>, vector<1x96x128xbf16>
    %41 = vector.shape_cast %40 : vector<1x96x128xbf16> to vector<96x128xbf16>
    %c0_30 = arith.constant 0 : index
    %c1_31 = arith.constant 1 : index
    %c0_32 = arith.constant 0 : index
    %c0_33 = arith.constant 0 : index
    %c0_34 = arith.constant 0 : index
    %42 = vector.load %arg4[%c0_30, %c1_31, %c0_32, %c0_33, %c0_34] : memref<3x3x3x128x128xbf16, #tpu.memory_space<vmem>>, vector<1x1x1x128x128xbf16>
    %43 = vector.shape_cast %42 : vector<1x1x1x128x128xbf16> to vector<128x128xbf16>
    %cst_35 = arith.constant dense<0.000000e+00> : vector<96x128xf32>
    %44 = tpu.matmul %41, %43, %cst_35 {dimension_numbers = #tpu.dot_dimension_numbers<[1], [0], [0], [1], [0, 0, 1, 1], [], []>} : vector<96x128xbf16>, vector<128x128xbf16>, vector<96x128xf32> -> vector<96x128xf32>
    %45 = arith.addf %38, %44 : vector<96x128xf32>
    %46 = arith.index_cast %17 : i32 to index
    %c13 = arith.constant 13 : index
    %c0_36 = arith.constant 0 : index
    %47 = vector.load %arg7[%46, %c13, %c0_36] : memref<4x128x128xbf16, #tpu.memory_space<vmem>>, vector<1x96x128xbf16>
    %48 = vector.shape_cast %47 : vector<1x96x128xbf16> to vector<96x128xbf16>
    %c0_37 = arith.constant 0 : index
    %c1_38 = arith.constant 1 : index
    %c1_39 = arith.constant 1 : index
    %c0_40 = arith.constant 0 : index
    %c0_41 = arith.constant 0 : index
    %49 = vector.load %arg4[%c0_37, %c1_38, %c1_39, %c0_40, %c0_41] : memref<3x3x3x128x128xbf16, #tpu.memory_space<vmem>>, vector<1x1x1x128x128xbf16>
    %50 = vector.shape_cast %49 : vector<1x1x1x128x128xbf16> to vector<128x128xbf16>
    %cst_42 = arith.constant dense<0.000000e+00> : vector<96x128xf32>
    %51 = tpu.matmul %48, %50, %cst_42 {dimension_numbers = #tpu.dot_dimension_numbers<[1], [0], [0], [1], [0, 0, 1, 1], [], []>} : vector<96x128xbf16>, vector<128x128xbf16>, vector<96x128xf32> -> vector<96x128xf32>
    %52 = arith.addf %45, %51 : vector<96x128xf32>
    %53 = arith.index_cast %17 : i32 to index
    %c14 = arith.constant 14 : index
    %c0_43 = arith.constant 0 : index
    %54 = vector.load %arg7[%53, %c14, %c0_43] : memref<4x128x128xbf16, #tpu.memory_space<vmem>>, vector<1x96x128xbf16>
    %55 = vector.shape_cast %54 : vector<1x96x128xbf16> to vector<96x128xbf16>
    %c0_44 = arith.constant 0 : index
    %c1_45 = arith.constant 1 : index
    %c2_46 = arith.constant 2 : index
    %c0_47 = arith.constant 0 : index
    %c0_48 = arith.constant 0 : index
    %56 = vector.load %arg4[%c0_44, %c1_45, %c2_46, %c0_47, %c0_48] : memref<3x3x3x128x128xbf16, #tpu.memory_space<vmem>>, vector<1x1x1x128x128xbf16>
    %57 = vector.shape_cast %56 : vector<1x1x1x128x128xbf16> to vector<128x128xbf16>
    %cst_49 = arith.constant dense<0.000000e+00> : vector<96x128xf32>
    %58 = tpu.matmul %55, %57, %cst_49 {dimension_numbers = #tpu.dot_dimension_numbers<[1], [0], [0], [1], [0, 0, 1, 1], [], []>} : vector<96x128xbf16>, vector<128x128xbf16>, vector<96x128xf32> -> vector<96x128xf32>
    %59 = arith.addf %52, %58 : vector<96x128xf32>
    %60 = arith.index_cast %17 : i32 to index
    %c24 = arith.constant 24 : index
    %c0_50 = arith.constant 0 : index
    %61 = vector.load %arg7[%60, %c24, %c0_50] : memref<4x128x128xbf16, #tpu.memory_space<vmem>>, vector<1x96x128xbf16>
    %62 = vector.shape_cast %61 : vector<1x96x128xbf16> to vector<96x128xbf16>
    %c0_51 = arith.constant 0 : index
    %c2_52 = arith.constant 2 : index
    %c0_53 = arith.constant 0 : index
    %c0_54 = arith.constant 0 : index
    %c0_55 = arith.constant 0 : index
    %63 = vector.load %arg4[%c0_51, %c2_52, %c0_53, %c0_54, %c0_55] : memref<3x3x3x128x128xbf16, #tpu.memory_space<vmem>>, vector<1x1x1x128x128xbf16>
    %64 = vector.shape_cast %63 : vector<1x1x1x128x128xbf16> to vector<128x128xbf16>
    %cst_56 = arith.constant dense<0.000000e+00> : vector<96x128xf32>
    %65 = tpu.matmul %62, %64, %cst_56 {dimension_numbers = #tpu.dot_dimension_numbers<[1], [0], [0], [1], [0, 0, 1, 1], [], []>} : vector<96x128xbf16>, vector<128x128xbf16>, vector<96x128xf32> -> vector<96x128xf32>
    %66 = arith.addf %59, %65 : vector<96x128xf32>
    %67 = arith.index_cast %17 : i32 to index
    %c25 = arith.constant 25 : index
    %c0_57 = arith.constant 0 : index
    %68 = vector.load %arg7[%67, %c25, %c0_57] : memref<4x128x128xbf16, #tpu.memory_space<vmem>>, vector<1x96x128xbf16>
    %69 = vector.shape_cast %68 : vector<1x96x128xbf16> to vector<96x128xbf16>
    %c0_58 = arith.constant 0 : index
    %c2_59 = arith.constant 2 : index
    %c1_60 = arith.constant 1 : index
    %c0_61 = arith.constant 0 : index
    %c0_62 = arith.constant 0 : index
    %70 = vector.load %arg4[%c0_58, %c2_59, %c1_60, %c0_61, %c0_62] : memref<3x3x3x128x128xbf16, #tpu.memory_space<vmem>>, vector<1x1x1x128x128xbf16>
    %71 = vector.shape_cast %70 : vector<1x1x1x128x128xbf16> to vector<128x128xbf16>
    %cst_63 = arith.constant dense<0.000000e+00> : vector<96x128xf32>
    %72 = tpu.matmul %69, %71, %cst_63 {dimension_numbers = #tpu.dot_dimension_numbers<[1], [0], [0], [1], [0, 0, 1, 1], [], []>} : vector<96x128xbf16>, vector<128x128xbf16>, vector<96x128xf32> -> vector<96x128xf32>
    %73 = arith.addf %66, %72 : vector<96x128xf32>
    %74 = arith.index_cast %17 : i32 to index
    %c26 = arith.constant 26 : index
    %c0_64 = arith.constant 0 : index
    %75 = vector.load %arg7[%74, %c26, %c0_64] : memref<4x128x128xbf16, #tpu.memory_space<vmem>>, vector<1x96x128xbf16>
    %76 = vector.shape_cast %75 : vector<1x96x128xbf16> to vector<96x128xbf16>
    %c0_65 = arith.constant 0 : index
    %c2_66 = arith.constant 2 : index
    %c2_67 = arith.constant 2 : index
    %c0_68 = arith.constant 0 : index
    %c0_69 = arith.constant 0 : index
    %77 = vector.load %arg4[%c0_65, %c2_66, %c2_67, %c0_68, %c0_69] : memref<3x3x3x128x128xbf16, #tpu.memory_space<vmem>>, vector<1x1x1x128x128xbf16>
    %78 = vector.shape_cast %77 : vector<1x1x1x128x128xbf16> to vector<128x128xbf16>
    %cst_70 = arith.constant dense<0.000000e+00> : vector<96x128xf32>
    %79 = tpu.matmul %76, %78, %cst_70 {dimension_numbers = #tpu.dot_dimension_numbers<[1], [0], [0], [1], [0, 0, 1, 1], [], []>} : vector<96x128xbf16>, vector<128x128xbf16>, vector<96x128xf32> -> vector<96x128xf32>
    %80 = arith.addf %73, %79 : vector<96x128xf32>
    %c1_i32 = arith.constant 1 : i32
    %81 = arith.addi %arg2, %c1_i32 : i32
    %c3_i32_71 = arith.constant 3 : i32
    %82 = arith.andi %81, %c3_i32_71 : i32
    %83 = arith.index_cast %82 : i32 to index
    %c0_72 = arith.constant 0 : index
    %c0_73 = arith.constant 0 : index
    %84 = vector.load %arg7[%83, %c0_72, %c0_73] : memref<4x128x128xbf16, #tpu.memory_space<vmem>>, vector<1x96x128xbf16>
    %85 = vector.shape_cast %84 : vector<1x96x128xbf16> to vector<96x128xbf16>
    %c1_74 = arith.constant 1 : index
    %c0_75 = arith.constant 0 : index
    %c0_76 = arith.constant 0 : index
    %c0_77 = arith.constant 0 : index
    %c0_78 = arith.constant 0 : index
    %86 = vector.load %arg4[%c1_74, %c0_75, %c0_76, %c0_77, %c0_78] : memref<3x3x3x128x128xbf16, #tpu.memory_space<vmem>>, vector<1x1x1x128x128xbf16>
    %87 = vector.shape_cast %86 : vector<1x1x1x128x128xbf16> to vector<128x128xbf16>
    %cst_79 = arith.constant dense<0.000000e+00> : vector<96x128xf32>
    %88 = tpu.matmul %85, %87, %cst_79 {dimension_numbers = #tpu.dot_dimension_numbers<[1], [0], [0], [1], [0, 0, 1, 1], [], []>} : vector<96x128xbf16>, vector<128x128xbf16>, vector<96x128xf32> -> vector<96x128xf32>
    %89 = arith.addf %80, %88 : vector<96x128xf32>
    %90 = arith.index_cast %82 : i32 to index
    %c1_80 = arith.constant 1 : index
    %c0_81 = arith.constant 0 : index
    %91 = vector.load %arg7[%90, %c1_80, %c0_81] : memref<4x128x128xbf16, #tpu.memory_space<vmem>>, vector<1x96x128xbf16>
    %92 = vector.shape_cast %91 : vector<1x96x128xbf16> to vector<96x128xbf16>
    %c1_82 = arith.constant 1 : index
    %c0_83 = arith.constant 0 : index
    %c1_84 = arith.constant 1 : index
    %c0_85 = arith.constant 0 : index
    %c0_86 = arith.constant 0 : index
    %93 = vector.load %arg4[%c1_82, %c0_83, %c1_84, %c0_85, %c0_86] : memref<3x3x3x128x128xbf16, #tpu.memory_space<vmem>>, vector<1x1x1x128x128xbf16>
    %94 = vector.shape_cast %93 : vector<1x1x1x128x128xbf16> to vector<128x128xbf16>
    %cst_87 = arith.constant dense<0.000000e+00> : vector<96x128xf32>
    %95 = tpu.matmul %92, %94, %cst_87 {dimension_numbers = #tpu.dot_dimension_numbers<[1], [0], [0], [1], [0, 0, 1, 1], [], []>} : vector<96x128xbf16>, vector<128x128xbf16>, vector<96x128xf32> -> vector<96x128xf32>
    %96 = arith.addf %89, %95 : vector<96x128xf32>
    %97 = arith.index_cast %82 : i32 to index
    %c2_88 = arith.constant 2 : index
    %c0_89 = arith.constant 0 : index
    %98 = vector.load %arg7[%97, %c2_88, %c0_89] : memref<4x128x128xbf16, #tpu.memory_space<vmem>>, vector<1x96x128xbf16>
    %99 = vector.shape_cast %98 : vector<1x96x128xbf16> to vector<96x128xbf16>
    %c1_90 = arith.constant 1 : index
    %c0_91 = arith.constant 0 : index
    %c2_92 = arith.constant 2 : index
    %c0_93 = arith.constant 0 : index
    %c0_94 = arith.constant 0 : index
    %100 = vector.load %arg4[%c1_90, %c0_91, %c2_92, %c0_93, %c0_94] : memref<3x3x3x128x128xbf16, #tpu.memory_space<vmem>>, vector<1x1x1x128x128xbf16>
    %101 = vector.shape_cast %100 : vector<1x1x1x128x128xbf16> to vector<128x128xbf16>
    %cst_95 = arith.constant dense<0.000000e+00> : vector<96x128xf32>
    %102 = tpu.matmul %99, %101, %cst_95 {dimension_numbers = #tpu.dot_dimension_numbers<[1], [0], [0], [1], [0, 0, 1, 1], [], []>} : vector<96x128xbf16>, vector<128x128xbf16>, vector<96x128xf32> -> vector<96x128xf32>
    %103 = arith.addf %96, %102 : vector<96x128xf32>
    %104 = arith.index_cast %82 : i32 to index
    %c12_96 = arith.constant 12 : index
    %c0_97 = arith.constant 0 : index
    %105 = vector.load %arg7[%104, %c12_96, %c0_97] : memref<4x128x128xbf16, #tpu.memory_space<vmem>>, vector<1x96x128xbf16>
    %106 = vector.shape_cast %105 : vector<1x96x128xbf16> to vector<96x128xbf16>
    %c1_98 = arith.constant 1 : index
    %c1_99 = arith.constant 1 : index
    %c0_100 = arith.constant 0 : index
    %c0_101 = arith.constant 0 : index
    %c0_102 = arith.constant 0 : index
    %107 = vector.load %arg4[%c1_98, %c1_99, %c0_100, %c0_101, %c0_102] : memref<3x3x3x128x128xbf16, #tpu.memory_space<vmem>>, vector<1x1x1x128x128xbf16>
    %108 = vector.shape_cast %107 : vector<1x1x1x128x128xbf16> to vector<128x128xbf16>
    %cst_103 = arith.constant dense<0.000000e+00> : vector<96x128xf32>
    %109 = tpu.matmul %106, %108, %cst_103 {dimension_numbers = #tpu.dot_dimension_numbers<[1], [0], [0], [1], [0, 0, 1, 1], [], []>} : vector<96x128xbf16>, vector<128x128xbf16>, vector<96x128xf32> -> vector<96x128xf32>
    %110 = arith.addf %103, %109 : vector<96x128xf32>
    %111 = arith.index_cast %82 : i32 to index
    %c13_104 = arith.constant 13 : index
    %c0_105 = arith.constant 0 : index
    %112 = vector.load %arg7[%111, %c13_104, %c0_105] : memref<4x128x128xbf16, #tpu.memory_space<vmem>>, vector<1x96x128xbf16>
    %113 = vector.shape_cast %112 : vector<1x96x128xbf16> to vector<96x128xbf16>
    %c1_106 = arith.constant 1 : index
    %c1_107 = arith.constant 1 : index
    %c1_108 = arith.constant 1 : index
    %c0_109 = arith.constant 0 : index
    %c0_110 = arith.constant 0 : index
    %114 = vector.load %arg4[%c1_106, %c1_107, %c1_108, %c0_109, %c0_110] : memref<3x3x3x128x128xbf16, #tpu.memory_space<vmem>>, vector<1x1x1x128x128xbf16>
    %115 = vector.shape_cast %114 : vector<1x1x1x128x128xbf16> to vector<128x128xbf16>
    %cst_111 = arith.constant dense<0.000000e+00> : vector<96x128xf32>
    %116 = tpu.matmul %113, %115, %cst_111 {dimension_numbers = #tpu.dot_dimension_numbers<[1], [0], [0], [1], [0, 0, 1, 1], [], []>} : vector<96x128xbf16>, vector<128x128xbf16>, vector<96x128xf32> -> vector<96x128xf32>
    %117 = arith.addf %110, %116 : vector<96x128xf32>
    %118 = arith.index_cast %82 : i32 to index
    %c14_112 = arith.constant 14 : index
    %c0_113 = arith.constant 0 : index
    %119 = vector.load %arg7[%118, %c14_112, %c0_113] : memref<4x128x128xbf16, #tpu.memory_space<vmem>>, vector<1x96x128xbf16>
    %120 = vector.shape_cast %119 : vector<1x96x128xbf16> to vector<96x128xbf16>
    %c1_114 = arith.constant 1 : index
    %c1_115 = arith.constant 1 : index
    %c2_116 = arith.constant 2 : index
    %c0_117 = arith.constant 0 : index
    %c0_118 = arith.constant 0 : index
    %121 = vector.load %arg4[%c1_114, %c1_115, %c2_116, %c0_117, %c0_118] : memref<3x3x3x128x128xbf16, #tpu.memory_space<vmem>>, vector<1x1x1x128x128xbf16>
    %122 = vector.shape_cast %121 : vector<1x1x1x128x128xbf16> to vector<128x128xbf16>
    %cst_119 = arith.constant dense<0.000000e+00> : vector<96x128xf32>
    %123 = tpu.matmul %120, %122, %cst_119 {dimension_numbers = #tpu.dot_dimension_numbers<[1], [0], [0], [1], [0, 0, 1, 1], [], []>} : vector<96x128xbf16>, vector<128x128xbf16>, vector<96x128xf32> -> vector<96x128xf32>
    %124 = arith.addf %117, %123 : vector<96x128xf32>
    %125 = arith.index_cast %82 : i32 to index
    %c24_120 = arith.constant 24 : index
    %c0_121 = arith.constant 0 : index
    %126 = vector.load %arg7[%125, %c24_120, %c0_121] : memref<4x128x128xbf16, #tpu.memory_space<vmem>>, vector<1x96x128xbf16>
    %127 = vector.shape_cast %126 : vector<1x96x128xbf16> to vector<96x128xbf16>
    %c1_122 = arith.constant 1 : index
    %c2_123 = arith.constant 2 : index
    %c0_124 = arith.constant 0 : index
    %c0_125 = arith.constant 0 : index
    %c0_126 = arith.constant 0 : index
    %128 = vector.load %arg4[%c1_122, %c2_123, %c0_124, %c0_125, %c0_126] : memref<3x3x3x128x128xbf16, #tpu.memory_space<vmem>>, vector<1x1x1x128x128xbf16>
    %129 = vector.shape_cast %128 : vector<1x1x1x128x128xbf16> to vector<128x128xbf16>
    %cst_127 = arith.constant dense<0.000000e+00> : vector<96x128xf32>
    %130 = tpu.matmul %127, %129, %cst_127 {dimension_numbers = #tpu.dot_dimension_numbers<[1], [0], [0], [1], [0, 0, 1, 1], [], []>} : vector<96x128xbf16>, vector<128x128xbf16>, vector<96x128xf32> -> vector<96x128xf32>
    %131 = arith.addf %124, %130 : vector<96x128xf32>
    %132 = arith.index_cast %82 : i32 to index
    %c25_128 = arith.constant 25 : index
    %c0_129 = arith.constant 0 : index
    %133 = vector.load %arg7[%132, %c25_128, %c0_129] : memref<4x128x128xbf16, #tpu.memory_space<vmem>>, vector<1x96x128xbf16>
    %134 = vector.shape_cast %133 : vector<1x96x128xbf16> to vector<96x128xbf16>
    %c1_130 = arith.constant 1 : index
    %c2_131 = arith.constant 2 : index
    %c1_132 = arith.constant 1 : index
    %c0_133 = arith.constant 0 : index
    %c0_134 = arith.constant 0 : index
    %135 = vector.load %arg4[%c1_130, %c2_131, %c1_132, %c0_133, %c0_134] : memref<3x3x3x128x128xbf16, #tpu.memory_space<vmem>>, vector<1x1x1x128x128xbf16>
    %136 = vector.shape_cast %135 : vector<1x1x1x128x128xbf16> to vector<128x128xbf16>
    %cst_135 = arith.constant dense<0.000000e+00> : vector<96x128xf32>
    %137 = tpu.matmul %134, %136, %cst_135 {dimension_numbers = #tpu.dot_dimension_numbers<[1], [0], [0], [1], [0, 0, 1, 1], [], []>} : vector<96x128xbf16>, vector<128x128xbf16>, vector<96x128xf32> -> vector<96x128xf32>
    %138 = arith.addf %131, %137 : vector<96x128xf32>
    %139 = arith.index_cast %82 : i32 to index
    %c26_136 = arith.constant 26 : index
    %c0_137 = arith.constant 0 : index
    %140 = vector.load %arg7[%139, %c26_136, %c0_137] : memref<4x128x128xbf16, #tpu.memory_space<vmem>>, vector<1x96x128xbf16>
    %141 = vector.shape_cast %140 : vector<1x96x128xbf16> to vector<96x128xbf16>
    %c1_138 = arith.constant 1 : index
    %c2_139 = arith.constant 2 : index
    %c2_140 = arith.constant 2 : index
    %c0_141 = arith.constant 0 : index
    %c0_142 = arith.constant 0 : index
    %142 = vector.load %arg4[%c1_138, %c2_139, %c2_140, %c0_141, %c0_142] : memref<3x3x3x128x128xbf16, #tpu.memory_space<vmem>>, vector<1x1x1x128x128xbf16>
    %143 = vector.shape_cast %142 : vector<1x1x1x128x128xbf16> to vector<128x128xbf16>
    %cst_143 = arith.constant dense<0.000000e+00> : vector<96x128xf32>
    %144 = tpu.matmul %141, %143, %cst_143 {dimension_numbers = #tpu.dot_dimension_numbers<[1], [0], [0], [1], [0, 0, 1, 1], [], []>} : vector<96x128xbf16>, vector<128x128xbf16>, vector<96x128xf32> -> vector<96x128xf32>
    %145 = arith.addf %138, %144 : vector<96x128xf32>
    %c2_i32_144 = arith.constant 2 : i32
    %146 = arith.addi %arg2, %c2_i32_144 : i32
    %c3_i32_145 = arith.constant 3 : i32
    %147 = arith.andi %146, %c3_i32_145 : i32
    %148 = arith.index_cast %147 : i32 to index
    %c0_146 = arith.constant 0 : index
    %c0_147 = arith.constant 0 : index
    %149 = vector.load %arg7[%148, %c0_146, %c0_147] : memref<4x128x128xbf16, #tpu.memory_space<vmem>>, vector<1x96x128xbf16>
    %150 = vector.shape_cast %149 : vector<1x96x128xbf16> to vector<96x128xbf16>
    %c2_148 = arith.constant 2 : index
    %c0_149 = arith.constant 0 : index
    %c0_150 = arith.constant 0 : index
    %c0_151 = arith.constant 0 : index
    %c0_152 = arith.constant 0 : index
    %151 = vector.load %arg4[%c2_148, %c0_149, %c0_150, %c0_151, %c0_152] : memref<3x3x3x128x128xbf16, #tpu.memory_space<vmem>>, vector<1x1x1x128x128xbf16>
    %152 = vector.shape_cast %151 : vector<1x1x1x128x128xbf16> to vector<128x128xbf16>
    %cst_153 = arith.constant dense<0.000000e+00> : vector<96x128xf32>
    %153 = tpu.matmul %150, %152, %cst_153 {dimension_numbers = #tpu.dot_dimension_numbers<[1], [0], [0], [1], [0, 0, 1, 1], [], []>} : vector<96x128xbf16>, vector<128x128xbf16>, vector<96x128xf32> -> vector<96x128xf32>
    %154 = arith.addf %145, %153 : vector<96x128xf32>
    %155 = arith.index_cast %147 : i32 to index
    %c1_154 = arith.constant 1 : index
    %c0_155 = arith.constant 0 : index
    %156 = vector.load %arg7[%155, %c1_154, %c0_155] : memref<4x128x128xbf16, #tpu.memory_space<vmem>>, vector<1x96x128xbf16>
    %157 = vector.shape_cast %156 : vector<1x96x128xbf16> to vector<96x128xbf16>
    %c2_156 = arith.constant 2 : index
    %c0_157 = arith.constant 0 : index
    %c1_158 = arith.constant 1 : index
    %c0_159 = arith.constant 0 : index
    %c0_160 = arith.constant 0 : index
    %158 = vector.load %arg4[%c2_156, %c0_157, %c1_158, %c0_159, %c0_160] : memref<3x3x3x128x128xbf16, #tpu.memory_space<vmem>>, vector<1x1x1x128x128xbf16>
    %159 = vector.shape_cast %158 : vector<1x1x1x128x128xbf16> to vector<128x128xbf16>
    %cst_161 = arith.constant dense<0.000000e+00> : vector<96x128xf32>
    %160 = tpu.matmul %157, %159, %cst_161 {dimension_numbers = #tpu.dot_dimension_numbers<[1], [0], [0], [1], [0, 0, 1, 1], [], []>} : vector<96x128xbf16>, vector<128x128xbf16>, vector<96x128xf32> -> vector<96x128xf32>
    %161 = arith.addf %154, %160 : vector<96x128xf32>
    %162 = arith.index_cast %147 : i32 to index
    %c2_162 = arith.constant 2 : index
    %c0_163 = arith.constant 0 : index
    %163 = vector.load %arg7[%162, %c2_162, %c0_163] : memref<4x128x128xbf16, #tpu.memory_space<vmem>>, vector<1x96x128xbf16>
    %164 = vector.shape_cast %163 : vector<1x96x128xbf16> to vector<96x128xbf16>
    %c2_164 = arith.constant 2 : index
    %c0_165 = arith.constant 0 : index
    %c2_166 = arith.constant 2 : index
    %c0_167 = arith.constant 0 : index
    %c0_168 = arith.constant 0 : index
    %165 = vector.load %arg4[%c2_164, %c0_165, %c2_166, %c0_167, %c0_168] : memref<3x3x3x128x128xbf16, #tpu.memory_space<vmem>>, vector<1x1x1x128x128xbf16>
    %166 = vector.shape_cast %165 : vector<1x1x1x128x128xbf16> to vector<128x128xbf16>
    %cst_169 = arith.constant dense<0.000000e+00> : vector<96x128xf32>
    %167 = tpu.matmul %164, %166, %cst_169 {dimension_numbers = #tpu.dot_dimension_numbers<[1], [0], [0], [1], [0, 0, 1, 1], [], []>} : vector<96x128xbf16>, vector<128x128xbf16>, vector<96x128xf32> -> vector<96x128xf32>
    %168 = arith.addf %161, %167 : vector<96x128xf32>
    %169 = arith.index_cast %147 : i32 to index
    %c12_170 = arith.constant 12 : index
    %c0_171 = arith.constant 0 : index
    %170 = vector.load %arg7[%169, %c12_170, %c0_171] : memref<4x128x128xbf16, #tpu.memory_space<vmem>>, vector<1x96x128xbf16>
    %171 = vector.shape_cast %170 : vector<1x96x128xbf16> to vector<96x128xbf16>
    %c2_172 = arith.constant 2 : index
    %c1_173 = arith.constant 1 : index
    %c0_174 = arith.constant 0 : index
    %c0_175 = arith.constant 0 : index
    %c0_176 = arith.constant 0 : index
    %172 = vector.load %arg4[%c2_172, %c1_173, %c0_174, %c0_175, %c0_176] : memref<3x3x3x128x128xbf16, #tpu.memory_space<vmem>>, vector<1x1x1x128x128xbf16>
    %173 = vector.shape_cast %172 : vector<1x1x1x128x128xbf16> to vector<128x128xbf16>
    %cst_177 = arith.constant dense<0.000000e+00> : vector<96x128xf32>
    %174 = tpu.matmul %171, %173, %cst_177 {dimension_numbers = #tpu.dot_dimension_numbers<[1], [0], [0], [1], [0, 0, 1, 1], [], []>} : vector<96x128xbf16>, vector<128x128xbf16>, vector<96x128xf32> -> vector<96x128xf32>
    %175 = arith.addf %168, %174 : vector<96x128xf32>
    %176 = arith.index_cast %147 : i32 to index
    %c13_178 = arith.constant 13 : index
    %c0_179 = arith.constant 0 : index
    %177 = vector.load %arg7[%176, %c13_178, %c0_179] : memref<4x128x128xbf16, #tpu.memory_space<vmem>>, vector<1x96x128xbf16>
    %178 = vector.shape_cast %177 : vector<1x96x128xbf16> to vector<96x128xbf16>
    %c2_180 = arith.constant 2 : index
    %c1_181 = arith.constant 1 : index
    %c1_182 = arith.constant 1 : index
    %c0_183 = arith.constant 0 : index
    %c0_184 = arith.constant 0 : index
    %179 = vector.load %arg4[%c2_180, %c1_181, %c1_182, %c0_183, %c0_184] : memref<3x3x3x128x128xbf16, #tpu.memory_space<vmem>>, vector<1x1x1x128x128xbf16>
    %180 = vector.shape_cast %179 : vector<1x1x1x128x128xbf16> to vector<128x128xbf16>
    %cst_185 = arith.constant dense<0.000000e+00> : vector<96x128xf32>
    %181 = tpu.matmul %178, %180, %cst_185 {dimension_numbers = #tpu.dot_dimension_numbers<[1], [0], [0], [1], [0, 0, 1, 1], [], []>} : vector<96x128xbf16>, vector<128x128xbf16>, vector<96x128xf32> -> vector<96x128xf32>
    %182 = arith.addf %175, %181 : vector<96x128xf32>
    %183 = arith.index_cast %147 : i32 to index
    %c14_186 = arith.constant 14 : index
    %c0_187 = arith.constant 0 : index
    %184 = vector.load %arg7[%183, %c14_186, %c0_187] : memref<4x128x128xbf16, #tpu.memory_space<vmem>>, vector<1x96x128xbf16>
    %185 = vector.shape_cast %184 : vector<1x96x128xbf16> to vector<96x128xbf16>
    %c2_188 = arith.constant 2 : index
    %c1_189 = arith.constant 1 : index
    %c2_190 = arith.constant 2 : index
    %c0_191 = arith.constant 0 : index
    %c0_192 = arith.constant 0 : index
    %186 = vector.load %arg4[%c2_188, %c1_189, %c2_190, %c0_191, %c0_192] : memref<3x3x3x128x128xbf16, #tpu.memory_space<vmem>>, vector<1x1x1x128x128xbf16>
    %187 = vector.shape_cast %186 : vector<1x1x1x128x128xbf16> to vector<128x128xbf16>
    %cst_193 = arith.constant dense<0.000000e+00> : vector<96x128xf32>
    %188 = tpu.matmul %185, %187, %cst_193 {dimension_numbers = #tpu.dot_dimension_numbers<[1], [0], [0], [1], [0, 0, 1, 1], [], []>} : vector<96x128xbf16>, vector<128x128xbf16>, vector<96x128xf32> -> vector<96x128xf32>
    %189 = arith.addf %182, %188 : vector<96x128xf32>
    %190 = arith.index_cast %147 : i32 to index
    %c24_194 = arith.constant 24 : index
    %c0_195 = arith.constant 0 : index
    %191 = vector.load %arg7[%190, %c24_194, %c0_195] : memref<4x128x128xbf16, #tpu.memory_space<vmem>>, vector<1x96x128xbf16>
    %192 = vector.shape_cast %191 : vector<1x96x128xbf16> to vector<96x128xbf16>
    %c2_196 = arith.constant 2 : index
    %c2_197 = arith.constant 2 : index
    %c0_198 = arith.constant 0 : index
    %c0_199 = arith.constant 0 : index
    %c0_200 = arith.constant 0 : index
    %193 = vector.load %arg4[%c2_196, %c2_197, %c0_198, %c0_199, %c0_200] : memref<3x3x3x128x128xbf16, #tpu.memory_space<vmem>>, vector<1x1x1x128x128xbf16>
    %194 = vector.shape_cast %193 : vector<1x1x1x128x128xbf16> to vector<128x128xbf16>
    %cst_201 = arith.constant dense<0.000000e+00> : vector<96x128xf32>
    %195 = tpu.matmul %192, %194, %cst_201 {dimension_numbers = #tpu.dot_dimension_numbers<[1], [0], [0], [1], [0, 0, 1, 1], [], []>} : vector<96x128xbf16>, vector<128x128xbf16>, vector<96x128xf32> -> vector<96x128xf32>
    %196 = arith.addf %189, %195 : vector<96x128xf32>
    %197 = arith.index_cast %147 : i32 to index
    %c25_202 = arith.constant 25 : index
    %c0_203 = arith.constant 0 : index
    %198 = vector.load %arg7[%197, %c25_202, %c0_203] : memref<4x128x128xbf16, #tpu.memory_space<vmem>>, vector<1x96x128xbf16>
    %199 = vector.shape_cast %198 : vector<1x96x128xbf16> to vector<96x128xbf16>
    %c2_204 = arith.constant 2 : index
    %c2_205 = arith.constant 2 : index
    %c1_206 = arith.constant 1 : index
    %c0_207 = arith.constant 0 : index
    %c0_208 = arith.constant 0 : index
    %200 = vector.load %arg4[%c2_204, %c2_205, %c1_206, %c0_207, %c0_208] : memref<3x3x3x128x128xbf16, #tpu.memory_space<vmem>>, vector<1x1x1x128x128xbf16>
    %201 = vector.shape_cast %200 : vector<1x1x1x128x128xbf16> to vector<128x128xbf16>
    %cst_209 = arith.constant dense<0.000000e+00> : vector<96x128xf32>
    %202 = tpu.matmul %199, %201, %cst_209 {dimension_numbers = #tpu.dot_dimension_numbers<[1], [0], [0], [1], [0, 0, 1, 1], [], []>} : vector<96x128xbf16>, vector<128x128xbf16>, vector<96x128xf32> -> vector<96x128xf32>
    %203 = arith.addf %196, %202 : vector<96x128xf32>
    %204 = arith.index_cast %147 : i32 to index
    %c26_210 = arith.constant 26 : index
    %c0_211 = arith.constant 0 : index
    %205 = vector.load %arg7[%204, %c26_210, %c0_211] : memref<4x128x128xbf16, #tpu.memory_space<vmem>>, vector<1x96x128xbf16>
    %206 = vector.shape_cast %205 : vector<1x96x128xbf16> to vector<96x128xbf16>
    %c2_212 = arith.constant 2 : index
    %c2_213 = arith.constant 2 : index
    %c2_214 = arith.constant 2 : index
    %c0_215 = arith.constant 0 : index
    %c0_216 = arith.constant 0 : index
    %207 = vector.load %arg4[%c2_212, %c2_213, %c2_214, %c0_215, %c0_216] : memref<3x3x3x128x128xbf16, #tpu.memory_space<vmem>>, vector<1x1x1x128x128xbf16>
    %208 = vector.shape_cast %207 : vector<1x1x1x128x128xbf16> to vector<128x128xbf16>
    %cst_217 = arith.constant dense<0.000000e+00> : vector<96x128xf32>
    %209 = tpu.matmul %206, %208, %cst_217 {dimension_numbers = #tpu.dot_dimension_numbers<[1], [0], [0], [1], [0, 0, 1, 1], [], []>} : vector<96x128xbf16>, vector<128x128xbf16>, vector<96x128xf32> -> vector<96x128xf32>
    %210 = arith.addf %203, %209 : vector<96x128xf32>
    %c0_218 = arith.constant 0 : index
    %c0_219 = arith.constant 0 : index
    %c0_220 = arith.constant 0 : index
    %c0_221 = arith.constant 0 : index
    %211 = vector.load %arg6[%c0_218, %c0_219, %c0_220, %c0_221] : memref<1x1x96x128xf32, #tpu.memory_space<vmem>>, vector<1x1x96x128xf32>
    %212 = vector.shape_cast %211 : vector<1x1x96x128xf32> to vector<96x128xf32>
    %213 = vector.shape_cast %210 : vector<96x128xf32> to vector<1x1x96x128xf32>
    tpu.vector_store %arg6[%c0_218, %c0_219, %c0_220, %c0_221], %213 {strides = array<i32>} : memref<1x1x96x128xf32, #tpu.memory_space<vmem>>, vector<1x1x96x128xf32>,
    return
  }
  func.func @transform_1(%arg0: i32, %arg1: i32, %arg2: i32) -> (i32, i32, i32, i32, i32) {
    %c0_i32 = arith.constant 0 : i32
    %c0_i32_0 = arith.constant 0 : i32
    %c0_i32_1 = arith.constant 0 : i32
    %c0_i32_2 = arith.constant 0 : i32
    %c0_i32_3 = arith.constant 0 : i32
    return %c0_i32, %c0_i32_0, %c0_i32_1, %c0_i32_2, %arg0 : i32, i32, i32, i32, i32
  }
  func.func @transform_2(%arg0: i32, %arg1: i32, %arg2: i32) -> (i32, i32) {
    %c0_i32 = arith.constant 0 : i32
    %c0_i32_0 = arith.constant 0 : i32
    return %c0_i32, %arg0 : i32, i32
  }
  func.func @transform_3(%arg0: i32, %arg1: i32, %arg2: i32) -> (i32, i32, i32, i32) {
    %c0_i32 = arith.constant 0 : i32
    %c0_i32_0 = arith.constant 0 : i32
    return %arg1, %arg2, %c0_i32, %arg0 : i32, i32, i32, i32
  }
}

</mosaic_0001>

<llo_original>
// kernel: tpu_custom_call.1
$region0: #{tpu_custom_call.1}
  #allocation0 [shape = 'u32[]', space=smem, size = 0x4, offset = 0x4, fixed_abs, tag = 'smem constant byte address 0x4 - core index']
  #allocation1 [shape = 'u32[72,128]{1,0:T(1,128)}', space=vmem, size = 0x9000, scoped, tag = 'internal scratch']
  #allocation2 [shape = 'bf16[4,128,128]{2,1,0:T(8,128)(2,1)}', space=vmem, size = 0x20000, scoped, tag = 'scratch operand']
  #allocation3 [shape = 's32[4]{0}', space=sflag, size = 0x10, scoped, tag = 'scratch operand']
  #allocation8 [shape = 's32[]', space=sflag, size = 0x4, offset = 0, fixed_abs, tag = 'sflag constant byte address 0x0 - dummy sync flag']
  #allocation9 [shape = 's32[]', space=sflag, size = 0x4, offset = 0, fixed_abs, tag = 'sflag constant byte address 0x0 - dummy sync flag']
  #allocation10 [shape = 'u32[]', space=smem, size = 0x4, offset = 0x44, fixed_abs, tag = 'smem constant byte address 0x44 - assertion arg 0']
  #allocation11 [shape = 'u32[]', space=smem, size = 0x4, offset = 0x48, fixed_abs, tag = 'smem constant byte address 0x48 - assertion arg 1']
  #allocation12 [shape = 's32[]', space=sflag, size = 0x4, offset = 0, fixed_abs, tag = 'sflag constant byte address 0x0 - dummy sync flag']
  #allocation13 [shape = 's32[]', space=sflag, size = 0x4, offset = 0, fixed_abs, tag = 'sflag constant byte address 0x0 - dummy sync flag']
  #allocation14 [shape = 's32[]', space=sflag, size = 0x4, offset = 0, fixed_abs, tag = 'sflag constant byte address 0x0 - dummy sync flag']
  #allocation15 [shape = 's32[]', space=sflag, size = 0x4, offset = 0, fixed_abs, tag = 'sflag constant byte address 0x0 - dummy sync flag']
  #allocation16 [shape = 's32[]', space=sflag, size = 0x4, offset = 0, fixed_abs, tag = 'sflag constant byte address 0x0 - dummy sync flag']
  #allocation17 [shape = 's32[]', space=sflag, size = 0x4, offset = 0, fixed_abs, tag = 'sflag constant byte address 0x0 - dummy sync flag']
  %s0 = inlined_call_operand.hbm [shape: bf16[12,128,128], index: 0, kind: input, shape index: {}]
  %s1 = inlined_call_operand.hbm [shape: bf16[3,3,3,128,128], index: 1, kind: input, shape index: {}]
  %s2 = inlined_call_operand.vmem [shape: f32[1,128], index: 2, kind: input, shape index: {}]
  %s3 = inlined_call_operand.hbm [shape: f32[2,4,96,128], index: 3, kind: output, shape index: {}]
  %s4 = sld [smem:[#allocation0]]
  $region77: #{tpu_custom_call.1} parent=0
    _
  %s6 = ssub.s32 1, %s4
  %s7 = scalar_select 0, %s6, %s4
  $region1: #{tpu_custom_call.1} parent=0
    #allocation4 [shape = 'u8[884736]{0}', space=vmem, size = 0xd8000, scoped, tag = 'input window, operand 1, single buffered']
    #allocation5 [shape = 's32[2]{0}', space=sflag, size = 0x8, scoped, tag = 'scoped memory for tpu_custom_call.1']
    #allocation6 [shape = 's32[2]{0}', space=sflag, size = 0x8, scoped, tag = 'scoped memory for tpu_custom_call.1']
    #allocation7 [shape = 'u8[98304]{0}', space=vmem, size = 0x18000, scoped, tag = 'output window, operand 0']
    %8 = vsyncpa [#allocation5], 0
    %9 = vsyncpa [#allocation6], 0
    %s10 = scalar_lea.sflag [#allocation6], 1
    %11 = vsyncpa %s10, 0
    loop: start=0, step=1, limit=10
    $region2: #{tpu_custom_call.1} parent=1 // loop_pre_header
      _
    $region3: #{tpu_custom_call.1} parent=1 // loop_header
      %s13 = sphi 0, %s17
      %p14 = scmp.ge.s32.totalorder %s13, 10
      %s20 = sphi 0, %s39
      %s21 = sphi 0, %s35
      %s22 = sphi 0, %s31
      %s23 = sphi 0, %s20
      %s24 = sphi 0, %s21
      %s25 = sphi 0, %s22
      %s26 = sphi 0, %s23
      %s27 = sphi 0, %s24
      %s28 = sphi 0, %s25
      %s42 = sphi 0, %s44
      %s45 = sphi 0, %s42
      %s46 = sphi 0, %s45
      %s62 = sphi 0, %s46
      %s68 = sphi 0, %s70
      %s71 = sphi 0, %s68
      %s72 = sphi 0, %s71
      %s88 = sphi 0, %s72
      %s98 = sphi 0, %s100
      %s101 = sphi 0, %s98
      %s102 = sphi 0, %s101
      %s118 = sphi 0, %s102
    $region4: #{tpu_custom_call.1} parent=1 // loop_header_branch
      %16 = sbr.rel (%p14) target = $region8
    $region5: #{tpu_custom_call.1} parent=1 // loop_body
      %s18 = ssub.s32 %s13, 1
      %s19 = ssub.s32 %s13, 2
      %s29 = sadd.s32 1, %s22
      %p30 = scmp.ge.s32.totalorder %s29, 4
      %s31 = scalar_select %p30, 0, %s29
      %s32 = sadd.s32 1, %s21
      %s33 = scalar_select %p30, %s32, %s21
      %p34 = scmp.ge.s32.totalorder %s33, 2
      %s35 = scalar_select %p34, 0, %s33
      %s36 = sadd.s32 1, %s20
      %s37 = scalar_select %p34, %s36, %s20
      %p38 = scmp.ge.s32.totalorder %s37, 1
      %s39 = scalar_select %p38, 0, %s37
      %s40 = ssub.s32 %s20, %s39
      %p41 = scmp.eq.s32.totalorder %s40, 0
      %s43 = sadd.s32 %s42, 1
      %s44 = scalar_select %p41, %s42, %s43
      %p47 = pneg %p41
      %p48 = scmp.eq.s32.totalorder %s13, 7
      %p49 = por %p47, %p48
      %p50 = scmp.ne.s32.totalorder %s42, %s45
      %p51 = scmp.eq.s32.totalorder %s13, 0
      %p52 = por %p50, %p51
      %p53 = scmp.ne.s32.totalorder %s42, %s45
      %p54 = scmp.eq.s32.totalorder %s18, 7
      %p55 = por %p53, %p54
      %p56 = scmp.ne.s32.totalorder %s45, %s46
      %p57 = scmp.eq.s32.totalorder %s18, 0
      %p58 = por %p56, %p57
      %p59 = scmp.ne.s32.totalorder %s45, %s46
      %p60 = scmp.eq.s32.totalorder %s19, 7
      %p61 = por %p59, %p60
      %p63 = scmp.ne.s32.totalorder %s46, %s62
      %p64 = scmp.eq.s32.totalorder %s19, 0
      %p65 = por %p63, %p64
      %s66 = ssub.s32 %s20, %s39
      %p67 = scmp.eq.s32.totalorder %s66, 0
      %s69 = sadd.s32 %s68, 1
      %s70 = scalar_select %p67, %s68, %s69
      %p73 = pneg %p67
      %p74 = scmp.eq.s32.totalorder %s13, 7
      %p75 = por %p73, %p74
      %p76 = scmp.ne.s32.totalorder %s68, %s71
      %p77 = scmp.eq.s32.totalorder %s13, 0
      %p78 = por %p76, %p77
      %p79 = scmp.ne.s32.totalorder %s68, %s71
      %p80 = scmp.eq.s32.totalorder %s18, 7
      %p81 = por %p79, %p80
      %p82 = scmp.ne.s32.totalorder %s71, %s72
      %p83 = scmp.eq.s32.totalorder %s18, 0
      %p84 = por %p82, %p83
      %p85 = scmp.ne.s32.totalorder %s71, %s72
      %p86 = scmp.eq.s32.totalorder %s19, 7
      %p87 = por %p85, %p86
      %p89 = scmp.ne.s32.totalorder %s72, %s88
      %p90 = scmp.eq.s32.totalorder %s19, 0
      %p91 = por %p89, %p90
      %s92 = ssub.s32 %s21, %s35
      %s93 = ssub.s32 %s22, %s31
      %s94 = sor.u32 %s92, %s93
      %s95 = ssub.s32 %s20, %s39
      %s96 = sor.u32 %s94, %s95
      %p97 = scmp.eq.s32.totalorder %s96, 0
      %s99 = sadd.s32 %s98, 1
      %s100 = scalar_select %p97, %s98, %s99
      %p103 = pneg %p97
      %p104 = scmp.eq.s32.totalorder %s13, 7
      %p105 = por %p103, %p104
      %p106 = scmp.ne.s32.totalorder %s98, %s101
      %p107 = scmp.eq.s32.totalorder %s13, 0
      %p108 = por %p106, %p107
      %p109 = scmp.ne.s32.totalorder %s98, %s101
      %p110 = scmp.eq.s32.totalorder %s18, 7
      %p111 = por %p109, %p110
      %p112 = scmp.ne.s32.totalorder %s101, %s102
      %p113 = scmp.eq.s32.totalorder %s18, 0
      %p114 = por %p112, %p113
      %p115 = scmp.ne.s32.totalorder %s101, %s102
      %p116 = scmp.eq.s32.totalorder %s19, 7
      %p117 = por %p115, %p116
      %p119 = scmp.ne.s32.totalorder %s102, %s118
      %p120 = scmp.eq.s32.totalorder %s19, 0
      %p121 = por %p119, %p120
      %p122 = scmp.le.s32.totalorder 1, %s13
      %p123 = scmp.lt.s32.totalorder %s13, 9
      %p124 = pnand %p122, %p123
      %p125 = pneg %p124
      // Predicated region
      $region9: #{tpu_custom_call.1} parent=5 // pred_check
        _
      $region10: #{tpu_custom_call.1} parent=5 // pred_check_branch
        %127 = sbr.rel (%p124) target = $region12
      $region11: #{tpu_custom_call.1} parent=5 // pred_region
        %s128 = ssub.s32 %s13, 1
        // Predicated region
        $region13: #{tpu_custom_call.1} parent=11 // pred_check
          %p129 = pneg %p58
        $region14: #{tpu_custom_call.1} parent=11 // pred_check_branch
          %131 = sbr.rel (%p129) target = $region16
        $region15: #{tpu_custom_call.1} parent=11 // pred_region
          %133 = vsyncadd [#allocation5], 0
          %s134 = smul.addr %s23, 4
          %s135 = scalar_lea.hbm %s1, %s134
          %s136 = sshll.u32 %s135, 4
          %s137 = int_to_ptr.hbm [resolvable:$true] %s136
          %s138 = sshll.u32 [#allocation4], 4
          %s139 = int_to_ptr.vmem [resolvable:$true] %s138
          %144 = dma.hbm_to_vmem [thread:$0]  %s137, 27648, %s139, [#allocation5], 64, 64, 4
        $region16: #{tpu_custom_call.1} parent=11 // pred_fallthru
          _
        // Predicated region
        $region17: #{tpu_custom_call.1} parent=11 // pred_check
          %p145 = pneg %p84
        $region18: #{tpu_custom_call.1} parent=11 // pred_check_branch
          %147 = sbr.rel (%p145) target = $region20
        $region19: #{tpu_custom_call.1} parent=11 // pred_region
          %p148 = scmp.lt.s32.totalorder %s23, 0
          %s149 = scalar_select %p148, %s23, 0
          %s150 = scalar_lea.vmem %s2, %s149
        $region20: #{tpu_custom_call.1} parent=11 // pred_fallthru
          _
      $region12: #{tpu_custom_call.1} parent=5 // pred_fallthru
        _
      %p151 = scmp.lt.s32.totalorder %s13, 8
      // Predicated region
      $region21: #{tpu_custom_call.1} parent=5 // pred_check
        %p152 = pneg %p151
      $region22: #{tpu_custom_call.1} parent=5 // pred_check_branch
        %154 = sbr.rel (%p152) target = $region24
      $region23: #{tpu_custom_call.1} parent=5 // pred_region
        _
      $region24: #{tpu_custom_call.1} parent=5 // pred_fallthru
        _
      %p155 = scmp.le.s32.totalorder 1, %s13
      %p156 = scmp.lt.s32.totalorder %s13, 9
      %p157 = pnand %p155, %p156
      %p158 = pneg %p157
      // Predicated region
      $region25: #{tpu_custom_call.1} parent=5 // pred_check
        _
      $region26: #{tpu_custom_call.1} parent=5 // pred_check_branch
        %160 = sbr.rel (%p157) target = $region28
      $region27: #{tpu_custom_call.1} parent=5 // pred_region
        %s161 = ssub.s32 %s13, 1
        // Predicated region
        $region29: #{tpu_custom_call.1} parent=27 // pred_check
          %p162 = pneg %p58
        $region30: #{tpu_custom_call.1} parent=27 // pred_check_branch
          %164 = sbr.rel (%p162) target = $region32
        $region31: #{tpu_custom_call.1} parent=27 // pred_region
          %166 = dma.done [#allocation5], 27648
        $region32: #{tpu_custom_call.1} parent=27 // pred_fallthru
          _
        %p167 = pneg %p58
        %p168 = pneg %p55
        %p169 = scmp.lt.s32.totalorder %s23, 0
        %s170 = scalar_select %p169, %s23, 0
        %s171 = scalar_lea.vmem %s2, %s170
        %p172 = pneg %p84
        %p173 = pneg %p81
        %p174 = pneg %p114
        %p175 = pneg %p111
        %s176 = sand.u32 %s101, 1
        %s177 = scalar_lea.sflag [#allocation6], %s176
        %s178 = sand.u32 %s101, 1
        %s179 = smul.addr %s178, 96
        %s180 = scalar_lea.vmem [#allocation7], %s179
        %p181 = scmp.lt.s32.totalorder %s23, 0
        %s182 = scalar_select %p181, %s23, 0
        %s183 = scalar_lea.vmem %s2, %s182
        %s184 = smul.u32 %s24, 6
        %p185 = scmp.eq.s32.totalorder %s25, 0
        // Predicated region
        $region33: #{tpu_custom_call.1} parent=27 // pred_check
          %p186 = pneg %p185
        $region34: #{tpu_custom_call.1} parent=27 // pred_check_branch
          %188 = sbr.rel (%p186) target = $region36
        $region35: #{tpu_custom_call.1} parent=27 // pred_region
          %s189 = smul.u32 %s184, 16
          %s190 = smul.addr %s189, 4
          %s191 = scalar_lea.hbm %s0, %s190
          // Predicated region
          $region37: #{tpu_custom_call.1} parent=35 // pred_check
            _
          $region38: #{tpu_custom_call.1} parent=35 // pred_check_branch
            %193 = sbr.rel target = $region40
          $region39: #{tpu_custom_call.1} parent=35 // pred_region
            %194 = sst [smem:[#allocation10]] [#allocation9]
            %195 = sst [smem:[#allocation11]] [#allocation8]
          $region40: #{tpu_custom_call.1} parent=35 // pred_fallthru
            _
          %197 = shalt.err (0)
          %s199 = sshll.u32 %s191, 4
          %s200 = int_to_ptr.hbm [resolvable:$true] %s199
          %s201 = sshll.u32 [#allocation2], 4
          %s202 = int_to_ptr.vmem [resolvable:$true] %s201
          %204 = dma.hbm_to_vmem [thread:$0]  %s200, 1024, %s202, [#allocation3]
          %s205 = sadd.s32 %s184, 1
          %s206 = smul.u32 %s205, 16
          %s207 = smul.addr %s206, 4
          %s208 = scalar_lea.hbm %s0, %s207
          %s209 = scalar_lea.vmem [#allocation2], 64
          %s210 = scalar_lea.sflag [#allocation3], 1
          // Predicated region
          $region41: #{tpu_custom_call.1} parent=35 // pred_check
            _
          $region42: #{tpu_custom_call.1} parent=35 // pred_check_branch
            %212 = sbr.rel target = $region44
          $region43: #{tpu_custom_call.1} parent=35 // pred_region
            %213 = sst [smem:[#allocation10]] [#allocation13]
            %214 = sst [smem:[#allocation11]] [#allocation12]
          $region44: #{tpu_custom_call.1} parent=35 // pred_fallthru
            _
          %216 = shalt.err (0)
          %s218 = sshll.u32 %s208, 4
          %s219 = int_to_ptr.hbm [resolvable:$true] %s218
          %s220 = sshll.u32 %s209, 4
          %s221 = int_to_ptr.vmem [resolvable:$true] %s220
          %223 = dma.hbm_to_vmem [thread:$0]  %s219, 1024, %s221, %s210
          %s224 = sadd.s32 %s184, 2
          %s225 = smul.u32 %s224, 16
          %s226 = smul.addr %s225, 4
          %s227 = scalar_lea.hbm %s0, %s226
          %s228 = scalar_lea.vmem [#allocation2], 128
          %s229 = scalar_lea.sflag [#allocation3], 2
          // Predicated region
          $region45: #{tpu_custom_call.1} parent=35 // pred_check
            _
          $region46: #{tpu_custom_call.1} parent=35 // pred_check_branch
            %231 = sbr.rel target = $region48
          $region47: #{tpu_custom_call.1} parent=35 // pred_region
            %232 = sst [smem:[#allocation10]] [#allocation15]
            %233 = sst [smem:[#allocation11]] [#allocation14]
          $region48: #{tpu_custom_call.1} parent=35 // pred_fallthru
            _
          %235 = shalt.err (0)
          %s237 = sshll.u32 %s227, 4
          %s238 = int_to_ptr.hbm [resolvable:$true] %s237
          %s239 = sshll.u32 %s228, 4
          %s240 = int_to_ptr.vmem [resolvable:$true] %s239
          %242 = dma.hbm_to_vmem [thread:$0]  %s238, 1024, %s240, %s229
        $region36: #{tpu_custom_call.1} parent=27 // pred_fallthru
          _
        %p243 = scmp.le.s32.totalorder %s25, 2
        // Predicated region
        $region49: #{tpu_custom_call.1} parent=27 // pred_check
          %p244 = pneg %p243
        $region50: #{tpu_custom_call.1} parent=27 // pred_check_branch
          %246 = sbr.rel (%p244) target = $region52
        $region51: #{tpu_custom_call.1} parent=27 // pred_region
          %s247 = sadd.s32 %s25, 3
          %s248 = sand.u32 %s247, 3
          %s249 = sadd.s32 %s184, %s247
          %s250 = smul.u32 %s249, 16
          %s251 = smul.addr %s250, 4
          %s252 = scalar_lea.hbm %s0, %s251
          %s253 = smul.u32 %s248, 16
          %s254 = smul.addr %s253, 4
          %s255 = scalar_lea.vmem [#allocation2], %s254
          %s256 = scalar_lea.sflag [#allocation3], %s248
          // Predicated region
          $region53: #{tpu_custom_call.1} parent=51 // pred_check
            _
          $region54: #{tpu_custom_call.1} parent=51 // pred_check_branch
            %258 = sbr.rel target = $region56
          $region55: #{tpu_custom_call.1} parent=51 // pred_region
            %259 = sst [smem:[#allocation10]] [#allocation17]
            %260 = sst [smem:[#allocation11]] [#allocation16]
          $region56: #{tpu_custom_call.1} parent=51 // pred_fallthru
            _
          %262 = shalt.err (0)
          %s264 = sshll.u32 %s252, 4
          %s265 = int_to_ptr.hbm [resolvable:$true] %s264
          %s266 = sshll.u32 %s255, 4
          %s267 = int_to_ptr.vmem [resolvable:$true] %s266
          %269 = dma.hbm_to_vmem [thread:$0]  %s265, 1024, %s267, %s256
        $region52: #{tpu_custom_call.1} parent=27 // pred_fallthru
          _
        // Predicated region
        $region57: #{tpu_custom_call.1} parent=27 // pred_check
          %p270 = pneg %p185
        $region58: #{tpu_custom_call.1} parent=27 // pred_check_branch
          %272 = sbr.rel (%p270) target = $region60
        $region59: #{tpu_custom_call.1} parent=27 // pred_region
          %s273 = smul.u32 4, 16
          %s274 = smul.u32 %s273, 1
          %s275 = sshll.u32 %s274, 4
          %276 = dma.done [#allocation3], %s275
          %s277 = scalar_lea.sflag [#allocation3], 1
          %s278 = sshll.u32 %s274, 4
          %279 = dma.done %s277, %s278
          %s280 = scalar_lea.sflag [#allocation3], 2
          %s281 = sshll.u32 %s274, 4
          %282 = dma.done %s280, %s281
        $region60: #{tpu_custom_call.1} parent=27 // pred_fallthru
          _
        %p283 = scmp.gt.s32.totalorder %s25, 0
        // Predicated region
        $region61: #{tpu_custom_call.1} parent=27 // pred_check
          %p284 = pneg %p283
        $region62: #{tpu_custom_call.1} parent=27 // pred_check_branch
          %286 = sbr.rel (%p284) target = $region64
        $region63: #{tpu_custom_call.1} parent=27 // pred_region
          %s287 = sadd.s32 %s25, 2
          %s288 = sand.u32 %s287, 3
          %s289 = scalar_lea.sflag [#allocation3], %s288
          %s290 = smul.u32 4, 16
          %s291 = smul.u32 %s290, 1
          %s292 = sshll.u32 %s291, 4
          %293 = dma.done %s289, %s292
        $region64: #{tpu_custom_call.1} parent=27 // pred_fallthru
          _
        %v294 = vld [vmem:[%s183] sm:$0x1]
        %v296 = vperm.slane %v294, 0
        %s298 = sand.u32 %s25, 3
        %s299 = smul.u32 %s298, 16
        %s300 = smul.addr %s299, 4
        %s301 = scalar_lea.vmem [#allocation2], %s300
        %v302 = vld [vmem:[%s301] sm:$0xf]
        %v303 = vld [vmem:[%s301 + $0x4] sm:$0xf]
        %v304 = vld [vmem:[%s301 + $0x8] sm:$0xf]
        %v305 = vld [vmem:[%s301 + $0xc] sm:$0xf]
        %v306 = vld [vmem:[%s301 + $0x10] sm:$0xf]
        %v307 = vld [vmem:[%s301 + $0x14] sm:$0xf]
        %v308 = vld [vmem:[%s301 + $0x18] sm:$0xf]
        %v309 = vld [vmem:[%s301 + $0x1c] sm:$0xf]
        %v310 = vld [vmem:[%s301 + $0x20] sm:$0xf]
        %v311 = vld [vmem:[%s301 + $0x24] sm:$0xf]
        %v312 = vld [vmem:[%s301 + $0x28] sm:$0xf]
        %v313 = vld [vmem:[%s301 + $0x2c] sm:$0xf]
        %v314 = vld [vmem:[#allocation4] sm:$0xf]
        %v315 = vld [vmem:[#allocation4 + $0x4] sm:$0xf]
        %v316 = vld [vmem:[#allocation4 + $0x8] sm:$0xf]
        %v317 = vld [vmem:[#allocation4 + $0xc] sm:$0xf]
        %v318 = vld [vmem:[#allocation4 + $0x10] sm:$0xf]
        %v319 = vld [vmem:[#allocation4 + $0x14] sm:$0xf]
        %v320 = vld [vmem:[#allocation4 + $0x18] sm:$0xf]
        %v321 = vld [vmem:[#allocation4 + $0x1c] sm:$0xf]
        %v322 = vld [vmem:[#allocation4 + $0x20] sm:$0xf]
        %v323 = vld [vmem:[#allocation4 + $0x24] sm:$0xf]
        %v324 = vld [vmem:[#allocation4 + $0x28] sm:$0xf]
        %v325 = vld [vmem:[#allocation4 + $0x2c] sm:$0xf]
        %v326 = vld [vmem:[#allocation4 + $0x30] sm:$0xf]
        %v327 = vld [vmem:[#allocation4 + $0x34] sm:$0xf]
        %v328 = vld [vmem:[#allocation4 + $0x38] sm:$0xf]
        %v329 = vld [vmem:[#allocation4 + $0x3c] sm:$0xf]
        %v342 = vunpack.c.l.b16 %v302
        %v343 = vunpack.c.l.b16 %v303
        %v344 = vunpack.c.l.b16 %v304
        %v345 = vunpack.c.l.b16 %v305
        %v346 = vunpack.c.l.b16 %v306
        %v347 = vunpack.c.l.b16 %v307
        %v348 = vunpack.c.l.b16 %v308
        %v349 = vunpack.c.l.b16 %v309
        %v350 = vunpack.c.l.b16 %v310
        %v351 = vunpack.c.l.b16 %v311
        %v352 = vunpack.c.l.b16 %v312
        %v353 = vunpack.c.l.b16 %v313
        %v354 = vpack.c.b16 %v343, %v342
        %v355 = vpack.c.b16 %v345, %v344
        %v356 = vpack.c.b16 %v347, %v346
        %v357 = vpack.c.b16 %v349, %v348
        %v358 = vpack.c.b16 %v351, %v350
        %v359 = vpack.c.b16 %v353, %v352
        %v382 = vunpack.c.l.b16 %v314
        %v383 = vunpack.c.l.b16 %v315
        %v384 = vunpack.c.l.b16 %v316
        %v385 = vunpack.c.l.b16 %v317
        %v386 = vunpack.c.l.b16 %v318
        %v387 = vunpack.c.l.b16 %v319
        %v388 = vunpack.c.l.b16 %v320
        %v389 = vunpack.c.l.b16 %v321
        %v390 = vunpack.c.l.b16 %v322
        %v391 = vunpack.c.l.b16 %v323
        %v392 = vunpack.c.l.b16 %v324
        %v393 = vunpack.c.l.b16 %v325
        %v394 = vunpack.c.l.b16 %v326
        %v395 = vunpack.c.l.b16 %v327
        %v396 = vunpack.c.l.b16 %v328
        %v397 = vunpack.c.l.b16 %v329
        %v398 = vpack.c.b16 %v383, %v382
        %v399 = vpack.c.b16 %v385, %v384
        %v400 = vpack.c.b16 %v387, %v386
        %v401 = vpack.c.b16 %v389, %v388
        %v402 = vpack.c.b16 %v391, %v390
        %v403 = vpack.c.b16 %v393, %v392
        %v404 = vpack.c.b16 %v395, %v394
        %v405 = vpack.c.b16 %v397, %v396
        %414 = vmatpush.bf16.msra.mxu0 %v405
        %415 = vmatpush.bf16.msra.mxu0 %v404
        %416 = vmatpush.bf16.msra.mxu0 %v403
        %417 = vmatpush.bf16.msra.mxu0 %v402
        %418 = vmatpush.bf16.msra.mxu0 %v401
        %419 = vmatpush.bf16.msra.mxu0 %v400
        %420 = vmatpush.bf16.msra.mxu0 %v399
        %421 = vmatpush.bf16.msra.mxu0 %v398
        %422 = vmatmul.bf16.gmra.mxu0 %v354
        %v423 = vpop.f32.mrf.mxu0
        %v424 = vadd.f32 0.0, %v423
        %v425 = vpop.f32.mrf.mxu0
        %v426 = vadd.f32 0.0, %v425
        %427 = vmatmul.bf16.gmra.mxu0 %v355
        %v428 = vpop.f32.mrf.mxu0
        %v429 = vadd.f32 0.0, %v428
        %v430 = vpop.f32.mrf.mxu0
        %v431 = vadd.f32 0.0, %v430
        %432 = vmatmul.bf16.gmra.mxu0 %v356
        %v433 = vpop.f32.mrf.mxu0
        %v434 = vadd.f32 0.0, %v433
        %v435 = vpop.f32.mrf.mxu0
        %v436 = vadd.f32 0.0, %v435
        %437 = vmatmul.bf16.gmra.mxu0 %v357
        %v438 = vpop.f32.mrf.mxu0
        %v439 = vadd.f32 0.0, %v438
        %v440 = vpop.f32.mrf.mxu0
        %v441 = vadd.f32 0.0, %v440
        %442 = vmatmul.bf16.gmra.mxu0 %v358
        %v443 = vpop.f32.mrf.mxu0
        %v444 = vadd.f32 0.0, %v443
        %v445 = vpop.f32.mrf.mxu0
        %v446 = vadd.f32 0.0, %v445
        %447 = vmatmul.bf16.gmra.mxu0 %v359
        %v448 = vpop.f32.mrf.mxu0
        %v449 = vadd.f32 0.0, %v448
        %v450 = vpop.f32.mrf.mxu0
        %v451 = vadd.f32 0.0, %v450
        %452 = vdwg.mxu0
        %v453 = vadd.f32 %v296, %v424
        %v454 = vadd.f32 %v296, %v426
        %v455 = vadd.f32 %v296, %v429
        %v456 = vadd.f32 %v296, %v431
        %v457 = vadd.f32 %v296, %v434
        %v458 = vadd.f32 %v296, %v436
        %v459 = vadd.f32 %v296, %v439
        %v460 = vadd.f32 %v296, %v441
        %v461 = vadd.f32 %v296, %v444
        %v462 = vadd.f32 %v296, %v446
        %v463 = vadd.f32 %v296, %v449
        %v464 = vadd.f32 %v296, %v451
        %v465 = vld [vmem:[%s301] sm:$0xf]
        %v466 = vld [vmem:[%s301 + $0x4] sm:$0xf]
        %v467 = vld [vmem:[%s301 + $0x8] sm:$0xf]
        %v468 = vld [vmem:[%s301 + $0xc] sm:$0xf]
        %v469 = vld [vmem:[%s301 + $0x10] sm:$0xf]
        %v470 = vld [vmem:[%s301 + $0x14] sm:$0xf]
        %v471 = vld [vmem:[%s301 + $0x18] sm:$0xf]
        %v472 = vld [vmem:[%s301 + $0x1c] sm:$0xf]
        %v473 = vld [vmem:[%s301 + $0x20] sm:$0xf]
        %v474 = vld [vmem:[%s301 + $0x24] sm:$0xf]
        %v475 = vld [vmem:[%s301 + $0x28] sm:$0xf]
        %v476 = vld [vmem:[%s301 + $0x2c] sm:$0xf]
        %v477 = vld [vmem:[%s301 + $0x30] sm:$0x1]
        %s478 = scalar_lea.vmem [#allocation4], 64
        %v479 = vld [vmem:[%s478] sm:$0xf]
        %v480 = vld [vmem:[%s478 + $0x4] sm:$0xf]
        %v481 = vld [vmem:[%s478 + $0x8] sm:$0xf]
        %v482 = vld [vmem:[%s478 + $0xc] sm:$0xf]
        %v483 = vld [vmem:[%s478 + $0x10] sm:$0xf]
        %v484 = vld [vmem:[%s478 + $0x14] sm:$0xf]
        %v485 = vld [vmem:[%s478 + $0x18] sm:$0xf]
        %v486 = vld [vmem:[%s478 + $0x1c] sm:$0xf]
        %v487 = vld [vmem:[%s478 + $0x20] sm:$0xf]
        %v488 = vld [vmem:[%s478 + $0x24] sm:$0xf]
        %v489 = vld [vmem:[%s478 + $0x28] sm:$0xf]
        %v490 = vld [vmem:[%s478 + $0x2c] sm:$0xf]
        %v491 = vld [vmem:[%s478 + $0x30] sm:$0xf]
        %v492 = vld [vmem:[%s478 + $0x34] sm:$0xf]
        %v493 = vld [vmem:[%s478 + $0x38] sm:$0xf]
        %v494 = vld [vmem:[%s478 + $0x3c] sm:$0xf]
        %v508 = vunpack.c.l.b16 %v465
        %v509 = vunpack.c.l.b16 %v466
        %v510 = vunpack.c.l.b16 %v467
        %v511 = vunpack.c.l.b16 %v468
        %v512 = vunpack.c.l.b16 %v469
        %v513 = vunpack.c.l.b16 %v470
        %v514 = vunpack.c.l.b16 %v471
        %v515 = vunpack.c.l.b16 %v472
        %v516 = vunpack.c.l.b16 %v473
        %v517 = vunpack.c.l.b16 %v474
        %v518 = vunpack.c.l.b16 %v475
        %v519 = vunpack.c.l.b16 %v476
        %v520 = vunpack.c.l.b16 %v477
        %v521 = vpack.c.b16 %v509, %v508
        %v522 = vpack.c.b16 %v511, %v510
        %v523 = vpack.c.b16 %v513, %v512
        %v524 = vpack.c.b16 %v515, %v514
        %v525 = vpack.c.b16 %v517, %v516
        %v526 = vpack.c.b16 %v519, %v518
        %v527 = vpack.c.b16 %v520, %v520
        %vm528 = vsmask.f32 7424
        %v530 = vshrl.u32 %v521, 16
        %v532 = vshll.u32 %v521, 16
        %v534 = vrot.slane %v532, 1
        %v535 = vor.u32 %v530, %v534
        %v537 = vshll.u32 %v522, 16
        %v539 = vrot.slane %v537, 1
        %v540 = vsel %vm528, %v535, %v539
        %v541 = vshrl.u32 %v522, 16
        %v543 = vor.u32 %v541, %v539
        %v545 = vshll.u32 %v523, 16
        %v547 = vrot.slane %v545, 1
        %v548 = vsel %vm528, %v543, %v547
        %v549 = vshrl.u32 %v523, 16
        %v551 = vor.u32 %v549, %v547
        %v553 = vshll.u32 %v524, 16
        %v555 = vrot.slane %v553, 1
        %v556 = vsel %vm528, %v551, %v555
        %v557 = vshrl.u32 %v524, 16
        %v559 = vor.u32 %v557, %v555
        %v561 = vshll.u32 %v525, 16
        %v563 = vrot.slane %v561, 1
        %v564 = vsel %vm528, %v559, %v563
        %v565 = vshrl.u32 %v525, 16
        %v567 = vor.u32 %v565, %v563
        %v569 = vshll.u32 %v526, 16
        %v571 = vrot.slane %v569, 1
        %v572 = vsel %vm528, %v567, %v571
        %v573 = vshrl.u32 %v526, 16
        %v575 = vor.u32 %v573, %v571
        %v577 = vshll.u32 %v527, 16
        %v579 = vrot.slane %v577, 1
        %v580 = vsel %vm528, %v575, %v579
        %v603 = vunpack.c.l.b16 %v479
        %v604 = vunpack.c.l.b16 %v480
        %v605 = vunpack.c.l.b16 %v481
        %v606 = vunpack.c.l.b16 %v482
        %v607 = vunpack.c.l.b16 %v483
        %v608 = vunpack.c.l.b16 %v484
        %v609 = vunpack.c.l.b16 %v485
        %v610 = vunpack.c.l.b16 %v486
        %v611 = vunpack.c.l.b16 %v487
        %v612 = vunpack.c.l.b16 %v488
        %v613 = vunpack.c.l.b16 %v489
        %v614 = vunpack.c.l.b16 %v490
        %v615 = vunpack.c.l.b16 %v491
        %v616 = vunpack.c.l.b16 %v492
        %v617 = vunpack.c.l.b16 %v493
        %v618 = vunpack.c.l.b16 %v494
        %v619 = vpack.c.b16 %v604, %v603
        %v620 = vpack.c.b16 %v606, %v605
        %v621 = vpack.c.b16 %v608, %v607
        %v622 = vpack.c.b16 %v610, %v609
        %v623 = vpack.c.b16 %v612, %v611
        %v624 = vpack.c.b16 %v614, %v613
        %v625 = vpack.c.b16 %v616, %v615
        %v626 = vpack.c.b16 %v618, %v617
        %635 = vmatpush.bf16.msra.mxu0 %v626
        %636 = vmatpush.bf16.msra.mxu0 %v625
        %637 = vmatpush.bf16.msra.mxu0 %v624
        %638 = vmatpush.bf16.msra.mxu0 %v623
        %639 = vmatpush.bf16.msra.mxu0 %v622
        %640 = vmatpush.bf16.msra.mxu0 %v621
        %641 = vmatpush.bf16.msra.mxu0 %v620
        %642 = vmatpush.bf16.msra.mxu0 %v619
        %643 = vmatmul.bf16.gmra.mxu0 %v540
        %v644 = vpop.f32.mrf.mxu0
        %v645 = vadd.f32 0.0, %v644
        %v646 = vpop.f32.mrf.mxu0
        %v647 = vadd.f32 0.0, %v646
        %648 = vmatmul.bf16.gmra.mxu0 %v548
        %v649 = vpop.f32.mrf.mxu0
        %v650 = vadd.f32 0.0, %v649
        %v651 = vpop.f32.mrf.mxu0
        %v652 = vadd.f32 0.0, %v651
        %653 = vmatmul.bf16.gmra.mxu0 %v556
        %v654 = vpop.f32.mrf.mxu0
        %v655 = vadd.f32 0.0, %v654
        %v656 = vpop.f32.mrf.mxu0
        %v657 = vadd.f32 0.0, %v656
        %658 = vmatmul.bf16.gmra.mxu0 %v564
        %v659 = vpop.f32.mrf.mxu0
        %v660 = vadd.f32 0.0, %v659
        %v661 = vpop.f32.mrf.mxu0
        %v662 = vadd.f32 0.0, %v661
        %663 = vmatmul.bf16.gmra.mxu0 %v572
        %v664 = vpop.f32.mrf.mxu0
        %v665 = vadd.f32 0.0, %v664
        %v666 = vpop.f32.mrf.mxu0
        %v667 = vadd.f32 0.0, %v666
        %668 = vmatmul.bf16.gmra.mxu0 %v580
        %v669 = vpop.f32.mrf.mxu0
        %v670 = vadd.f32 0.0, %v669
        %v671 = vpop.f32.mrf.mxu0
        %v672 = vadd.f32 0.0, %v671
        %673 = vdwg.mxu0
        %v674 = vadd.f32 %v453, %v645
        %v675 = vadd.f32 %v454, %v647
        %v676 = vadd.f32 %v455, %v650
        %v677 = vadd.f32 %v456, %v652
        %v678 = vadd.f32 %v457, %v655
        %v679 = vadd.f32 %v458, %v657
        %v680 = vadd.f32 %v459, %v660
        %v681 = vadd.f32 %v460, %v662
        %v682 = vadd.f32 %v461, %v665
        %v683 = vadd.f32 %v462, %v667
        %v684 = vadd.f32 %v463, %v670
        %v685 = vadd.f32 %v464, %v672
        %v686 = vld [vmem:[%s301] sm:$0xe]
        %s687 = scalar_lea.vmem [#allocation4], 128
        %v688 = vld [vmem:[%s687] sm:$0xf]
        %v689 = vld [vmem:[%s687 + $0x4] sm:$0xf]
        %v690 = vld [vmem:[%s687 + $0x8] sm:$0xf]
        %v691 = vld [vmem:[%s687 + $0xc] sm:$0xf]
        %v692 = vld [vmem:[%s687 + $0x10] sm:$0xf]
        %v693 = vld [vmem:[%s687 + $0x14] sm:$0xf]
        %v694 = vld [vmem:[%s687 + $0x18] sm:$0xf]
        %v695 = vld [vmem:[%s687 + $0x1c] sm:$0xf]
        %v696 = vld [vmem:[%s687 + $0x20] sm:$0xf]
        %v697 = vld [vmem:[%s687 + $0x24] sm:$0xf]
        %v698 = vld [vmem:[%s687 + $0x28] sm:$0xf]
        %v699 = vld [vmem:[%s687 + $0x2c] sm:$0xf]
        %v700 = vld [vmem:[%s687 + $0x30] sm:$0xf]
        %v701 = vld [vmem:[%s687 + $0x34] sm:$0xf]
        %v702 = vld [vmem:[%s687 + $0x38] sm:$0xf]
        %v703 = vld [vmem:[%s687 + $0x3c] sm:$0xf]
        %v705 = vunpack.c.l.b16 %v686
        %v706 = vpack.c.b16 %v509, %v705
        %vm707 = vcmask 1046528
        %v708 = vrot.slane %v706, 1
        %v709 = vrot.slane %v522, 1
        %v710 = vsel %vm707, %v708, %v709
        %v711 = vrot.slane %v523, 1
        %v712 = vsel %vm707, %v709, %v711
        %v713 = vrot.slane %v524, 1
        %v714 = vsel %vm707, %v711, %v713
        %v715 = vrot.slane %v525, 1
        %v716 = vsel %vm707, %v713, %v715
        %v717 = vrot.slane %v526, 1
        %v718 = vsel %vm707, %v715, %v717
        %v719 = vrot.slane %v527, 1
        %v720 = vsel %vm707, %v717, %v719
        %v743 = vunpack.c.l.b16 %v688
        %v744 = vunpack.c.l.b16 %v689
        %v745 = vunpack.c.l.b16 %v690
        %v746 = vunpack.c.l.b16 %v691
        %v747 = vunpack.c.l.b16 %v692
        %v748 = vunpack.c.l.b16 %v693
        %v749 = vunpack.c.l.b16 %v694
        %v750 = vunpack.c.l.b16 %v695
        %v751 = vunpack.c.l.b16 %v696
        %v752 = vunpack.c.l.b16 %v697
        %v753 = vunpack.c.l.b16 %v698
        %v754 = vunpack.c.l.b16 %v699
        %v755 = vunpack.c.l.b16 %v700
        %v756 = vunpack.c.l.b16 %v701
        %v757 = vunpack.c.l.b16 %v702
        %v758 = vunpack.c.l.b16 %v703
        %v759 = vpack.c.b16 %v744, %v743
        %v760 = vpack.c.b16 %v746, %v745
        %v761 = vpack.c.b16 %v748, %v747
        %v762 = vpack.c.b16 %v750, %v749
        %v763 = vpack.c.b16 %v752, %v751
        %v764 = vpack.c.b16 %v754, %v753
        %v765 = vpack.c.b16 %v756, %v755
        %v766 = vpack.c.b16 %v758, %v757
        %775 = vmatpush.bf16.msra.mxu0 %v766
        %776 = vmatpush.bf16.msra.mxu0 %v765
        %777 = vmatpush.bf16.msra.mxu0 %v764
        %778 = vmatpush.bf16.msra.mxu0 %v763
        %779 = vmatpush.bf16.msra.mxu0 %v762
        %780 = vmatpush.bf16.msra.mxu0 %v761
        %781 = vmatpush.bf16.msra.mxu0 %v760
        %782 = vmatpush.bf16.msra.mxu0 %v759
        %783 = vmatmul.bf16.gmra.mxu0 %v710
        %v784 = vpop.f32.mrf.mxu0
        %v785 = vadd.f32 0.0, %v784
        %v786 = vpop.f32.mrf.mxu0
        %v787 = vadd.f32 0.0, %v786
        %788 = vmatmul.bf16.gmra.mxu0 %v712
        %v789 = vpop.f32.mrf.mxu0
        %v790 = vadd.f32 0.0, %v789
        %v791 = vpop.f32.mrf.mxu0
        %v792 = vadd.f32 0.0, %v791
        %793 = vmatmul.bf16.gmra.mxu0 %v714
        %v794 = vpop.f32.mrf.mxu0
        %v795 = vadd.f32 0.0, %v794
        %v796 = vpop.f32.mrf.mxu0
        %v797 = vadd.f32 0.0, %v796
        %798 = vmatmul.bf16.gmra.mxu0 %v716
        %v799 = vpop.f32.mrf.mxu0
        %v800 = vadd.f32 0.0, %v799
        %v801 = vpop.f32.mrf.mxu0
        %v802 = vadd.f32 0.0, %v801
        %803 = vmatmul.bf16.gmra.mxu0 %v718
        %v804 = vpop.f32.mrf.mxu0
        %v805 = vadd.f32 0.0, %v804
        %v806 = vpop.f32.mrf.mxu0
        %v807 = vadd.f32 0.0, %v806
        %808 = vmatmul.bf16.gmra.mxu0 %v720
        %v809 = vpop.f32.mrf.mxu0
        %v810 = vadd.f32 0.0, %v809
        %v811 = vpop.f32.mrf.mxu0
        %v812 = vadd.f32 0.0, %v811
        %813 = vdwg.mxu0
        %v814 = vadd.f32 %v674, %v785
        %v815 = vadd.f32 %v675, %v787
        %v816 = vadd.f32 %v676, %v790
        %v817 = vadd.f32 %v677, %v792
        %v818 = vadd.f32 %v678, %v795
        %v819 = vadd.f32 %v679, %v797
        %v820 = vadd.f32 %v680, %v800
        %v821 = vadd.f32 %v681, %v802
        %v822 = vadd.f32 %v682, %v805
        %v823 = vadd.f32 %v683, %v807
        %v824 = vadd.f32 %v684, %v810
        %v825 = vadd.f32 %v685, %v812
        %v826 = vld [vmem:[%s301 + $0x4] sm:$0xc]
        %v827 = vld [vmem:[%s301 + $0x8] sm:$0xf]
        %v828 = vld [vmem:[%s301 + $0xc] sm:$0xf]
        %v829 = vld [vmem:[%s301 + $0x10] sm:$0xf]
        %v830 = vld [vmem:[%s301 + $0x14] sm:$0xf]
        %v831 = vld [vmem:[%s301 + $0x18] sm:$0xf]
        %v832 = vld [vmem:[%s301 + $0x1c] sm:$0xf]
        %v833 = vld [vmem:[%s301 + $0x20] sm:$0xf]
        %v834 = vld [vmem:[%s301 + $0x24] sm:$0xf]
        %v835 = vld [vmem:[%s301 + $0x28] sm:$0xf]
        %v836 = vld [vmem:[%s301 + $0x2c] sm:$0xf]
        %v837 = vld [vmem:[%s301 + $0x30] sm:$0xf]
        %v838 = vld [vmem:[%s301 + $0x34] sm:$0x3]
        %s839 = scalar_lea.vmem [#allocation4], 192
        %v840 = vld [vmem:[%s839] sm:$0xf]
        %v841 = vld [vmem:[%s839 + $0x4] sm:$0xf]
        %v842 = vld [vmem:[%s839 + $0x8] sm:$0xf]
        %v843 = vld [vmem:[%s839 + $0xc] sm:$0xf]
        %v844 = vld [vmem:[%s839 + $0x10] sm:$0xf]
        %v845 = vld [vmem:[%s839 + $0x14] sm:$0xf]
        %v846 = vld [vmem:[%s839 + $0x18] sm:$0xf]
        %v847 = vld [vmem:[%s839 + $0x1c] sm:$0xf]
        %v848 = vld [vmem:[%s839 + $0x20] sm:$0xf]
        %v849 = vld [vmem:[%s839 + $0x24] sm:$0xf]
        %v850 = vld [vmem:[%s839 + $0x28] sm:$0xf]
        %v851 = vld [vmem:[%s839 + $0x2c] sm:$0xf]
        %v852 = vld [vmem:[%s839 + $0x30] sm:$0xf]
        %v853 = vld [vmem:[%s839 + $0x34] sm:$0xf]
        %v854 = vld [vmem:[%s839 + $0x38] sm:$0xf]
        %v855 = vld [vmem:[%s839 + $0x3c] sm:$0xf]
        %v869 = vunpack.c.l.b16 %v826
        %v870 = vunpack.c.l.b16 %v827
        %v871 = vunpack.c.l.b16 %v828
        %v872 = vunpack.c.l.b16 %v829
        %v873 = vunpack.c.l.b16 %v830
        %v874 = vunpack.c.l.b16 %v831
        %v875 = vunpack.c.l.b16 %v832
        %v876 = vunpack.c.l.b16 %v833
        %v877 = vunpack.c.l.b16 %v834
        %v878 = vunpack.c.l.b16 %v835
        %v879 = vunpack.c.l.b16 %v836
        %v880 = vunpack.c.l.b16 %v837
        %v881 = vunpack.c.l.b16 %v838
        %v882 = vpack.c.b16 %v870, %v869
        %v883 = vpack.c.b16 %v872, %v871
        %v884 = vpack.c.b16 %v874, %v873
        %v885 = vpack.c.b16 %v876, %v875
        %v886 = vpack.c.b16 %v878, %v877
        %v887 = vpack.c.b16 %v880, %v879
        %v888 = vpack.c.b16 %v881, %v881
        %vm889 = vcmask 1045504
        %v890 = vrot.slane %v882, 2
        %v891 = vrot.slane %v883, 2
        %v892 = vsel %vm889, %v890, %v891
        %v893 = vrot.slane %v884, 2
        %v894 = vsel %vm889, %v891, %v893
        %v895 = vrot.slane %v885, 2
        %v896 = vsel %vm889, %v893, %v895
        %v897 = vrot.slane %v886, 2
        %v898 = vsel %vm889, %v895, %v897
        %v899 = vrot.slane %v887, 2
        %v900 = vsel %vm889, %v897, %v899
        %v901 = vrot.slane %v888, 2
        %v902 = vsel %vm889, %v899, %v901
        %v925 = vunpack.c.l.b16 %v840
        %v926 = vunpack.c.l.b16 %v841
        %v927 = vunpack.c.l.b16 %v842
        %v928 = vunpack.c.l.b16 %v843
        %v929 = vunpack.c.l.b16 %v844
        %v930 = vunpack.c.l.b16 %v845
        %v931 = vunpack.c.l.b16 %v846
        %v932 = vunpack.c.l.b16 %v847
        %v933 = vunpack.c.l.b16 %v848
        %v934 = vunpack.c.l.b16 %v849
        %v935 = vunpack.c.l.b16 %v850
        %v936 = vunpack.c.l.b16 %v851
        %v937 = vunpack.c.l.b16 %v852
        %v938 = vunpack.c.l.b16 %v853
        %v939 = vunpack.c.l.b16 %v854
        %v940 = vunpack.c.l.b16 %v855
        %v941 = vpack.c.b16 %v926, %v925
        %v942 = vpack.c.b16 %v928, %v927
        %v943 = vpack.c.b16 %v930, %v929
        %v944 = vpack.c.b16 %v932, %v931
        %v945 = vpack.c.b16 %v934, %v933
        %v946 = vpack.c.b16 %v936, %v935
        %v947 = vpack.c.b16 %v938, %v937
        %v948 = vpack.c.b16 %v940, %v939
        %957 = vmatpush.bf16.msra.mxu0 %v948
        %958 = vmatpush.bf16.msra.mxu0 %v947
        %959 = vmatpush.bf16.msra.mxu0 %v946
        %960 = vmatpush.bf16.msra.mxu0 %v945
        %961 = vmatpush.bf16.msra.mxu0 %v944
        %962 = vmatpush.bf16.msra.mxu0 %v943
        %963 = vmatpush.bf16.msra.mxu0 %v942
        %964 = vmatpush.bf16.msra.mxu0 %v941
        %965 = vmatmul.bf16.gmra.mxu0 %v892
        %v966 = vpop.f32.mrf.mxu0
        %v967 = vadd.f32 0.0, %v966
        %v968 = vpop.f32.mrf.mxu0
        %v969 = vadd.f32 0.0, %v968
        %970 = vmatmul.bf16.gmra.mxu0 %v894
        %v971 = vpop.f32.mrf.mxu0
        %v972 = vadd.f32 0.0, %v971
        %v973 = vpop.f32.mrf.mxu0
        %v974 = vadd.f32 0.0, %v973
        %975 = vmatmul.bf16.gmra.mxu0 %v896
        %v976 = vpop.f32.mrf.mxu0
        %v977 = vadd.f32 0.0, %v976
        %v978 = vpop.f32.mrf.mxu0
        %v979 = vadd.f32 0.0, %v978
        %980 = vmatmul.bf16.gmra.mxu0 %v898
        %v981 = vpop.f32.mrf.mxu0
        %v982 = vadd.f32 0.0, %v981
        %v983 = vpop.f32.mrf.mxu0
        %v984 = vadd.f32 0.0, %v983
        %985 = vmatmul.bf16.gmra.mxu0 %v900
        %v986 = vpop.f32.mrf.mxu0
        %v987 = vadd.f32 0.0, %v986
        %v988 = vpop.f32.mrf.mxu0
        %v989 = vadd.f32 0.0, %v988
        %990 = vmatmul.bf16.gmra.mxu0 %v902
        %v991 = vpop.f32.mrf.mxu0
        %v992 = vadd.f32 0.0, %v991
        %v993 = vpop.f32.mrf.mxu0
        %v994 = vadd.f32 0.0, %v993
        %995 = vdwg.mxu0
        %v996 = vadd.f32 %v814, %v967
        %v997 = vadd.f32 %v815, %v969
        %v998 = vadd.f32 %v816, %v972
        %v999 = vadd.f32 %v817, %v974
        %v1000 = vadd.f32 %v818, %v977
        %v1001 = vadd.f32 %v819, %v979
        %v1002 = vadd.f32 %v820, %v982
        %v1003 = vadd.f32 %v821, %v984
        %v1004 = vadd.f32 %v822, %v987
        %v1005 = vadd.f32 %v823, %v989
        %v1006 = vadd.f32 %v824, %v992
        %v1007 = vadd.f32 %v825, %v994
        %v1008 = vld [vmem:[%s301 + $0x34] sm:$0x7]
        %s1009 = scalar_lea.vmem [#allocation4], 256
        %v1010 = vld [vmem:[%s1009] sm:$0xf]
        %v1011 = vld [vmem:[%s1009 + $0x4] sm:$0xf]
        %v1012 = vld [vmem:[%s1009 + $0x8] sm:$0xf]
        %v1013 = vld [vmem:[%s1009 + $0xc] sm:$0xf]
        %v1014 = vld [vmem:[%s1009 + $0x10] sm:$0xf]
        %v1015 = vld [vmem:[%s1009 + $0x14] sm:$0xf]
        %v1016 = vld [vmem:[%s1009 + $0x18] sm:$0xf]
        %v1017 = vld [vmem:[%s1009 + $0x1c] sm:$0xf]
        %v1018 = vld [vmem:[%s1009 + $0x20] sm:$0xf]
        %v1019 = vld [vmem:[%s1009 + $0x24] sm:$0xf]
        %v1020 = vld [vmem:[%s1009 + $0x28] sm:$0xf]
        %v1021 = vld [vmem:[%s1009 + $0x2c] sm:$0xf]
        %v1022 = vld [vmem:[%s1009 + $0x30] sm:$0xf]
        %v1023 = vld [vmem:[%s1009 + $0x34] sm:$0xf]
        %v1024 = vld [vmem:[%s1009 + $0x38] sm:$0xf]
        %v1025 = vld [vmem:[%s1009 + $0x3c] sm:$0xf]
        %v1027 = vunpack.c.l.b16 %v1008
        %v1028 = vpack.c.b16 %v1027, %v1027
        %vm1029 = vsmask.f32 5376
        %v1031 = vshrl.u32 %v882, 16
        %v1033 = vrot.slane %v1031, 2
        %v1034 = vshll.u32 %v882, 16
        %v1036 = vrot.slane %v1034, 3
        %v1037 = vor.u32 %v1033, %v1036
        %v1039 = vshrl.u32 %v883, 16
        %v1041 = vrot.slane %v1039, 2
        %v1042 = vshll.u32 %v883, 16
        %v1044 = vrot.slane %v1042, 3
        %v1045 = vor.u32 %v1041, %v1044
        %v1046 = vsel %vm1029, %v1037, %v1045
        %v1048 = vshrl.u32 %v884, 16
        %v1050 = vrot.slane %v1048, 2
        %v1051 = vshll.u32 %v884, 16
        %v1053 = vrot.slane %v1051, 3
        %v1054 = vor.u32 %v1050, %v1053
        %v1055 = vsel %vm1029, %v1045, %v1054
        %v1057 = vshrl.u32 %v885, 16
        %v1059 = vrot.slane %v1057, 2
        %v1060 = vshll.u32 %v885, 16
        %v1062 = vrot.slane %v1060, 3
        %v1063 = vor.u32 %v1059, %v1062
        %v1064 = vsel %vm1029, %v1054, %v1063
        %v1066 = vshrl.u32 %v886, 16
        %v1068 = vrot.slane %v1066, 2
        %v1069 = vshll.u32 %v886, 16
        %v1071 = vrot.slane %v1069, 3
        %v1072 = vor.u32 %v1068, %v1071
        %v1073 = vsel %vm1029, %v1063, %v1072
        %v1075 = vshrl.u32 %v887, 16
        %v1077 = vrot.slane %v1075, 2
        %v1078 = vshll.u32 %v887, 16
        %v1080 = vrot.slane %v1078, 3
        %v1081 = vor.u32 %v1077, %v1080
        %v1082 = vsel %vm1029, %v1072, %v1081
        %v1084 = vshrl.u32 %v1028, 16
        %v1086 = vrot.slane %v1084, 2
        %v1087 = vshll.u32 %v1028, 16
        %v1089 = vrot.slane %v1087, 3
        %v1090 = vor.u32 %v1086, %v1089
        %v1091 = vsel %vm1029, %v1081, %v1090
        %v1114 = vunpack.c.l.b16 %v1010
        %v1115 = vunpack.c.l.b16 %v1011
        %v1116 = vunpack.c.l.b16 %v1012
        %v1117 = vunpack.c.l.b16 %v1013
        %v1118 = vunpack.c.l.b16 %v1014
        %v1119 = vunpack.c.l.b16 %v1015
        %v1120 = vunpack.c.l.b16 %v1016
        %v1121 = vunpack.c.l.b16 %v1017
        %v1122 = vunpack.c.l.b16 %v1018
        %v1123 = vunpack.c.l.b16 %v1019
        %v1124 = vunpack.c.l.b16 %v1020
        %v1125 = vunpack.c.l.b16 %v1021
        %v1126 = vunpack.c.l.b16 %v1022
        %v1127 = vunpack.c.l.b16 %v1023
        %v1128 = vunpack.c.l.b16 %v1024
        %v1129 = vunpack.c.l.b16 %v1025
        %v1130 = vpack.c.b16 %v1115, %v1114
        %v1131 = vpack.c.b16 %v1117, %v1116
        %v1132 = vpack.c.b16 %v1119, %v1118
        %v1133 = vpack.c.b16 %v1121, %v1120
        %v1134 = vpack.c.b16 %v1123, %v1122
        %v1135 = vpack.c.b16 %v1125, %v1124
        %v1136 = vpack.c.b16 %v1127, %v1126
        %v1137 = vpack.c.b16 %v1129, %v1128
        %1146 = vmatpush.bf16.msra.mxu0 %v1137
        %1147 = vmatpush.bf16.msra.mxu0 %v1136
        %1148 = vmatpush.bf16.msra.mxu0 %v1135
        %1149 = vmatpush.bf16.msra.mxu0 %v1134
        %1150 = vmatpush.bf16.msra.mxu0 %v1133
        %1151 = vmatpush.bf16.msra.mxu0 %v1132
        %1152 = vmatpush.bf16.msra.mxu0 %v1131
        %1153 = vmatpush.bf16.msra.mxu0 %v1130
        %1154 = vmatmul.bf16.gmra.mxu0 %v1046
        %v1155 = vpop.f32.mrf.mxu0
        %v1156 = vadd.f32 0.0, %v1155
        %v1157 = vpop.f32.mrf.mxu0
        %v1158 = vadd.f32 0.0, %v1157
        %1159 = vmatmul.bf16.gmra.mxu0 %v1055
        %v1160 = vpop.f32.mrf.mxu0
        %v1161 = vadd.f32 0.0, %v1160
        %v1162 = vpop.f32.mrf.mxu0
        %v1163 = vadd.f32 0.0, %v1162
        %1164 = vmatmul.bf16.gmra.mxu0 %v1064
        %v1165 = vpop.f32.mrf.mxu0
        %v1166 = vadd.f32 0.0, %v1165
        %v1167 = vpop.f32.mrf.mxu0
        %v1168 = vadd.f32 0.0, %v1167
        %1169 = vmatmul.bf16.gmra.mxu0 %v1073
        %v1170 = vpop.f32.mrf.mxu0
        %v1171 = vadd.f32 0.0, %v1170
        %v1172 = vpop.f32.mrf.mxu0
        %v1173 = vadd.f32 0.0, %v1172
        %1174 = vmatmul.bf16.gmra.mxu0 %v1082
        %v1175 = vpop.f32.mrf.mxu0
        %v1176 = vadd.f32 0.0, %v1175
        %v1177 = vpop.f32.mrf.mxu0
        %v1178 = vadd.f32 0.0, %v1177
        %1179 = vmatmul.bf16.gmra.mxu0 %v1091
        %v1180 = vpop.f32.mrf.mxu0
        %v1181 = vadd.f32 0.0, %v1180
        %v1182 = vpop.f32.mrf.mxu0
        %v1183 = vadd.f32 0.0, %v1182
        %1184 = vdwg.mxu0
        %v1185 = vadd.f32 %v996, %v1156
        %v1186 = vadd.f32 %v997, %v1158
        %v1187 = vadd.f32 %v998, %v1161
        %v1188 = vadd.f32 %v999, %v1163
        %v1189 = vadd.f32 %v1000, %v1166
        %v1190 = vadd.f32 %v1001, %v1168
        %v1191 = vadd.f32 %v1002, %v1171
        %v1192 = vadd.f32 %v1003, %v1173
        %v1193 = vadd.f32 %v1004, %v1176
        %v1194 = vadd.f32 %v1005, %v1178
        %v1195 = vadd.f32 %v1006, %v1181
        %v1196 = vadd.f32 %v1007, %v1183
        %v1197 = vld [vmem:[%s301 + $0x4] sm:$0x8]
        %s1198 = scalar_lea.vmem [#allocation4], 320
        %v1199 = vld [vmem:[%s1198] sm:$0xf]
        %v1200 = vld [vmem:[%s1198 + $0x4] sm:$0xf]
        %v1201 = vld [vmem:[%s1198 + $0x8] sm:$0xf]
        %v1202 = vld [vmem:[%s1198 + $0xc] sm:$0xf]
        %v1203 = vld [vmem:[%s1198 + $0x10] sm:$0xf]
        %v1204 = vld [vmem:[%s1198 + $0x14] sm:$0xf]
        %v1205 = vld [vmem:[%s1198 + $0x18] sm:$0xf]
        %v1206 = vld [vmem:[%s1198 + $0x1c] sm:$0xf]
        %v1207 = vld [vmem:[%s1198 + $0x20] sm:$0xf]
        %v1208 = vld [vmem:[%s1198 + $0x24] sm:$0xf]
        %v1209 = vld [vmem:[%s1198 + $0x28] sm:$0xf]
        %v1210 = vld [vmem:[%s1198 + $0x2c] sm:$0xf]
        %v1211 = vld [vmem:[%s1198 + $0x30] sm:$0xf]
        %v1212 = vld [vmem:[%s1198 + $0x34] sm:$0xf]
        %v1213 = vld [vmem:[%s1198 + $0x38] sm:$0xf]
        %v1214 = vld [vmem:[%s1198 + $0x3c] sm:$0xf]
        %v1216 = vunpack.c.l.b16 %v1197
        %v1217 = vpack.c.b16 %v870, %v1216
        %vm1218 = vcmask 1044480
        %v1219 = vrot.slane %v1217, 3
        %v1220 = vrot.slane %v883, 3
        %v1221 = vsel %vm1218, %v1219, %v1220
        %v1222 = vrot.slane %v884, 3
        %v1223 = vsel %vm1218, %v1220, %v1222
        %v1224 = vrot.slane %v885, 3
        %v1225 = vsel %vm1218, %v1222, %v1224
        %v1226 = vrot.slane %v886, 3
        %v1227 = vsel %vm1218, %v1224, %v1226
        %v1228 = vrot.slane %v887, 3
        %v1229 = vsel %vm1218, %v1226, %v1228
        %v1230 = vrot.slane %v1028, 3
        %v1231 = vsel %vm1218, %v1228, %v1230
        %v1254 = vunpack.c.l.b16 %v1199
        %v1255 = vunpack.c.l.b16 %v1200
        %v1256 = vunpack.c.l.b16 %v1201
        %v1257 = vunpack.c.l.b16 %v1202
        %v1258 = vunpack.c.l.b16 %v1203
        %v1259 = vunpack.c.l.b16 %v1204
        %v1260 = vunpack.c.l.b16 %v1205
        %v1261 = vunpack.c.l.b16 %v1206
        %v1262 = vunpack.c.l.b16 %v1207
        %v1263 = vunpack.c.l.b16 %v1208
        %v1264 = vunpack.c.l.b16 %v1209
        %v1265 = vunpack.c.l.b16 %v1210
        %v1266 = vunpack.c.l.b16 %v1211
        %v1267 = vunpack.c.l.b16 %v1212
        %v1268 = vunpack.c.l.b16 %v1213
        %v1269 = vunpack.c.l.b16 %v1214
        %v1270 = vpack.c.b16 %v1255, %v1254
        %v1271 = vpack.c.b16 %v1257, %v1256
        %v1272 = vpack.c.b16 %v1259, %v1258
        %v1273 = vpack.c.b16 %v1261, %v1260
        %v1274 = vpack.c.b16 %v1263, %v1262
        %v1275 = vpack.c.b16 %v1265, %v1264
        %v1276 = vpack.c.b16 %v1267, %v1266
        %v1277 = vpack.c.b16 %v1269, %v1268
        %1286 = vmatpush.bf16.msra.mxu0 %v1277
        %1287 = vmatpush.bf16.msra.mxu0 %v1276
        %1288 = vmatpush.bf16.msra.mxu0 %v1275
        %1289 = vmatpush.bf16.msra.mxu0 %v1274
        %1290 = vmatpush.bf16.msra.mxu0 %v1273
        %1291 = vmatpush.bf16.msra.mxu0 %v1272
        %1292 = vmatpush.bf16.msra.mxu0 %v1271
        %1293 = vmatpush.bf16.msra.mxu0 %v1270
        %1294 = vmatmul.bf16.gmra.mxu0 %v1221
        %v1295 = vpop.f32.mrf.mxu0
        %v1296 = vadd.f32 0.0, %v1295
        %v1297 = vpop.f32.mrf.mxu0
        %v1298 = vadd.f32 0.0, %v1297
        %1299 = vmatmul.bf16.gmra.mxu0 %v1223
        %v1300 = vpop.f32.mrf.mxu0
        %v1301 = vadd.f32 0.0, %v1300
        %v1302 = vpop.f32.mrf.mxu0
        %v1303 = vadd.f32 0.0, %v1302
        %1304 = vmatmul.bf16.gmra.mxu0 %v1225
        %v1305 = vpop.f32.mrf.mxu0
        %v1306 = vadd.f32 0.0, %v1305
        %v1307 = vpop.f32.mrf.mxu0
        %v1308 = vadd.f32 0.0, %v1307
        %1309 = vmatmul.bf16.gmra.mxu0 %v1227
        %v1310 = vpop.f32.mrf.mxu0
        %v1311 = vadd.f32 0.0, %v1310
        %v1312 = vpop.f32.mrf.mxu0
        %v1313 = vadd.f32 0.0, %v1312
        %1314 = vmatmul.bf16.gmra.mxu0 %v1229
        %v1315 = vpop.f32.mrf.mxu0
        %v1316 = vadd.f32 0.0, %v1315
        %v1317 = vpop.f32.mrf.mxu0
        %v1318 = vadd.f32 0.0, %v1317
        %1319 = vmatmul.bf16.gmra.mxu0 %v1231
        %v1320 = vpop.f32.mrf.mxu0
        %v1321 = vadd.f32 0.0, %v1320
        %v1322 = vpop.f32.mrf.mxu0
        %v1323 = vadd.f32 0.0, %v1322
        %1324 = vdwg.mxu0
        %v1325 = vadd.f32 %v1185, %v1296
        %v1326 = vadd.f32 %v1186, %v1298
        %v1327 = vadd.f32 %v1187, %v1301
        %v1328 = vadd.f32 %v1188, %v1303
        %v1329 = vadd.f32 %v1189, %v1306
        %v1330 = vadd.f32 %v1190, %v1308
        %v1331 = vadd.f32 %v1191, %v1311
        %v1332 = vadd.f32 %v1192, %v1313
        %v1333 = vadd.f32 %v1193, %v1316
        %v1334 = vadd.f32 %v1194, %v1318
        %v1335 = vadd.f32 %v1195, %v1321
        %v1336 = vadd.f32 %v1196, %v1323
        %v1337 = vld [vmem:[%s301 + $0xc] sm:$0xf]
        %v1338 = vld [vmem:[%s301 + $0x10] sm:$0xf]
        %v1339 = vld [vmem:[%s301 + $0x14] sm:$0xf]
        %v1340 = vld [vmem:[%s301 + $0x18] sm:$0xf]
        %v1341 = vld [vmem:[%s301 + $0x1c] sm:$0xf]
        %v1342 = vld [vmem:[%s301 + $0x20] sm:$0xf]
        %v1343 = vld [vmem:[%s301 + $0x24] sm:$0xf]
        %v1344 = vld [vmem:[%s301 + $0x28] sm:$0xf]
        %v1345 = vld [vmem:[%s301 + $0x2c] sm:$0xf]
        %v1346 = vld [vmem:[%s301 + $0x30] sm:$0xf]
        %v1347 = vld [vmem:[%s301 + $0x34] sm:$0xf]
        %v1348 = vld [vmem:[%s301 + $0x38] sm:$0xf]
        %s1349 = scalar_lea.vmem [#allocation4], 384
        %v1350 = vld [vmem:[%s1349] sm:$0xf]
        %v1351 = vld [vmem:[%s1349 + $0x4] sm:$0xf]
        %v1352 = vld [vmem:[%s1349 + $0x8] sm:$0xf]
        %v1353 = vld [vmem:[%s1349 + $0xc] sm:$0xf]
        %v1354 = vld [vmem:[%s1349 + $0x10] sm:$0xf]
        %v1355 = vld [vmem:[%s1349 + $0x14] sm:$0xf]
        %v1356 = vld [vmem:[%s1349 + $0x18] sm:$0xf]
        %v1357 = vld [vmem:[%s1349 + $0x1c] sm:$0xf]
        %v1358 = vld [vmem:[%s1349 + $0x20] sm:$0xf]
        %v1359 = vld [vmem:[%s1349 + $0x24] sm:$0xf]
        %v1360 = vld [vmem:[%s1349 + $0x28] sm:$0xf]
        %v1361 = vld [vmem:[%s1349 + $0x2c] sm:$0xf]
        %v1362 = vld [vmem:[%s1349 + $0x30] sm:$0xf]
        %v1363 = vld [vmem:[%s1349 + $0x34] sm:$0xf]
        %v1364 = vld [vmem:[%s1349 + $0x38] sm:$0xf]
        %v1365 = vld [vmem:[%s1349 + $0x3c] sm:$0xf]
        %v1378 = vunpack.c.l.b16 %v1337
        %v1379 = vunpack.c.l.b16 %v1338
        %v1380 = vunpack.c.l.b16 %v1339
        %v1381 = vunpack.c.l.b16 %v1340
        %v1382 = vunpack.c.l.b16 %v1341
        %v1383 = vunpack.c.l.b16 %v1342
        %v1384 = vunpack.c.l.b16 %v1343
        %v1385 = vunpack.c.l.b16 %v1344
        %v1386 = vunpack.c.l.b16 %v1345
        %v1387 = vunpack.c.l.b16 %v1346
        %v1388 = vunpack.c.l.b16 %v1347
        %v1389 = vunpack.c.l.b16 %v1348
        %v1390 = vpack.c.b16 %v1379, %v1378
        %v1391 = vpack.c.b16 %v1381, %v1380
        %v1392 = vpack.c.b16 %v1383, %v1382
        %v1393 = vpack.c.b16 %v1385, %v1384
        %v1394 = vpack.c.b16 %v1387, %v1386
        %v1395 = vpack.c.b16 %v1389, %v1388
        %v1418 = vunpack.c.l.b16 %v1350
        %v1419 = vunpack.c.l.b16 %v1351
        %v1420 = vunpack.c.l.b16 %v1352
        %v1421 = vunpack.c.l.b16 %v1353
        %v1422 = vunpack.c.l.b16 %v1354
        %v1423 = vunpack.c.l.b16 %v1355
        %v1424 = vunpack.c.l.b16 %v1356
        %v1425 = vunpack.c.l.b16 %v1357
        %v1426 = vunpack.c.l.b16 %v1358
        %v1427 = vunpack.c.l.b16 %v1359
        %v1428 = vunpack.c.l.b16 %v1360
        %v1429 = vunpack.c.l.b16 %v1361
        %v1430 = vunpack.c.l.b16 %v1362
        %v1431 = vunpack.c.l.b16 %v1363
        %v1432 = vunpack.c.l.b16 %v1364
        %v1433 = vunpack.c.l.b16 %v1365
        %v1434 = vpack.c.b16 %v1419, %v1418
        %v1435 = vpack.c.b16 %v1421, %v1420
        %v1436 = vpack.c.b16 %v1423, %v1422
        %v1437 = vpack.c.b16 %v1425, %v1424
        %v1438 = vpack.c.b16 %v1427, %v1426
        %v1439 = vpack.c.b16 %v1429, %v1428
        %v1440 = vpack.c.b16 %v1431, %v1430
        %v1441 = vpack.c.b16 %v1433, %v1432
        %1450 = vmatpush.bf16.msra.mxu0 %v1441
        %1451 = vmatpush.bf16.msra.mxu0 %v1440
        %1452 = vmatpush.bf16.msra.mxu0 %v1439
        %1453 = vmatpush.bf16.msra.mxu0 %v1438
        %1454 = vmatpush.bf16.msra.mxu0 %v1437
        %1455 = vmatpush.bf16.msra.mxu0 %v1436
        %1456 = vmatpush.bf16.msra.mxu0 %v1435
        %1457 = vmatpush.bf16.msra.mxu0 %v1434
        %1458 = vmatmul.bf16.gmra.mxu0 %v1390
        %v1459 = vpop.f32.mrf.mxu0
        %v1460 = vadd.f32 0.0, %v1459
        %v1461 = vpop.f32.mrf.mxu0
        %v1462 = vadd.f32 0.0, %v1461
        %1463 = vmatmul.bf16.gmra.mxu0 %v1391
        %v1464 = vpop.f32.mrf.mxu0
        %v1465 = vadd.f32 0.0, %v1464
        %v1466 = vpop.f32.mrf.mxu0
        %v1467 = vadd.f32 0.0, %v1466
        %1468 = vmatmul.bf16.gmra.mxu0 %v1392
        %v1469 = vpop.f32.mrf.mxu0
        %v1470 = vadd.f32 0.0, %v1469
        %v1471 = vpop.f32.mrf.mxu0
        %v1472 = vadd.f32 0.0, %v1471
        %1473 = vmatmul.bf16.gmra.mxu0 %v1393
        %v1474 = vpop.f32.mrf.mxu0
        %v1475 = vadd.f32 0.0, %v1474
        %v1476 = vpop.f32.mrf.mxu0
        %v1477 = vadd.f32 0.0, %v1476
        %1478 = vmatmul.bf16.gmra.mxu0 %v1394
        %v1479 = vpop.f32.mrf.mxu0
        %v1480 = vadd.f32 0.0, %v1479
        %v1481 = vpop.f32.mrf.mxu0
        %v1482 = vadd.f32 0.0, %v1481
        %1483 = vmatmul.bf16.gmra.mxu0 %v1395
        %v1484 = vpop.f32.mrf.mxu0
        %v1485 = vadd.f32 0.0, %v1484
        %v1486 = vpop.f32.mrf.mxu0
        %v1487 = vadd.f32 0.0, %v1486
        %1488 = vdwg.mxu0
        %v1489 = vadd.f32 %v1325, %v1460
        %v1490 = vadd.f32 %v1326, %v1462
        %v1491 = vadd.f32 %v1327, %v1465
        %v1492 = vadd.f32 %v1328, %v1467
        %v1493 = vadd.f32 %v1329, %v1470
        %v1494 = vadd.f32 %v1330, %v1472
        %v1495 = vadd.f32 %v1331, %v1475
        %v1496 = vadd.f32 %v1332, %v1477
        %v1497 = vadd.f32 %v1333, %v1480
        %v1498 = vadd.f32 %v1334, %v1482
        %v1499 = vadd.f32 %v1335, %v1485
        %v1500 = vadd.f32 %v1336, %v1487
        %v1501 = vld [vmem:[%s301 + $0xc] sm:$0xf]
        %v1502 = vld [vmem:[%s301 + $0x10] sm:$0xf]
        %v1503 = vld [vmem:[%s301 + $0x14] sm:$0xf]
        %v1504 = vld [vmem:[%s301 + $0x18] sm:$0xf]
        %v1505 = vld [vmem:[%s301 + $0x1c] sm:$0xf]
        %v1506 = vld [vmem:[%s301 + $0x20] sm:$0xf]
        %v1507 = vld [vmem:[%s301 + $0x24] sm:$0xf]
        %v1508 = vld [vmem:[%s301 + $0x28] sm:$0xf]
        %v1509 = vld [vmem:[%s301 + $0x2c] sm:$0xf]
        %v1510 = vld [vmem:[%s301 + $0x30] sm:$0xf]
        %v1511 = vld [vmem:[%s301 + $0x34] sm:$0xf]
        %v1512 = vld [vmem:[%s301 + $0x38] sm:$0xf]
        %v1513 = vld [vmem:[%s301 + $0x3c] sm:$0x1]
        %s1514 = scalar_lea.vmem [#allocation4], 448
        %v1515 = vld [vmem:[%s1514] sm:$0xf]
        %v1516 = vld [vmem:[%s1514 + $0x4] sm:$0xf]
        %v1517 = vld [vmem:[%s1514 + $0x8] sm:$0xf]
        %v1518 = vld [vmem:[%s1514 + $0xc] sm:$0xf]
        %v1519 = vld [vmem:[%s1514 + $0x10] sm:$0xf]
        %v1520 = vld [vmem:[%s1514 + $0x14] sm:$0xf]
        %v1521 = vld [vmem:[%s1514 + $0x18] sm:$0xf]
        %v1522 = vld [vmem:[%s1514 + $0x1c] sm:$0xf]
        %v1523 = vld [vmem:[%s1514 + $0x20] sm:$0xf]
        %v1524 = vld [vmem:[%s1514 + $0x24] sm:$0xf]
        %v1525 = vld [vmem:[%s1514 + $0x28] sm:$0xf]
        %v1526 = vld [vmem:[%s1514 + $0x2c] sm:$0xf]
        %v1527 = vld [vmem:[%s1514 + $0x30] sm:$0xf]
        %v1528 = vld [vmem:[%s1514 + $0x34] sm:$0xf]
        %v1529 = vld [vmem:[%s1514 + $0x38] sm:$0xf]
        %v1530 = vld [vmem:[%s1514 + $0x3c] sm:$0xf]
        %v1544 = vunpack.c.l.b16 %v1501
        %v1545 = vunpack.c.l.b16 %v1502
        %v1546 = vunpack.c.l.b16 %v1503
        %v1547 = vunpack.c.l.b16 %v1504
        %v1548 = vunpack.c.l.b16 %v1505
        %v1549 = vunpack.c.l.b16 %v1506
        %v1550 = vunpack.c.l.b16 %v1507
        %v1551 = vunpack.c.l.b16 %v1508
        %v1552 = vunpack.c.l.b16 %v1509
        %v1553 = vunpack.c.l.b16 %v1510
        %v1554 = vunpack.c.l.b16 %v1511
        %v1555 = vunpack.c.l.b16 %v1512
        %v1556 = vunpack.c.l.b16 %v1513
        %v1557 = vpack.c.b16 %v1545, %v1544
        %v1558 = vpack.c.b16 %v1547, %v1546
        %v1559 = vpack.c.b16 %v1549, %v1548
        %v1560 = vpack.c.b16 %v1551, %v1550
        %v1561 = vpack.c.b16 %v1553, %v1552
        %v1562 = vpack.c.b16 %v1555, %v1554
        %v1563 = vpack.c.b16 %v1556, %v1556
        %v1565 = vshrl.u32 %v1557, 16
        %v1567 = vshll.u32 %v1557, 16
        %v1569 = vrot.slane %v1567, 1
        %v1570 = vor.u32 %v1565, %v1569
        %v1572 = vshll.u32 %v1558, 16
        %v1574 = vrot.slane %v1572, 1
        %v1575 = vsel %vm528, %v1570, %v1574
        %v1576 = vshrl.u32 %v1558, 16
        %v1578 = vor.u32 %v1576, %v1574
        %v1580 = vshll.u32 %v1559, 16
        %v1582 = vrot.slane %v1580, 1
        %v1583 = vsel %vm528, %v1578, %v1582
        %v1584 = vshrl.u32 %v1559, 16
        %v1586 = vor.u32 %v1584, %v1582
        %v1588 = vshll.u32 %v1560, 16
        %v1590 = vrot.slane %v1588, 1
        %v1591 = vsel %vm528, %v1586, %v1590
        %v1592 = vshrl.u32 %v1560, 16
        %v1594 = vor.u32 %v1592, %v1590
        %v1596 = vshll.u32 %v1561, 16
        %v1598 = vrot.slane %v1596, 1
        %v1599 = vsel %vm528, %v1594, %v1598
        %v1600 = vshrl.u32 %v1561, 16
        %v1602 = vor.u32 %v1600, %v1598
        %v1604 = vshll.u32 %v1562, 16
        %v1606 = vrot.slane %v1604, 1
        %v1607 = vsel %vm528, %v1602, %v1606
        %v1608 = vshrl.u32 %v1562, 16
        %v1610 = vor.u32 %v1608, %v1606
        %v1612 = vshll.u32 %v1563, 16
        %v1614 = vrot.slane %v1612, 1
        %v1615 = vsel %vm528, %v1610, %v1614
        %v1638 = vunpack.c.l.b16 %v1515
        %v1639 = vunpack.c.l.b16 %v1516
        %v1640 = vunpack.c.l.b16 %v1517
        %v1641 = vunpack.c.l.b16 %v1518
        %v1642 = vunpack.c.l.b16 %v1519
        %v1643 = vunpack.c.l.b16 %v1520
        %v1644 = vunpack.c.l.b16 %v1521
        %v1645 = vunpack.c.l.b16 %v1522
        %v1646 = vunpack.c.l.b16 %v1523
        %v1647 = vunpack.c.l.b16 %v1524
        %v1648 = vunpack.c.l.b16 %v1525
        %v1649 = vunpack.c.l.b16 %v1526
        %v1650 = vunpack.c.l.b16 %v1527
        %v1651 = vunpack.c.l.b16 %v1528
        %v1652 = vunpack.c.l.b16 %v1529
        %v1653 = vunpack.c.l.b16 %v1530
        %v1654 = vpack.c.b16 %v1639, %v1638
        %v1655 = vpack.c.b16 %v1641, %v1640
        %v1656 = vpack.c.b16 %v1643, %v1642
        %v1657 = vpack.c.b16 %v1645, %v1644
        %v1658 = vpack.c.b16 %v1647, %v1646
        %v1659 = vpack.c.b16 %v1649, %v1648
        %v1660 = vpack.c.b16 %v1651, %v1650
        %v1661 = vpack.c.b16 %v1653, %v1652
        %1670 = vmatpush.bf16.msra.mxu0 %v1661
        %1671 = vmatpush.bf16.msra.mxu0 %v1660
        %1672 = vmatpush.bf16.msra.mxu0 %v1659
        %1673 = vmatpush.bf16.msra.mxu0 %v1658
        %1674 = vmatpush.bf16.msra.mxu0 %v1657
        %1675 = vmatpush.bf16.msra.mxu0 %v1656
        %1676 = vmatpush.bf16.msra.mxu0 %v1655
        %1677 = vmatpush.bf16.msra.mxu0 %v1654
        %1678 = vmatmul.bf16.gmra.mxu0 %v1575
        %v1679 = vpop.f32.mrf.mxu0
        %v1680 = vadd.f32 0.0, %v1679
        %v1681 = vpop.f32.mrf.mxu0
        %v1682 = vadd.f32 0.0, %v1681
        %1683 = vmatmul.bf16.gmra.mxu0 %v1583
        %v1684 = vpop.f32.mrf.mxu0
        %v1685 = vadd.f32 0.0, %v1684
        %v1686 = vpop.f32.mrf.mxu0
        %v1687 = vadd.f32 0.0, %v1686
        %1688 = vmatmul.bf16.gmra.mxu0 %v1591
        %v1689 = vpop.f32.mrf.mxu0
        %v1690 = vadd.f32 0.0, %v1689
        %v1691 = vpop.f32.mrf.mxu0
        %v1692 = vadd.f32 0.0, %v1691
        %1693 = vmatmul.bf16.gmra.mxu0 %v1599
        %v1694 = vpop.f32.mrf.mxu0
        %v1695 = vadd.f32 0.0, %v1694
        %v1696 = vpop.f32.mrf.mxu0
        %v1697 = vadd.f32 0.0, %v1696
        %1698 = vmatmul.bf16.gmra.mxu0 %v1607
        %v1699 = vpop.f32.mrf.mxu0
        %v1700 = vadd.f32 0.0, %v1699
        %v1701 = vpop.f32.mrf.mxu0
        %v1702 = vadd.f32 0.0, %v1701
        %1703 = vmatmul.bf16.gmra.mxu0 %v1615
        %v1704 = vpop.f32.mrf.mxu0
        %v1705 = vadd.f32 0.0, %v1704
        %v1706 = vpop.f32.mrf.mxu0
        %v1707 = vadd.f32 0.0, %v1706
        %1708 = vdwg.mxu0
        %v1709 = vadd.f32 %v1489, %v1680
        %v1710 = vadd.f32 %v1490, %v1682
        %v1711 = vadd.f32 %v1491, %v1685
        %v1712 = vadd.f32 %v1492, %v1687
        %v1713 = vadd.f32 %v1493, %v1690
        %v1714 = vadd.f32 %v1494, %v1692
        %v1715 = vadd.f32 %v1495, %v1695
        %v1716 = vadd.f32 %v1496, %v1697
        %v1717 = vadd.f32 %v1497, %v1700
        %v1718 = vadd.f32 %v1498, %v1702
        %v1719 = vadd.f32 %v1499, %v1705
        %v1720 = vadd.f32 %v1500, %v1707
        %v1721 = vld [vmem:[%s301 + $0xc] sm:$0xe]
        %s1722 = scalar_lea.vmem [#allocation4], 512
        %v1723 = vld [vmem:[%s1722] sm:$0xf]
        %v1724 = vld [vmem:[%s1722 + $0x4] sm:$0xf]
        %v1725 = vld [vmem:[%s1722 + $0x8] sm:$0xf]
        %v1726 = vld [vmem:[%s1722 + $0xc] sm:$0xf]
        %v1727 = vld [vmem:[%s1722 + $0x10] sm:$0xf]
        %v1728 = vld [vmem:[%s1722 + $0x14] sm:$0xf]
        %v1729 = vld [vmem:[%s1722 + $0x18] sm:$0xf]
        %v1730 = vld [vmem:[%s1722 + $0x1c] sm:$0xf]
        %v1731 = vld [vmem:[%s1722 + $0x20] sm:$0xf]
        %v1732 = vld [vmem:[%s1722 + $0x24] sm:$0xf]
        %v1733 = vld [vmem:[%s1722 + $0x28] sm:$0xf]
        %v1734 = vld [vmem:[%s1722 + $0x2c] sm:$0xf]
        %v1735 = vld [vmem:[%s1722 + $0x30] sm:$0xf]
        %v1736 = vld [vmem:[%s1722 + $0x34] sm:$0xf]
        %v1737 = vld [vmem:[%s1722 + $0x38] sm:$0xf]
        %v1738 = vld [vmem:[%s1722 + $0x3c] sm:$0xf]
        %v1740 = vunpack.c.l.b16 %v1721
        %v1741 = vpack.c.b16 %v1545, %v1740
        %v1742 = vrot.slane %v1741, 1
        %v1743 = vrot.slane %v1558, 1
        %v1744 = vsel %vm707, %v1742, %v1743
        %v1745 = vrot.slane %v1559, 1
        %v1746 = vsel %vm707, %v1743, %v1745
        %v1747 = vrot.slane %v1560, 1
        %v1748 = vsel %vm707, %v1745, %v1747
        %v1749 = vrot.slane %v1561, 1
        %v1750 = vsel %vm707, %v1747, %v1749
        %v1751 = vrot.slane %v1562, 1
        %v1752 = vsel %vm707, %v1749, %v1751
        %v1753 = vrot.slane %v1563, 1
        %v1754 = vsel %vm707, %v1751, %v1753
        %v1777 = vunpack.c.l.b16 %v1723
        %v1778 = vunpack.c.l.b16 %v1724
        %v1779 = vunpack.c.l.b16 %v1725
        %v1780 = vunpack.c.l.b16 %v1726
        %v1781 = vunpack.c.l.b16 %v1727
        %v1782 = vunpack.c.l.b16 %v1728
        %v1783 = vunpack.c.l.b16 %v1729
        %v1784 = vunpack.c.l.b16 %v1730
        %v1785 = vunpack.c.l.b16 %v1731
        %v1786 = vunpack.c.l.b16 %v1732
        %v1787 = vunpack.c.l.b16 %v1733
        %v1788 = vunpack.c.l.b16 %v1734
        %v1789 = vunpack.c.l.b16 %v1735
        %v1790 = vunpack.c.l.b16 %v1736
        %v1791 = vunpack.c.l.b16 %v1737
        %v1792 = vunpack.c.l.b16 %v1738
        %v1793 = vpack.c.b16 %v1778, %v1777
        %v1794 = vpack.c.b16 %v1780, %v1779
        %v1795 = vpack.c.b16 %v1782, %v1781
        %v1796 = vpack.c.b16 %v1784, %v1783
        %v1797 = vpack.c.b16 %v1786, %v1785
        %v1798 = vpack.c.b16 %v1788, %v1787
        %v1799 = vpack.c.b16 %v1790, %v1789
        %v1800 = vpack.c.b16 %v1792, %v1791
        %1809 = vmatpush.bf16.msra.mxu0 %v1800
        %1810 = vmatpush.bf16.msra.mxu0 %v1799
        %1811 = vmatpush.bf16.msra.mxu0 %v1798
        %1812 = vmatpush.bf16.msra.mxu0 %v1797
        %1813 = vmatpush.bf16.msra.mxu0 %v1796
        %1814 = vmatpush.bf16.msra.mxu0 %v1795
        %1815 = vmatpush.bf16.msra.mxu0 %v1794
        %1816 = vmatpush.bf16.msra.mxu0 %v1793
        %1817 = vmatmul.bf16.gmra.mxu0 %v1744
        %v1818 = vpop.f32.mrf.mxu0
        %v1819 = vadd.f32 0.0, %v1818
        %v1820 = vpop.f32.mrf.mxu0
        %v1821 = vadd.f32 0.0, %v1820
        %1822 = vmatmul.bf16.gmra.mxu0 %v1746
        %v1823 = vpop.f32.mrf.mxu0
        %v1824 = vadd.f32 0.0, %v1823
        %v1825 = vpop.f32.mrf.mxu0
        %v1826 = vadd.f32 0.0, %v1825
        %1827 = vmatmul.bf16.gmra.mxu0 %v1748
        %v1828 = vpop.f32.mrf.mxu0
        %v1829 = vadd.f32 0.0, %v1828
        %v1830 = vpop.f32.mrf.mxu0
        %v1831 = vadd.f32 0.0, %v1830
        %1832 = vmatmul.bf16.gmra.mxu0 %v1750
        %v1833 = vpop.f32.mrf.mxu0
        %v1834 = vadd.f32 0.0, %v1833
        %v1835 = vpop.f32.mrf.mxu0
        %v1836 = vadd.f32 0.0, %v1835
        %1837 = vmatmul.bf16.gmra.mxu0 %v1752
        %v1838 = vpop.f32.mrf.mxu0
        %v1839 = vadd.f32 0.0, %v1838
        %v1840 = vpop.f32.mrf.mxu0
        %v1841 = vadd.f32 0.0, %v1840
        %1842 = vmatmul.bf16.gmra.mxu0 %v1754
        %v1843 = vpop.f32.mrf.mxu0
        %v1844 = vadd.f32 0.0, %v1843
        %v1845 = vpop.f32.mrf.mxu0
        %v1846 = vadd.f32 0.0, %v1845
        %1847 = vdwg.mxu0
        %v1848 = vadd.f32 %v1709, %v1819
        %v1849 = vadd.f32 %v1710, %v1821
        %v1850 = vadd.f32 %v1711, %v1824
        %v1851 = vadd.f32 %v1712, %v1826
        %v1852 = vadd.f32 %v1713, %v1829
        %v1853 = vadd.f32 %v1714, %v1831
        %v1854 = vadd.f32 %v1715, %v1834
        %v1855 = vadd.f32 %v1716, %v1836
        %v1856 = vadd.f32 %v1717, %v1839
        %v1857 = vadd.f32 %v1718, %v1841
        %v1858 = vadd.f32 %v1719, %v1844
        %v1859 = vadd.f32 %v1720, %v1846
        %s1860 = sadd.s32 %s25, 1
        %s1861 = sand.u32 %s1860, 3
        %s1862 = smul.u32 %s1861, 16
        %s1863 = smul.addr %s1862, 4
        %s1864 = scalar_lea.vmem [#allocation2], %s1863
        %v1865 = vld [vmem:[%s1864] sm:$0xf]
        %v1866 = vld [vmem:[%s1864 + $0x4] sm:$0xf]
        %v1867 = vld [vmem:[%s1864 + $0x8] sm:$0xf]
        %v1868 = vld [vmem:[%s1864 + $0xc] sm:$0xf]
        %v1869 = vld [vmem:[%s1864 + $0x10] sm:$0xf]
        %v1870 = vld [vmem:[%s1864 + $0x14] sm:$0xf]
        %v1871 = vld [vmem:[%s1864 + $0x18] sm:$0xf]
        %v1872 = vld [vmem:[%s1864 + $0x1c] sm:$0xf]
        %v1873 = vld [vmem:[%s1864 + $0x20] sm:$0xf]
        %v1874 = vld [vmem:[%s1864 + $0x24] sm:$0xf]
        %v1875 = vld [vmem:[%s1864 + $0x28] sm:$0xf]
        %v1876 = vld [vmem:[%s1864 + $0x2c] sm:$0xf]
        %s1877 = scalar_lea.vmem [#allocation4], 576
        %v1878 = vld [vmem:[%s1877] sm:$0xf]
        %v1879 = vld [vmem:[%s1877 + $0x4] sm:$0xf]
        %v1880 = vld [vmem:[%s1877 + $0x8] sm:$0xf]
        %v1881 = vld [vmem:[%s1877 + $0xc] sm:$0xf]
        %v1882 = vld [vmem:[%s1877 + $0x10] sm:$0xf]
        %v1883 = vld [vmem:[%s1877 + $0x14] sm:$0xf]
        %v1884 = vld [vmem:[%s1877 + $0x18] sm:$0xf]
        %v1885 = vld [vmem:[%s1877 + $0x1c] sm:$0xf]
        %v1886 = vld [vmem:[%s1877 + $0x20] sm:$0xf]
        %v1887 = vld [vmem:[%s1877 + $0x24] sm:$0xf]
        %v1888 = vld [vmem:[%s1877 + $0x28] sm:$0xf]
        %v1889 = vld [vmem:[%s1877 + $0x2c] sm:$0xf]
        %v1890 = vld [vmem:[%s1877 + $0x30] sm:$0xf]
        %v1891 = vld [vmem:[%s1877 + $0x34] sm:$0xf]
        %v1892 = vld [vmem:[%s1877 + $0x38] sm:$0xf]
        %v1893 = vld [vmem:[%s1877 + $0x3c] sm:$0xf]
        %v1906 = vunpack.c.l.b16 %v1865
        %v1907 = vunpack.c.l.b16 %v1866
        %v1908 = vunpack.c.l.b16 %v1867
        %v1909 = vunpack.c.l.b16 %v1868
        %v1910 = vunpack.c.l.b16 %v1869
        %v1911 = vunpack.c.l.b16 %v1870
        %v1912 = vunpack.c.l.b16 %v1871
        %v1913 = vunpack.c.l.b16 %v1872
        %v1914 = vunpack.c.l.b16 %v1873
        %v1915 = vunpack.c.l.b16 %v1874
        %v1916 = vunpack.c.l.b16 %v1875
        %v1917 = vunpack.c.l.b16 %v1876
        %v1918 = vpack.c.b16 %v1907, %v1906
        %v1919 = vpack.c.b16 %v1909, %v1908
        %v1920 = vpack.c.b16 %v1911, %v1910
        %v1921 = vpack.c.b16 %v1913, %v1912
        %v1922 = vpack.c.b16 %v1915, %v1914
        %v1923 = vpack.c.b16 %v1917, %v1916
        %v1946 = vunpack.c.l.b16 %v1878
        %v1947 = vunpack.c.l.b16 %v1879
        %v1948 = vunpack.c.l.b16 %v1880
        %v1949 = vunpack.c.l.b16 %v1881
        %v1950 = vunpack.c.l.b16 %v1882
        %v1951 = vunpack.c.l.b16 %v1883
        %v1952 = vunpack.c.l.b16 %v1884
        %v1953 = vunpack.c.l.b16 %v1885
        %v1954 = vunpack.c.l.b16 %v1886
        %v1955 = vunpack.c.l.b16 %v1887
        %v1956 = vunpack.c.l.b16 %v1888
        %v1957 = vunpack.c.l.b16 %v1889
        %v1958 = vunpack.c.l.b16 %v1890
        %v1959 = vunpack.c.l.b16 %v1891
        %v1960 = vunpack.c.l.b16 %v1892
        %v1961 = vunpack.c.l.b16 %v1893
        %v1962 = vpack.c.b16 %v1947, %v1946
        %v1963 = vpack.c.b16 %v1949, %v1948
        %v1964 = vpack.c.b16 %v1951, %v1950
        %v1965 = vpack.c.b16 %v1953, %v1952
        %v1966 = vpack.c.b16 %v1955, %v1954
        %v1967 = vpack.c.b16 %v1957, %v1956
        %v1968 = vpack.c.b16 %v1959, %v1958
        %v1969 = vpack.c.b16 %v1961, %v1960
        %1978 = vmatpush.bf16.msra.mxu0 %v1969
        %1979 = vmatpush.bf16.msra.mxu0 %v1968
        %1980 = vmatpush.bf16.msra.mxu0 %v1967
        %1981 = vmatpush.bf16.msra.mxu0 %v1966
        %1982 = vmatpush.bf16.msra.mxu0 %v1965
        %1983 = vmatpush.bf16.msra.mxu0 %v1964
        %1984 = vmatpush.bf16.msra.mxu0 %v1963
        %1985 = vmatpush.bf16.msra.mxu0 %v1962
        %1986 = vmatmul.bf16.gmra.mxu0 %v1918
        %v1987 = vpop.f32.mrf.mxu0
        %v1988 = vadd.f32 0.0, %v1987
        %v1989 = vpop.f32.mrf.mxu0
        %v1990 = vadd.f32 0.0, %v1989
        %1991 = vmatmul.bf16.gmra.mxu0 %v1919
        %v1992 = vpop.f32.mrf.mxu0
        %v1993 = vadd.f32 0.0, %v1992
        %v1994 = vpop.f32.mrf.mxu0
        %v1995 = vadd.f32 0.0, %v1994
        %1996 = vmatmul.bf16.gmra.mxu0 %v1920
        %v1997 = vpop.f32.mrf.mxu0
        %v1998 = vadd.f32 0.0, %v1997
        %v1999 = vpop.f32.mrf.mxu0
        %v2000 = vadd.f32 0.0, %v1999
        %2001 = vmatmul.bf16.gmra.mxu0 %v1921
        %v2002 = vpop.f32.mrf.mxu0
        %v2003 = vadd.f32 0.0, %v2002
        %v2004 = vpop.f32.mrf.mxu0
        %v2005 = vadd.f32 0.0, %v2004
        %2006 = vmatmul.bf16.gmra.mxu0 %v1922
        %v2007 = vpop.f32.mrf.mxu0
        %v2008 = vadd.f32 0.0, %v2007
        %v2009 = vpop.f32.mrf.mxu0
        %v2010 = vadd.f32 0.0, %v2009
        %2011 = vmatmul.bf16.gmra.mxu0 %v1923
        %v2012 = vpop.f32.mrf.mxu0
        %v2013 = vadd.f32 0.0, %v2012
        %v2014 = vpop.f32.mrf.mxu0
        %v2015 = vadd.f32 0.0, %v2014
        %2016 = vdwg.mxu0
        %v2017 = vadd.f32 %v1848, %v1988
        %v2018 = vadd.f32 %v1849, %v1990
        %v2019 = vadd.f32 %v1850, %v1993
        %v2020 = vadd.f32 %v1851, %v1995
        %v2021 = vadd.f32 %v1852, %v1998
        %v2022 = vadd.f32 %v1853, %v2000
        %v2023 = vadd.f32 %v1854, %v2003
        %v2024 = vadd.f32 %v1855, %v2005
        %v2025 = vadd.f32 %v1856, %v2008
        %v2026 = vadd.f32 %v1857, %v2010
        %v2027 = vadd.f32 %v1858, %v2013
        %v2028 = vadd.f32 %v1859, %v2015
        %v2029 = vld [vmem:[%s1864] sm:$0xf]
        %v2030 = vld [vmem:[%s1864 + $0x4] sm:$0xf]
        %v2031 = vld [vmem:[%s1864 + $0x8] sm:$0xf]
        %v2032 = vld [vmem:[%s1864 + $0xc] sm:$0xf]
        %v2033 = vld [vmem:[%s1864 + $0x10] sm:$0xf]
        %v2034 = vld [vmem:[%s1864 + $0x14] sm:$0xf]
        %v2035 = vld [vmem:[%s1864 + $0x18] sm:$0xf]
        %v2036 = vld [vmem:[%s1864 + $0x1c] sm:$0xf]
        %v2037 = vld [vmem:[%s1864 + $0x20] sm:$0xf]
        %v2038 = vld [vmem:[%s1864 + $0x24] sm:$0xf]
        %v2039 = vld [vmem:[%s1864 + $0x28] sm:$0xf]
        %v2040 = vld [vmem:[%s1864 + $0x2c] sm:$0xf]
        %v2041 = vld [vmem:[%s1864 + $0x30] sm:$0x1]
        %s2042 = scalar_lea.vmem [#allocation4], 640
        %v2043 = vld [vmem:[%s2042] sm:$0xf]
        %v2044 = vld [vmem:[%s2042 + $0x4] sm:$0xf]
        %v2045 = vld [vmem:[%s2042 + $0x8] sm:$0xf]
        %v2046 = vld [vmem:[%s2042 + $0xc] sm:$0xf]
        %v2047 = vld [vmem:[%s2042 + $0x10] sm:$0xf]
        %v2048 = vld [vmem:[%s2042 + $0x14] sm:$0xf]
        %v2049 = vld [vmem:[%s2042 + $0x18] sm:$0xf]
        %v2050 = vld [vmem:[%s2042 + $0x1c] sm:$0xf]
        %v2051 = vld [vmem:[%s2042 + $0x20] sm:$0xf]
        %v2052 = vld [vmem:[%s2042 + $0x24] sm:$0xf]
        %v2053 = vld [vmem:[%s2042 + $0x28] sm:$0xf]
        %v2054 = vld [vmem:[%s2042 + $0x2c] sm:$0xf]
        %v2055 = vld [vmem:[%s2042 + $0x30] sm:$0xf]
        %v2056 = vld [vmem:[%s2042 + $0x34] sm:$0xf]
        %v2057 = vld [vmem:[%s2042 + $0x38] sm:$0xf]
        %v2058 = vld [vmem:[%s2042 + $0x3c] sm:$0xf]
        %v2072 = vunpack.c.l.b16 %v2029
        %v2073 = vunpack.c.l.b16 %v2030
        %v2074 = vunpack.c.l.b16 %v2031
        %v2075 = vunpack.c.l.b16 %v2032
        %v2076 = vunpack.c.l.b16 %v2033
        %v2077 = vunpack.c.l.b16 %v2034
        %v2078 = vunpack.c.l.b16 %v2035
        %v2079 = vunpack.c.l.b16 %v2036
        %v2080 = vunpack.c.l.b16 %v2037
        %v2081 = vunpack.c.l.b16 %v2038
        %v2082 = vunpack.c.l.b16 %v2039
        %v2083 = vunpack.c.l.b16 %v2040
        %v2084 = vunpack.c.l.b16 %v2041
        %v2085 = vpack.c.b16 %v2073, %v2072
        %v2086 = vpack.c.b16 %v2075, %v2074
        %v2087 = vpack.c.b16 %v2077, %v2076
        %v2088 = vpack.c.b16 %v2079, %v2078
        %v2089 = vpack.c.b16 %v2081, %v2080
        %v2090 = vpack.c.b16 %v2083, %v2082
        %v2091 = vpack.c.b16 %v2084, %v2084
        %v2093 = vshrl.u32 %v2085, 16
        %v2095 = vshll.u32 %v2085, 16
        %v2097 = vrot.slane %v2095, 1
        %v2098 = vor.u32 %v2093, %v2097
        %v2100 = vshll.u32 %v2086, 16
        %v2102 = vrot.slane %v2100, 1
        %v2103 = vsel %vm528, %v2098, %v2102
        %v2104 = vshrl.u32 %v2086, 16
        %v2106 = vor.u32 %v2104, %v2102
        %v2108 = vshll.u32 %v2087, 16
        %v2110 = vrot.slane %v2108, 1
        %v2111 = vsel %vm528, %v2106, %v2110
        %v2112 = vshrl.u32 %v2087, 16
        %v2114 = vor.u32 %v2112, %v2110
        %v2116 = vshll.u32 %v2088, 16
        %v2118 = vrot.slane %v2116, 1
        %v2119 = vsel %vm528, %v2114, %v2118
        %v2120 = vshrl.u32 %v2088, 16
        %v2122 = vor.u32 %v2120, %v2118
        %v2124 = vshll.u32 %v2089, 16
        %v2126 = vrot.slane %v2124, 1
        %v2127 = vsel %vm528, %v2122, %v2126
        %v2128 = vshrl.u32 %v2089, 16
        %v2130 = vor.u32 %v2128, %v2126
        %v2132 = vshll.u32 %v2090, 16
        %v2134 = vrot.slane %v2132, 1
        %v2135 = vsel %vm528, %v2130, %v2134
        %v2136 = vshrl.u32 %v2090, 16
        %v2138 = vor.u32 %v2136, %v2134
        %v2140 = vshll.u32 %v2091, 16
        %v2142 = vrot.slane %v2140, 1
        %v2143 = vsel %vm528, %v2138, %v2142
        %v2166 = vunpack.c.l.b16 %v2043
        %v2167 = vunpack.c.l.b16 %v2044
        %v2168 = vunpack.c.l.b16 %v2045
        %v2169 = vunpack.c.l.b16 %v2046
        %v2170 = vunpack.c.l.b16 %v2047
        %v2171 = vunpack.c.l.b16 %v2048
        %v2172 = vunpack.c.l.b16 %v2049
        %v2173 = vunpack.c.l.b16 %v2050
        %v2174 = vunpack.c.l.b16 %v2051
        %v2175 = vunpack.c.l.b16 %v2052
        %v2176 = vunpack.c.l.b16 %v2053
        %v2177 = vunpack.c.l.b16 %v2054
        %v2178 = vunpack.c.l.b16 %v2055
        %v2179 = vunpack.c.l.b16 %v2056
        %v2180 = vunpack.c.l.b16 %v2057
        %v2181 = vunpack.c.l.b16 %v2058
        %v2182 = vpack.c.b16 %v2167, %v2166
        %v2183 = vpack.c.b16 %v2169, %v2168
        %v2184 = vpack.c.b16 %v2171, %v2170
        %v2185 = vpack.c.b16 %v2173, %v2172
        %v2186 = vpack.c.b16 %v2175, %v2174
        %v2187 = vpack.c.b16 %v2177, %v2176
        %v2188 = vpack.c.b16 %v2179, %v2178
        %v2189 = vpack.c.b16 %v2181, %v2180
        %2198 = vmatpush.bf16.msra.mxu0 %v2189
        %2199 = vmatpush.bf16.msra.mxu0 %v2188
        %2200 = vmatpush.bf16.msra.mxu0 %v2187
        %2201 = vmatpush.bf16.msra.mxu0 %v2186
        %2202 = vmatpush.bf16.msra.mxu0 %v2185
        %2203 = vmatpush.bf16.msra.mxu0 %v2184
        %2204 = vmatpush.bf16.msra.mxu0 %v2183
        %2205 = vmatpush.bf16.msra.mxu0 %v2182
        %2206 = vmatmul.bf16.gmra.mxu0 %v2103
        %v2207 = vpop.f32.mrf.mxu0
        %v2208 = vadd.f32 0.0, %v2207
        %v2209 = vpop.f32.mrf.mxu0
        %v2210 = vadd.f32 0.0, %v2209
        %2211 = vmatmul.bf16.gmra.mxu0 %v2111
        %v2212 = vpop.f32.mrf.mxu0
        %v2213 = vadd.f32 0.0, %v2212
        %v2214 = vpop.f32.mrf.mxu0
        %v2215 = vadd.f32 0.0, %v2214
        %2216 = vmatmul.bf16.gmra.mxu0 %v2119
        %v2217 = vpop.f32.mrf.mxu0
        %v2218 = vadd.f32 0.0, %v2217
        %v2219 = vpop.f32.mrf.mxu0
        %v2220 = vadd.f32 0.0, %v2219
        %2221 = vmatmul.bf16.gmra.mxu0 %v2127
        %v2222 = vpop.f32.mrf.mxu0
        %v2223 = vadd.f32 0.0, %v2222
        %v2224 = vpop.f32.mrf.mxu0
        %v2225 = vadd.f32 0.0, %v2224
        %2226 = vmatmul.bf16.gmra.mxu0 %v2135
        %v2227 = vpop.f32.mrf.mxu0
        %v2228 = vadd.f32 0.0, %v2227
        %v2229 = vpop.f32.mrf.mxu0
        %v2230 = vadd.f32 0.0, %v2229
        %2231 = vmatmul.bf16.gmra.mxu0 %v2143
        %v2232 = vpop.f32.mrf.mxu0
        %v2233 = vadd.f32 0.0, %v2232
        %v2234 = vpop.f32.mrf.mxu0
        %v2235 = vadd.f32 0.0, %v2234
        %2236 = vdwg.mxu0
        %v2237 = vadd.f32 %v2017, %v2208
        %v2238 = vadd.f32 %v2018, %v2210
        %v2239 = vadd.f32 %v2019, %v2213
        %v2240 = vadd.f32 %v2020, %v2215
        %v2241 = vadd.f32 %v2021, %v2218
        %v2242 = vadd.f32 %v2022, %v2220
        %v2243 = vadd.f32 %v2023, %v2223
        %v2244 = vadd.f32 %v2024, %v2225
        %v2245 = vadd.f32 %v2025, %v2228
        %v2246 = vadd.f32 %v2026, %v2230
        %v2247 = vadd.f32 %v2027, %v2233
        %v2248 = vadd.f32 %v2028, %v2235
        %v2249 = vld [vmem:[%s1864] sm:$0xe]
        %s2250 = scalar_lea.vmem [#allocation4], 704
        %v2251 = vld [vmem:[%s2250] sm:$0xf]
        %v2252 = vld [vmem:[%s2250 + $0x4] sm:$0xf]
        %v2253 = vld [vmem:[%s2250 + $0x8] sm:$0xf]
        %v2254 = vld [vmem:[%s2250 + $0xc] sm:$0xf]
        %v2255 = vld [vmem:[%s2250 + $0x10] sm:$0xf]
        %v2256 = vld [vmem:[%s2250 + $0x14] sm:$0xf]
        %v2257 = vld [vmem:[%s2250 + $0x18] sm:$0xf]
        %v2258 = vld [vmem:[%s2250 + $0x1c] sm:$0xf]
        %v2259 = vld [vmem:[%s2250 + $0x20] sm:$0xf]
        %v2260 = vld [vmem:[%s2250 + $0x24] sm:$0xf]
        %v2261 = vld [vmem:[%s2250 + $0x28] sm:$0xf]
        %v2262 = vld [vmem:[%s2250 + $0x2c] sm:$0xf]
        %v2263 = vld [vmem:[%s2250 + $0x30] sm:$0xf]
        %v2264 = vld [vmem:[%s2250 + $0x34] sm:$0xf]
        %v2265 = vld [vmem:[%s2250 + $0x38] sm:$0xf]
        %v2266 = vld [vmem:[%s2250 + $0x3c] sm:$0xf]
        %v2268 = vunpack.c.l.b16 %v2249
        %v2269 = vpack.c.b16 %v2073, %v2268
        %v2270 = vrot.slane %v2269, 1
        %v2271 = vrot.slane %v2086, 1
        %v2272 = vsel %vm707, %v2270, %v2271
        %v2273 = vrot.slane %v2087, 1
        %v2274 = vsel %vm707, %v2271, %v2273
        %v2275 = vrot.slane %v2088, 1
        %v2276 = vsel %vm707, %v2273, %v2275
        %v2277 = vrot.slane %v2089, 1
        %v2278 = vsel %vm707, %v2275, %v2277
        %v2279 = vrot.slane %v2090, 1
        %v2280 = vsel %vm707, %v2277, %v2279
        %v2281 = vrot.slane %v2091, 1
        %v2282 = vsel %vm707, %v2279, %v2281
        %v2305 = vunpack.c.l.b16 %v2251
        %v2306 = vunpack.c.l.b16 %v2252
        %v2307 = vunpack.c.l.b16 %v2253
        %v2308 = vunpack.c.l.b16 %v2254
        %v2309 = vunpack.c.l.b16 %v2255
        %v2310 = vunpack.c.l.b16 %v2256
        %v2311 = vunpack.c.l.b16 %v2257
        %v2312 = vunpack.c.l.b16 %v2258
        %v2313 = vunpack.c.l.b16 %v2259
        %v2314 = vunpack.c.l.b16 %v2260
        %v2315 = vunpack.c.l.b16 %v2261
        %v2316 = vunpack.c.l.b16 %v2262
        %v2317 = vunpack.c.l.b16 %v2263
        %v2318 = vunpack.c.l.b16 %v2264
        %v2319 = vunpack.c.l.b16 %v2265
        %v2320 = vunpack.c.l.b16 %v2266
        %v2321 = vpack.c.b16 %v2306, %v2305
        %v2322 = vpack.c.b16 %v2308, %v2307
        %v2323 = vpack.c.b16 %v2310, %v2309
        %v2324 = vpack.c.b16 %v2312, %v2311
        %v2325 = vpack.c.b16 %v2314, %v2313
        %v2326 = vpack.c.b16 %v2316, %v2315
        %v2327 = vpack.c.b16 %v2318, %v2317
        %v2328 = vpack.c.b16 %v2320, %v2319
        %2337 = vmatpush.bf16.msra.mxu0 %v2328
        %2338 = vmatpush.bf16.msra.mxu0 %v2327
        %2339 = vmatpush.bf16.msra.mxu0 %v2326
        %2340 = vmatpush.bf16.msra.mxu0 %v2325
        %2341 = vmatpush.bf16.msra.mxu0 %v2324
        %2342 = vmatpush.bf16.msra.mxu0 %v2323
        %2343 = vmatpush.bf16.msra.mxu0 %v2322
        %2344 = vmatpush.bf16.msra.mxu0 %v2321
        %2345 = vmatmul.bf16.gmra.mxu0 %v2272
        %v2346 = vpop.f32.mrf.mxu0
        %v2347 = vadd.f32 0.0, %v2346
        %v2348 = vpop.f32.mrf.mxu0
        %v2349 = vadd.f32 0.0, %v2348
        %2350 = vmatmul.bf16.gmra.mxu0 %v2274
        %v2351 = vpop.f32.mrf.mxu0
        %v2352 = vadd.f32 0.0, %v2351
        %v2353 = vpop.f32.mrf.mxu0
        %v2354 = vadd.f32 0.0, %v2353
        %2355 = vmatmul.bf16.gmra.mxu0 %v2276
        %v2356 = vpop.f32.mrf.mxu0
        %v2357 = vadd.f32 0.0, %v2356
        %v2358 = vpop.f32.mrf.mxu0
        %v2359 = vadd.f32 0.0, %v2358
        %2360 = vmatmul.bf16.gmra.mxu0 %v2278
        %v2361 = vpop.f32.mrf.mxu0
        %v2362 = vadd.f32 0.0, %v2361
        %v2363 = vpop.f32.mrf.mxu0
        %v2364 = vadd.f32 0.0, %v2363
        %2365 = vmatmul.bf16.gmra.mxu0 %v2280
        %v2366 = vpop.f32.mrf.mxu0
        %v2367 = vadd.f32 0.0, %v2366
        %v2368 = vpop.f32.mrf.mxu0
        %v2369 = vadd.f32 0.0, %v2368
        %2370 = vmatmul.bf16.gmra.mxu0 %v2282
        %v2371 = vpop.f32.mrf.mxu0
        %v2372 = vadd.f32 0.0, %v2371
        %v2373 = vpop.f32.mrf.mxu0
        %v2374 = vadd.f32 0.0, %v2373
        %2375 = vdwg.mxu0
        %v2376 = vadd.f32 %v2237, %v2347
        %v2377 = vadd.f32 %v2238, %v2349
        %v2378 = vadd.f32 %v2239, %v2352
        %v2379 = vadd.f32 %v2240, %v2354
        %v2380 = vadd.f32 %v2241, %v2357
        %v2381 = vadd.f32 %v2242, %v2359
        %v2382 = vadd.f32 %v2243, %v2362
        %v2383 = vadd.f32 %v2244, %v2364
        %v2384 = vadd.f32 %v2245, %v2367
        %v2385 = vadd.f32 %v2246, %v2369
        %v2386 = vadd.f32 %v2247, %v2372
        %v2387 = vadd.f32 %v2248, %v2374
        %v2388 = vld [vmem:[%s1864 + $0x4] sm:$0xc]
        %v2389 = vld [vmem:[%s1864 + $0x8] sm:$0xf]
        %v2390 = vld [vmem:[%s1864 + $0xc] sm:$0xf]
        %v2391 = vld [vmem:[%s1864 + $0x10] sm:$0xf]
        %v2392 = vld [vmem:[%s1864 + $0x14] sm:$0xf]
        %v2393 = vld [vmem:[%s1864 + $0x18] sm:$0xf]
        %v2394 = vld [vmem:[%s1864 + $0x1c] sm:$0xf]
        %v2395 = vld [vmem:[%s1864 + $0x20] sm:$0xf]
        %v2396 = vld [vmem:[%s1864 + $0x24] sm:$0xf]
        %v2397 = vld [vmem:[%s1864 + $0x28] sm:$0xf]
        %v2398 = vld [vmem:[%s1864 + $0x2c] sm:$0xf]
        %v2399 = vld [vmem:[%s1864 + $0x30] sm:$0xf]
        %v2400 = vld [vmem:[%s1864 + $0x34] sm:$0x3]
        %s2401 = scalar_lea.vmem [#allocation4], 768
        %v2402 = vld [vmem:[%s2401] sm:$0xf]
        %v2403 = vld [vmem:[%s2401 + $0x4] sm:$0xf]
        %v2404 = vld [vmem:[%s2401 + $0x8] sm:$0xf]
        %v2405 = vld [vmem:[%s2401 + $0xc] sm:$0xf]
        %v2406 = vld [vmem:[%s2401 + $0x10] sm:$0xf]
        %v2407 = vld [vmem:[%s2401 + $0x14] sm:$0xf]
        %v2408 = vld [vmem:[%s2401 + $0x18] sm:$0xf]
        %v2409 = vld [vmem:[%s2401 + $0x1c] sm:$0xf]
        %v2410 = vld [vmem:[%s2401 + $0x20] sm:$0xf]
        %v2411 = vld [vmem:[%s2401 + $0x24] sm:$0xf]
        %v2412 = vld [vmem:[%s2401 + $0x28] sm:$0xf]
        %v2413 = vld [vmem:[%s2401 + $0x2c] sm:$0xf]
        %v2414 = vld [vmem:[%s2401 + $0x30] sm:$0xf]
        %v2415 = vld [vmem:[%s2401 + $0x34] sm:$0xf]
        %v2416 = vld [vmem:[%s2401 + $0x38] sm:$0xf]
        %v2417 = vld [vmem:[%s2401 + $0x3c] sm:$0xf]
        %v2431 = vunpack.c.l.b16 %v2388
        %v2432 = vunpack.c.l.b16 %v2389
        %v2433 = vunpack.c.l.b16 %v2390
        %v2434 = vunpack.c.l.b16 %v2391
        %v2435 = vunpack.c.l.b16 %v2392
        %v2436 = vunpack.c.l.b16 %v2393
        %v2437 = vunpack.c.l.b16 %v2394
        %v2438 = vunpack.c.l.b16 %v2395
        %v2439 = vunpack.c.l.b16 %v2396
        %v2440 = vunpack.c.l.b16 %v2397
        %v2441 = vunpack.c.l.b16 %v2398
        %v2442 = vunpack.c.l.b16 %v2399
        %v2443 = vunpack.c.l.b16 %v2400
        %v2444 = vpack.c.b16 %v2432, %v2431
        %v2445 = vpack.c.b16 %v2434, %v2433
        %v2446 = vpack.c.b16 %v2436, %v2435
        %v2447 = vpack.c.b16 %v2438, %v2437
        %v2448 = vpack.c.b16 %v2440, %v2439
        %v2449 = vpack.c.b16 %v2442, %v2441
        %v2450 = vpack.c.b16 %v2443, %v2443
        %v2451 = vrot.slane %v2444, 2
        %v2452 = vrot.slane %v2445, 2
        %v2453 = vsel %vm889, %v2451, %v2452
        %v2454 = vrot.slane %v2446, 2
        %v2455 = vsel %vm889, %v2452, %v2454
        %v2456 = vrot.slane %v2447, 2
        %v2457 = vsel %vm889, %v2454, %v2456
        %v2458 = vrot.slane %v2448, 2
        %v2459 = vsel %vm889, %v2456, %v2458
        %v2460 = vrot.slane %v2449, 2
        %v2461 = vsel %vm889, %v2458, %v2460
        %v2462 = vrot.slane %v2450, 2
        %v2463 = vsel %vm889, %v2460, %v2462
        %v2486 = vunpack.c.l.b16 %v2402
        %v2487 = vunpack.c.l.b16 %v2403
        %v2488 = vunpack.c.l.b16 %v2404
        %v2489 = vunpack.c.l.b16 %v2405
        %v2490 = vunpack.c.l.b16 %v2406
        %v2491 = vunpack.c.l.b16 %v2407
        %v2492 = vunpack.c.l.b16 %v2408
        %v2493 = vunpack.c.l.b16 %v2409
        %v2494 = vunpack.c.l.b16 %v2410
        %v2495 = vunpack.c.l.b16 %v2411
        %v2496 = vunpack.c.l.b16 %v2412
        %v2497 = vunpack.c.l.b16 %v2413
        %v2498 = vunpack.c.l.b16 %v2414
        %v2499 = vunpack.c.l.b16 %v2415
        %v2500 = vunpack.c.l.b16 %v2416
        %v2501 = vunpack.c.l.b16 %v2417
        %v2502 = vpack.c.b16 %v2487, %v2486
        %v2503 = vpack.c.b16 %v2489, %v2488
        %v2504 = vpack.c.b16 %v2491, %v2490
        %v2505 = vpack.c.b16 %v2493, %v2492
        %v2506 = vpack.c.b16 %v2495, %v2494
        %v2507 = vpack.c.b16 %v2497, %v2496
        %v2508 = vpack.c.b16 %v2499, %v2498
        %v2509 = vpack.c.b16 %v2501, %v2500
        %2518 = vmatpush.bf16.msra.mxu0 %v2509
        %2519 = vmatpush.bf16.msra.mxu0 %v2508
        %2520 = vmatpush.bf16.msra.mxu0 %v2507
        %2521 = vmatpush.bf16.msra.mxu0 %v2506
        %2522 = vmatpush.bf16.msra.mxu0 %v2505
        %2523 = vmatpush.bf16.msra.mxu0 %v2504
        %2524 = vmatpush.bf16.msra.mxu0 %v2503
        %2525 = vmatpush.bf16.msra.mxu0 %v2502
        %2526 = vmatmul.bf16.gmra.mxu0 %v2453
        %v2527 = vpop.f32.mrf.mxu0
        %v2528 = vadd.f32 0.0, %v2527
        %v2529 = vpop.f32.mrf.mxu0
        %v2530 = vadd.f32 0.0, %v2529
        %2531 = vmatmul.bf16.gmra.mxu0 %v2455
        %v2532 = vpop.f32.mrf.mxu0
        %v2533 = vadd.f32 0.0, %v2532
        %v2534 = vpop.f32.mrf.mxu0
        %v2535 = vadd.f32 0.0, %v2534
        %2536 = vmatmul.bf16.gmra.mxu0 %v2457
        %v2537 = vpop.f32.mrf.mxu0
        %v2538 = vadd.f32 0.0, %v2537
        %v2539 = vpop.f32.mrf.mxu0
        %v2540 = vadd.f32 0.0, %v2539
        %2541 = vmatmul.bf16.gmra.mxu0 %v2459
        %v2542 = vpop.f32.mrf.mxu0
        %v2543 = vadd.f32 0.0, %v2542
        %v2544 = vpop.f32.mrf.mxu0
        %v2545 = vadd.f32 0.0, %v2544
        %2546 = vmatmul.bf16.gmra.mxu0 %v2461
        %v2547 = vpop.f32.mrf.mxu0
        %v2548 = vadd.f32 0.0, %v2547
        %v2549 = vpop.f32.mrf.mxu0
        %v2550 = vadd.f32 0.0, %v2549
        %2551 = vmatmul.bf16.gmra.mxu0 %v2463
        %v2552 = vpop.f32.mrf.mxu0
        %v2553 = vadd.f32 0.0, %v2552
        %v2554 = vpop.f32.mrf.mxu0
        %v2555 = vadd.f32 0.0, %v2554
        %2556 = vdwg.mxu0
        %v2557 = vadd.f32 %v2376, %v2528
        %v2558 = vadd.f32 %v2377, %v2530
        %v2559 = vadd.f32 %v2378, %v2533
        %v2560 = vadd.f32 %v2379, %v2535
        %v2561 = vadd.f32 %v2380, %v2538
        %v2562 = vadd.f32 %v2381, %v2540
        %v2563 = vadd.f32 %v2382, %v2543
        %v2564 = vadd.f32 %v2383, %v2545
        %v2565 = vadd.f32 %v2384, %v2548
        %v2566 = vadd.f32 %v2385, %v2550
        %v2567 = vadd.f32 %v2386, %v2553
        %v2568 = vadd.f32 %v2387, %v2555
        %v2569 = vld [vmem:[%s1864 + $0x34] sm:$0x7]
        %s2570 = scalar_lea.vmem [#allocation4], 832
        %v2571 = vld [vmem:[%s2570] sm:$0xf]
        %v2572 = vld [vmem:[%s2570 + $0x4] sm:$0xf]
        %v2573 = vld [vmem:[%s2570 + $0x8] sm:$0xf]
        %v2574 = vld [vmem:[%s2570 + $0xc] sm:$0xf]
        %v2575 = vld [vmem:[%s2570 + $0x10] sm:$0xf]
        %v2576 = vld [vmem:[%s2570 + $0x14] sm:$0xf]
        %v2577 = vld [vmem:[%s2570 + $0x18] sm:$0xf]
        %v2578 = vld [vmem:[%s2570 + $0x1c] sm:$0xf]
        %v2579 = vld [vmem:[%s2570 + $0x20] sm:$0xf]
        %v2580 = vld [vmem:[%s2570 + $0x24] sm:$0xf]
        %v2581 = vld [vmem:[%s2570 + $0x28] sm:$0xf]
        %v2582 = vld [vmem:[%s2570 + $0x2c] sm:$0xf]
        %v2583 = vld [vmem:[%s2570 + $0x30] sm:$0xf]
        %v2584 = vld [vmem:[%s2570 + $0x34] sm:$0xf]
        %v2585 = vld [vmem:[%s2570 + $0x38] sm:$0xf]
        %v2586 = vld [vmem:[%s2570 + $0x3c] sm:$0xf]
        %v2588 = vunpack.c.l.b16 %v2569
        %v2589 = vpack.c.b16 %v2588, %v2588
        %v2591 = vshrl.u32 %v2444, 16
        %v2593 = vrot.slane %v2591, 2
        %v2594 = vshll.u32 %v2444, 16
        %v2596 = vrot.slane %v2594, 3
        %v2597 = vor.u32 %v2593, %v2596
        %v2599 = vshrl.u32 %v2445, 16
        %v2601 = vrot.slane %v2599, 2
        %v2602 = vshll.u32 %v2445, 16
        %v2604 = vrot.slane %v2602, 3
        %v2605 = vor.u32 %v2601, %v2604
        %v2606 = vsel %vm1029, %v2597, %v2605
        %v2608 = vshrl.u32 %v2446, 16
        %v2610 = vrot.slane %v2608, 2
        %v2611 = vshll.u32 %v2446, 16
        %v2613 = vrot.slane %v2611, 3
        %v2614 = vor.u32 %v2610, %v2613
        %v2615 = vsel %vm1029, %v2605, %v2614
        %v2617 = vshrl.u32 %v2447, 16
        %v2619 = vrot.slane %v2617, 2
        %v2620 = vshll.u32 %v2447, 16
        %v2622 = vrot.slane %v2620, 3
        %v2623 = vor.u32 %v2619, %v2622
        %v2624 = vsel %vm1029, %v2614, %v2623
        %v2626 = vshrl.u32 %v2448, 16
        %v2628 = vrot.slane %v2626, 2
        %v2629 = vshll.u32 %v2448, 16
        %v2631 = vrot.slane %v2629, 3
        %v2632 = vor.u32 %v2628, %v2631
        %v2633 = vsel %vm1029, %v2623, %v2632
        %v2635 = vshrl.u32 %v2449, 16
        %v2637 = vrot.slane %v2635, 2
        %v2638 = vshll.u32 %v2449, 16
        %v2640 = vrot.slane %v2638, 3
        %v2641 = vor.u32 %v2637, %v2640
        %v2642 = vsel %vm1029, %v2632, %v2641
        %v2644 = vshrl.u32 %v2589, 16
        %v2646 = vrot.slane %v2644, 2
        %v2647 = vshll.u32 %v2589, 16
        %v2649 = vrot.slane %v2647, 3
        %v2650 = vor.u32 %v2646, %v2649
        %v2651 = vsel %vm1029, %v2641, %v2650
        %v2674 = vunpack.c.l.b16 %v2571
        %v2675 = vunpack.c.l.b16 %v2572
        %v2676 = vunpack.c.l.b16 %v2573
        %v2677 = vunpack.c.l.b16 %v2574
        %v2678 = vunpack.c.l.b16 %v2575
        %v2679 = vunpack.c.l.b16 %v2576
        %v2680 = vunpack.c.l.b16 %v2577
        %v2681 = vunpack.c.l.b16 %v2578
        %v2682 = vunpack.c.l.b16 %v2579
        %v2683 = vunpack.c.l.b16 %v2580
        %v2684 = vunpack.c.l.b16 %v2581
        %v2685 = vunpack.c.l.b16 %v2582
        %v2686 = vunpack.c.l.b16 %v2583
        %v2687 = vunpack.c.l.b16 %v2584
        %v2688 = vunpack.c.l.b16 %v2585
        %v2689 = vunpack.c.l.b16 %v2586
        %v2690 = vpack.c.b16 %v2675, %v2674
        %v2691 = vpack.c.b16 %v2677, %v2676
        %v2692 = vpack.c.b16 %v2679, %v2678
        %v2693 = vpack.c.b16 %v2681, %v2680
        %v2694 = vpack.c.b16 %v2683, %v2682
        %v2695 = vpack.c.b16 %v2685, %v2684
        %v2696 = vpack.c.b16 %v2687, %v2686
        %v2697 = vpack.c.b16 %v2689, %v2688
        %2706 = vmatpush.bf16.msra.mxu0 %v2697
        %2707 = vmatpush.bf16.msra.mxu0 %v2696
        %2708 = vmatpush.bf16.msra.mxu0 %v2695
        %2709 = vmatpush.bf16.msra.mxu0 %v2694
        %2710 = vmatpush.bf16.msra.mxu0 %v2693
        %2711 = vmatpush.bf16.msra.mxu0 %v2692
        %2712 = vmatpush.bf16.msra.mxu0 %v2691
        %2713 = vmatpush.bf16.msra.mxu0 %v2690
        %2714 = vmatmul.bf16.gmra.mxu0 %v2606
        %v2715 = vpop.f32.mrf.mxu0
        %v2716 = vadd.f32 0.0, %v2715
        %v2717 = vpop.f32.mrf.mxu0
        %v2718 = vadd.f32 0.0, %v2717
        %2719 = vmatmul.bf16.gmra.mxu0 %v2615
        %v2720 = vpop.f32.mrf.mxu0
        %v2721 = vadd.f32 0.0, %v2720
        %v2722 = vpop.f32.mrf.mxu0
        %v2723 = vadd.f32 0.0, %v2722
        %2724 = vmatmul.bf16.gmra.mxu0 %v2624
        %v2725 = vpop.f32.mrf.mxu0
        %v2726 = vadd.f32 0.0, %v2725
        %v2727 = vpop.f32.mrf.mxu0
        %v2728 = vadd.f32 0.0, %v2727
        %2729 = vmatmul.bf16.gmra.mxu0 %v2633
        %v2730 = vpop.f32.mrf.mxu0
        %v2731 = vadd.f32 0.0, %v2730
        %v2732 = vpop.f32.mrf.mxu0
        %v2733 = vadd.f32 0.0, %v2732
        %2734 = vmatmul.bf16.gmra.mxu0 %v2642
        %v2735 = vpop.f32.mrf.mxu0
        %v2736 = vadd.f32 0.0, %v2735
        %v2737 = vpop.f32.mrf.mxu0
        %v2738 = vadd.f32 0.0, %v2737
        %2739 = vmatmul.bf16.gmra.mxu0 %v2651
        %v2740 = vpop.f32.mrf.mxu0
        %v2741 = vadd.f32 0.0, %v2740
        %v2742 = vpop.f32.mrf.mxu0
        %v2743 = vadd.f32 0.0, %v2742
        %2744 = vdwg.mxu0
        %v2745 = vadd.f32 %v2557, %v2716
        %v2746 = vadd.f32 %v2558, %v2718
        %v2747 = vadd.f32 %v2559, %v2721
        %v2748 = vadd.f32 %v2560, %v2723
        %v2749 = vadd.f32 %v2561, %v2726
        %v2750 = vadd.f32 %v2562, %v2728
        %v2751 = vadd.f32 %v2563, %v2731
        %v2752 = vadd.f32 %v2564, %v2733
        %v2753 = vadd.f32 %v2565, %v2736
        %v2754 = vadd.f32 %v2566, %v2738
        %v2755 = vadd.f32 %v2567, %v2741
        %v2756 = vadd.f32 %v2568, %v2743
        %v2757 = vld [vmem:[%s1864 + $0x4] sm:$0x8]
        %s2758 = scalar_lea.vmem [#allocation4], 896
        %v2759 = vld [vmem:[%s2758] sm:$0xf]
        %v2760 = vld [vmem:[%s2758 + $0x4] sm:$0xf]
        %v2761 = vld [vmem:[%s2758 + $0x8] sm:$0xf]
        %v2762 = vld [vmem:[%s2758 + $0xc] sm:$0xf]
        %v2763 = vld [vmem:[%s2758 + $0x10] sm:$0xf]
        %v2764 = vld [vmem:[%s2758 + $0x14] sm:$0xf]
        %v2765 = vld [vmem:[%s2758 + $0x18] sm:$0xf]
        %v2766 = vld [vmem:[%s2758 + $0x1c] sm:$0xf]
        %v2767 = vld [vmem:[%s2758 + $0x20] sm:$0xf]
        %v2768 = vld [vmem:[%s2758 + $0x24] sm:$0xf]
        %v2769 = vld [vmem:[%s2758 + $0x28] sm:$0xf]
        %v2770 = vld [vmem:[%s2758 + $0x2c] sm:$0xf]
        %v2771 = vld [vmem:[%s2758 + $0x30] sm:$0xf]
        %v2772 = vld [vmem:[%s2758 + $0x34] sm:$0xf]
        %v2773 = vld [vmem:[%s2758 + $0x38] sm:$0xf]
        %v2774 = vld [vmem:[%s2758 + $0x3c] sm:$0xf]
        %v2776 = vunpack.c.l.b16 %v2757
        %v2777 = vpack.c.b16 %v2432, %v2776
        %v2778 = vrot.slane %v2777, 3
        %v2779 = vrot.slane %v2445, 3
        %v2780 = vsel %vm1218, %v2778, %v2779
        %v2781 = vrot.slane %v2446, 3
        %v2782 = vsel %vm1218, %v2779, %v2781
        %v2783 = vrot.slane %v2447, 3
        %v2784 = vsel %vm1218, %v2781, %v2783
        %v2785 = vrot.slane %v2448, 3
        %v2786 = vsel %vm1218, %v2783, %v2785
        %v2787 = vrot.slane %v2449, 3
        %v2788 = vsel %vm1218, %v2785, %v2787
        %v2789 = vrot.slane %v2589, 3
        %v2790 = vsel %vm1218, %v2787, %v2789
        %v2813 = vunpack.c.l.b16 %v2759
        %v2814 = vunpack.c.l.b16 %v2760
        %v2815 = vunpack.c.l.b16 %v2761
        %v2816 = vunpack.c.l.b16 %v2762
        %v2817 = vunpack.c.l.b16 %v2763
        %v2818 = vunpack.c.l.b16 %v2764
        %v2819 = vunpack.c.l.b16 %v2765
        %v2820 = vunpack.c.l.b16 %v2766
        %v2821 = vunpack.c.l.b16 %v2767
        %v2822 = vunpack.c.l.b16 %v2768
        %v2823 = vunpack.c.l.b16 %v2769
        %v2824 = vunpack.c.l.b16 %v2770
        %v2825 = vunpack.c.l.b16 %v2771
        %v2826 = vunpack.c.l.b16 %v2772
        %v2827 = vunpack.c.l.b16 %v2773
        %v2828 = vunpack.c.l.b16 %v2774
        %v2829 = vpack.c.b16 %v2814, %v2813
        %v2830 = vpack.c.b16 %v2816, %v2815
        %v2831 = vpack.c.b16 %v2818, %v2817
        %v2832 = vpack.c.b16 %v2820, %v2819
        %v2833 = vpack.c.b16 %v2822, %v2821
        %v2834 = vpack.c.b16 %v2824, %v2823
        %v2835 = vpack.c.b16 %v2826, %v2825
        %v2836 = vpack.c.b16 %v2828, %v2827
        %2845 = vmatpush.bf16.msra.mxu0 %v2836
        %2846 = vmatpush.bf16.msra.mxu0 %v2835
        %2847 = vmatpush.bf16.msra.mxu0 %v2834
        %2848 = vmatpush.bf16.msra.mxu0 %v2833
        %2849 = vmatpush.bf16.msra.mxu0 %v2832
        %2850 = vmatpush.bf16.msra.mxu0 %v2831
        %2851 = vmatpush.bf16.msra.mxu0 %v2830
        %2852 = vmatpush.bf16.msra.mxu0 %v2829
        %2853 = vmatmul.bf16.gmra.mxu0 %v2780
        %v2854 = vpop.f32.mrf.mxu0
        %v2855 = vadd.f32 0.0, %v2854
        %v2856 = vpop.f32.mrf.mxu0
        %v2857 = vadd.f32 0.0, %v2856
        %2858 = vmatmul.bf16.gmra.mxu0 %v2782
        %v2859 = vpop.f32.mrf.mxu0
        %v2860 = vadd.f32 0.0, %v2859
        %v2861 = vpop.f32.mrf.mxu0
        %v2862 = vadd.f32 0.0, %v2861
        %2863 = vmatmul.bf16.gmra.mxu0 %v2784
        %v2864 = vpop.f32.mrf.mxu0
        %v2865 = vadd.f32 0.0, %v2864
        %v2866 = vpop.f32.mrf.mxu0
        %v2867 = vadd.f32 0.0, %v2866
        %2868 = vmatmul.bf16.gmra.mxu0 %v2786
        %v2869 = vpop.f32.mrf.mxu0
        %v2870 = vadd.f32 0.0, %v2869
        %v2871 = vpop.f32.mrf.mxu0
        %v2872 = vadd.f32 0.0, %v2871
        %2873 = vmatmul.bf16.gmra.mxu0 %v2788
        %v2874 = vpop.f32.mrf.mxu0
        %v2875 = vadd.f32 0.0, %v2874
        %v2876 = vpop.f32.mrf.mxu0
        %v2877 = vadd.f32 0.0, %v2876
        %2878 = vmatmul.bf16.gmra.mxu0 %v2790
        %v2879 = vpop.f32.mrf.mxu0
        %v2880 = vadd.f32 0.0, %v2879
        %v2881 = vpop.f32.mrf.mxu0
        %v2882 = vadd.f32 0.0, %v2881
        %2883 = vdwg.mxu0
        %v2884 = vadd.f32 %v2745, %v2855
        %v2885 = vadd.f32 %v2746, %v2857
        %v2886 = vadd.f32 %v2747, %v2860
        %v2887 = vadd.f32 %v2748, %v2862
        %v2888 = vadd.f32 %v2749, %v2865
        %v2889 = vadd.f32 %v2750, %v2867
        %v2890 = vadd.f32 %v2751, %v2870
        %v2891 = vadd.f32 %v2752, %v2872
        %v2892 = vadd.f32 %v2753, %v2875
        %v2893 = vadd.f32 %v2754, %v2877
        %v2894 = vadd.f32 %v2755, %v2880
        %v2895 = vadd.f32 %v2756, %v2882
        %v2896 = vld [vmem:[%s1864 + $0xc] sm:$0xf]
        %v2897 = vld [vmem:[%s1864 + $0x10] sm:$0xf]
        %v2898 = vld [vmem:[%s1864 + $0x14] sm:$0xf]
        %v2899 = vld [vmem:[%s1864 + $0x18] sm:$0xf]
        %v2900 = vld [vmem:[%s1864 + $0x1c] sm:$0xf]
        %v2901 = vld [vmem:[%s1864 + $0x20] sm:$0xf]
        %v2902 = vld [vmem:[%s1864 + $0x24] sm:$0xf]
        %v2903 = vld [vmem:[%s1864 + $0x28] sm:$0xf]
        %v2904 = vld [vmem:[%s1864 + $0x2c] sm:$0xf]
        %v2905 = vld [vmem:[%s1864 + $0x30] sm:$0xf]
        %v2906 = vld [vmem:[%s1864 + $0x34] sm:$0xf]
        %v2907 = vld [vmem:[%s1864 + $0x38] sm:$0xf]
        %s2908 = scalar_lea.vmem [#allocation4], 960
        %v2909 = vld [vmem:[%s2908] sm:$0xf]
        %v2910 = vld [vmem:[%s2908 + $0x4] sm:$0xf]
        %v2911 = vld [vmem:[%s2908 + $0x8] sm:$0xf]
        %v2912 = vld [vmem:[%s2908 + $0xc] sm:$0xf]
        %v2913 = vld [vmem:[%s2908 + $0x10] sm:$0xf]
        %v2914 = vld [vmem:[%s2908 + $0x14] sm:$0xf]
        %v2915 = vld [vmem:[%s2908 + $0x18] sm:$0xf]
        %v2916 = vld [vmem:[%s2908 + $0x1c] sm:$0xf]
        %v2917 = vld [vmem:[%s2908 + $0x20] sm:$0xf]
        %v2918 = vld [vmem:[%s2908 + $0x24] sm:$0xf]
        %v2919 = vld [vmem:[%s2908 + $0x28] sm:$0xf]
        %v2920 = vld [vmem:[%s2908 + $0x2c] sm:$0xf]
        %v2921 = vld [vmem:[%s2908 + $0x30] sm:$0xf]
        %v2922 = vld [vmem:[%s2908 + $0x34] sm:$0xf]
        %v2923 = vld [vmem:[%s2908 + $0x38] sm:$0xf]
        %v2924 = vld [vmem:[%s2908 + $0x3c] sm:$0xf]
        %v2937 = vunpack.c.l.b16 %v2896
        %v2938 = vunpack.c.l.b16 %v2897
        %v2939 = vunpack.c.l.b16 %v2898
        %v2940 = vunpack.c.l.b16 %v2899
        %v2941 = vunpack.c.l.b16 %v2900
        %v2942 = vunpack.c.l.b16 %v2901
        %v2943 = vunpack.c.l.b16 %v2902
        %v2944 = vunpack.c.l.b16 %v2903
        %v2945 = vunpack.c.l.b16 %v2904
        %v2946 = vunpack.c.l.b16 %v2905
        %v2947 = vunpack.c.l.b16 %v2906
        %v2948 = vunpack.c.l.b16 %v2907
        %v2949 = vpack.c.b16 %v2938, %v2937
        %v2950 = vpack.c.b16 %v2940, %v2939
        %v2951 = vpack.c.b16 %v2942, %v2941
        %v2952 = vpack.c.b16 %v2944, %v2943
        %v2953 = vpack.c.b16 %v2946, %v2945
        %v2954 = vpack.c.b16 %v2948, %v2947
        %v2977 = vunpack.c.l.b16 %v2909
        %v2978 = vunpack.c.l.b16 %v2910
        %v2979 = vunpack.c.l.b16 %v2911
        %v2980 = vunpack.c.l.b16 %v2912
        %v2981 = vunpack.c.l.b16 %v2913
        %v2982 = vunpack.c.l.b16 %v2914
        %v2983 = vunpack.c.l.b16 %v2915
        %v2984 = vunpack.c.l.b16 %v2916
        %v2985 = vunpack.c.l.b16 %v2917
        %v2986 = vunpack.c.l.b16 %v2918
        %v2987 = vunpack.c.l.b16 %v2919
        %v2988 = vunpack.c.l.b16 %v2920
        %v2989 = vunpack.c.l.b16 %v2921
        %v2990 = vunpack.c.l.b16 %v2922
        %v2991 = vunpack.c.l.b16 %v2923
        %v2992 = vunpack.c.l.b16 %v2924
        %v2993 = vpack.c.b16 %v2978, %v2977
        %v2994 = vpack.c.b16 %v2980, %v2979
        %v2995 = vpack.c.b16 %v2982, %v2981
        %v2996 = vpack.c.b16 %v2984, %v2983
        %v2997 = vpack.c.b16 %v2986, %v2985
        %v2998 = vpack.c.b16 %v2988, %v2987
        %v2999 = vpack.c.b16 %v2990, %v2989
        %v3000 = vpack.c.b16 %v2992, %v2991
        %3009 = vmatpush.bf16.msra.mxu0 %v3000
        %3010 = vmatpush.bf16.msra.mxu0 %v2999
        %3011 = vmatpush.bf16.msra.mxu0 %v2998
        %3012 = vmatpush.bf16.msra.mxu0 %v2997
        %3013 = vmatpush.bf16.msra.mxu0 %v2996
        %3014 = vmatpush.bf16.msra.mxu0 %v2995
        %3015 = vmatpush.bf16.msra.mxu0 %v2994
        %3016 = vmatpush.bf16.msra.mxu0 %v2993
        %3017 = vmatmul.bf16.gmra.mxu0 %v2949
        %v3018 = vpop.f32.mrf.mxu0
        %v3019 = vadd.f32 0.0, %v3018
        %v3020 = vpop.f32.mrf.mxu0
        %v3021 = vadd.f32 0.0, %v3020
        %3022 = vmatmul.bf16.gmra.mxu0 %v2950
        %v3023 = vpop.f32.mrf.mxu0
        %v3024 = vadd.f32 0.0, %v3023
        %v3025 = vpop.f32.mrf.mxu0
        %v3026 = vadd.f32 0.0, %v3025
        %3027 = vmatmul.bf16.gmra.mxu0 %v2951
        %v3028 = vpop.f32.mrf.mxu0
        %v3029 = vadd.f32 0.0, %v3028
        %v3030 = vpop.f32.mrf.mxu0
        %v3031 = vadd.f32 0.0, %v3030
        %3032 = vmatmul.bf16.gmra.mxu0 %v2952
        %v3033 = vpop.f32.mrf.mxu0
        %v3034 = vadd.f32 0.0, %v3033
        %v3035 = vpop.f32.mrf.mxu0
        %v3036 = vadd.f32 0.0, %v3035
        %3037 = vmatmul.bf16.gmra.mxu0 %v2953
        %v3038 = vpop.f32.mrf.mxu0
        %v3039 = vadd.f32 0.0, %v3038
        %v3040 = vpop.f32.mrf.mxu0
        %v3041 = vadd.f32 0.0, %v3040
        %3042 = vmatmul.bf16.gmra.mxu0 %v2954
        %v3043 = vpop.f32.mrf.mxu0
        %v3044 = vadd.f32 0.0, %v3043
        %v3045 = vpop.f32.mrf.mxu0
        %v3046 = vadd.f32 0.0, %v3045
        %3047 = vdwg.mxu0
        %v3048 = vadd.f32 %v2884, %v3019
        %v3049 = vadd.f32 %v2885, %v3021
        %v3050 = vadd.f32 %v2886, %v3024
        %v3051 = vadd.f32 %v2887, %v3026
        %v3052 = vadd.f32 %v2888, %v3029
        %v3053 = vadd.f32 %v2889, %v3031
        %v3054 = vadd.f32 %v2890, %v3034
        %v3055 = vadd.f32 %v2891, %v3036
        %v3056 = vadd.f32 %v2892, %v3039
        %v3057 = vadd.f32 %v2893, %v3041
        %v3058 = vadd.f32 %v2894, %v3044
        %v3059 = vadd.f32 %v2895, %v3046
        %v3060 = vld [vmem:[%s1864 + $0xc] sm:$0xf]
        %v3061 = vld [vmem:[%s1864 + $0x10] sm:$0xf]
        %v3062 = vld [vmem:[%s1864 + $0x14] sm:$0xf]
        %v3063 = vld [vmem:[%s1864 + $0x18] sm:$0xf]
        %v3064 = vld [vmem:[%s1864 + $0x1c] sm:$0xf]
        %v3065 = vld [vmem:[%s1864 + $0x20] sm:$0xf]
        %v3066 = vld [vmem:[%s1864 + $0x24] sm:$0xf]
        %v3067 = vld [vmem:[%s1864 + $0x28] sm:$0xf]
        %v3068 = vld [vmem:[%s1864 + $0x2c] sm:$0xf]
        %v3069 = vld [vmem:[%s1864 + $0x30] sm:$0xf]
        %v3070 = vld [vmem:[%s1864 + $0x34] sm:$0xf]
        %v3071 = vld [vmem:[%s1864 + $0x38] sm:$0xf]
        %v3072 = vld [vmem:[%s1864 + $0x3c] sm:$0x1]
        %s3073 = scalar_lea.vmem [#allocation4], 1024
        %v3074 = vld [vmem:[%s3073] sm:$0xf]
        %v3075 = vld [vmem:[%s3073 + $0x4] sm:$0xf]
        %v3076 = vld [vmem:[%s3073 + $0x8] sm:$0xf]
        %v3077 = vld [vmem:[%s3073 + $0xc] sm:$0xf]
        %v3078 = vld [vmem:[%s3073 + $0x10] sm:$0xf]
        %v3079 = vld [vmem:[%s3073 + $0x14] sm:$0xf]
        %v3080 = vld [vmem:[%s3073 + $0x18] sm:$0xf]
        %v3081 = vld [vmem:[%s3073 + $0x1c] sm:$0xf]
        %v3082 = vld [vmem:[%s3073 + $0x20] sm:$0xf]
        %v3083 = vld [vmem:[%s3073 + $0x24] sm:$0xf]
        %v3084 = vld [vmem:[%s3073 + $0x28] sm:$0xf]
        %v3085 = vld [vmem:[%s3073 + $0x2c] sm:$0xf]
        %v3086 = vld [vmem:[%s3073 + $0x30] sm:$0xf]
        %v3087 = vld [vmem:[%s3073 + $0x34] sm:$0xf]
        %v3088 = vld [vmem:[%s3073 + $0x38] sm:$0xf]
        %v3089 = vld [vmem:[%s3073 + $0x3c] sm:$0xf]
        %v3103 = vunpack.c.l.b16 %v3060
        %v3104 = vunpack.c.l.b16 %v3061
        %v3105 = vunpack.c.l.b16 %v3062
        %v3106 = vunpack.c.l.b16 %v3063
        %v3107 = vunpack.c.l.b16 %v3064
        %v3108 = vunpack.c.l.b16 %v3065
        %v3109 = vunpack.c.l.b16 %v3066
        %v3110 = vunpack.c.l.b16 %v3067
        %v3111 = vunpack.c.l.b16 %v3068
        %v3112 = vunpack.c.l.b16 %v3069
        %v3113 = vunpack.c.l.b16 %v3070
        %v3114 = vunpack.c.l.b16 %v3071
        %v3115 = vunpack.c.l.b16 %v3072
        %v3116 = vpack.c.b16 %v3104, %v3103
        %v3117 = vpack.c.b16 %v3106, %v3105
        %v3118 = vpack.c.b16 %v3108, %v3107
        %v3119 = vpack.c.b16 %v3110, %v3109
        %v3120 = vpack.c.b16 %v3112, %v3111
        %v3121 = vpack.c.b16 %v3114, %v3113
        %v3122 = vpack.c.b16 %v3115, %v3115
        %v3124 = vshrl.u32 %v3116, 16
        %v3126 = vshll.u32 %v3116, 16
        %v3128 = vrot.slane %v3126, 1
        %v3129 = vor.u32 %v3124, %v3128
        %v3131 = vshll.u32 %v3117, 16
        %v3133 = vrot.slane %v3131, 1
        %v3134 = vsel %vm528, %v3129, %v3133
        %v3135 = vshrl.u32 %v3117, 16
        %v3137 = vor.u32 %v3135, %v3133
        %v3139 = vshll.u32 %v3118, 16
        %v3141 = vrot.slane %v3139, 1
        %v3142 = vsel %vm528, %v3137, %v3141
        %v3143 = vshrl.u32 %v3118, 16
        %v3145 = vor.u32 %v3143, %v3141
        %v3147 = vshll.u32 %v3119, 16
        %v3149 = vrot.slane %v3147, 1
        %v3150 = vsel %vm528, %v3145, %v3149
        %v3151 = vshrl.u32 %v3119, 16
        %v3153 = vor.u32 %v3151, %v3149
        %v3155 = vshll.u32 %v3120, 16
        %v3157 = vrot.slane %v3155, 1
        %v3158 = vsel %vm528, %v3153, %v3157
        %v3159 = vshrl.u32 %v3120, 16
        %v3161 = vor.u32 %v3159, %v3157
        %v3163 = vshll.u32 %v3121, 16
        %v3165 = vrot.slane %v3163, 1
        %v3166 = vsel %vm528, %v3161, %v3165
        %v3167 = vshrl.u32 %v3121, 16
        %v3169 = vor.u32 %v3167, %v3165
        %v3171 = vshll.u32 %v3122, 16
        %v3173 = vrot.slane %v3171, 1
        %v3174 = vsel %vm528, %v3169, %v3173
        %v3197 = vunpack.c.l.b16 %v3074
        %v3198 = vunpack.c.l.b16 %v3075
        %v3199 = vunpack.c.l.b16 %v3076
        %v3200 = vunpack.c.l.b16 %v3077
        %v3201 = vunpack.c.l.b16 %v3078
        %v3202 = vunpack.c.l.b16 %v3079
        %v3203 = vunpack.c.l.b16 %v3080
        %v3204 = vunpack.c.l.b16 %v3081
        %v3205 = vunpack.c.l.b16 %v3082
        %v3206 = vunpack.c.l.b16 %v3083
        %v3207 = vunpack.c.l.b16 %v3084
        %v3208 = vunpack.c.l.b16 %v3085
        %v3209 = vunpack.c.l.b16 %v3086
        %v3210 = vunpack.c.l.b16 %v3087
        %v3211 = vunpack.c.l.b16 %v3088
        %v3212 = vunpack.c.l.b16 %v3089
        %v3213 = vpack.c.b16 %v3198, %v3197
        %v3214 = vpack.c.b16 %v3200, %v3199
        %v3215 = vpack.c.b16 %v3202, %v3201
        %v3216 = vpack.c.b16 %v3204, %v3203
        %v3217 = vpack.c.b16 %v3206, %v3205
        %v3218 = vpack.c.b16 %v3208, %v3207
        %v3219 = vpack.c.b16 %v3210, %v3209
        %v3220 = vpack.c.b16 %v3212, %v3211
        %3229 = vmatpush.bf16.msra.mxu0 %v3220
        %3230 = vmatpush.bf16.msra.mxu0 %v3219
        %3231 = vmatpush.bf16.msra.mxu0 %v3218
        %3232 = vmatpush.bf16.msra.mxu0 %v3217
        %3233 = vmatpush.bf16.msra.mxu0 %v3216
        %3234 = vmatpush.bf16.msra.mxu0 %v3215
        %3235 = vmatpush.bf16.msra.mxu0 %v3214
        %3236 = vmatpush.bf16.msra.mxu0 %v3213
        %3237 = vmatmul.bf16.gmra.mxu0 %v3134
        %v3238 = vpop.f32.mrf.mxu0
        %v3239 = vadd.f32 0.0, %v3238
        %v3240 = vpop.f32.mrf.mxu0
        %v3241 = vadd.f32 0.0, %v3240
        %3242 = vmatmul.bf16.gmra.mxu0 %v3142
        %v3243 = vpop.f32.mrf.mxu0
        %v3244 = vadd.f32 0.0, %v3243
        %v3245 = vpop.f32.mrf.mxu0
        %v3246 = vadd.f32 0.0, %v3245
        %3247 = vmatmul.bf16.gmra.mxu0 %v3150
        %v3248 = vpop.f32.mrf.mxu0
        %v3249 = vadd.f32 0.0, %v3248
        %v3250 = vpop.f32.mrf.mxu0
        %v3251 = vadd.f32 0.0, %v3250
        %3252 = vmatmul.bf16.gmra.mxu0 %v3158
        %v3253 = vpop.f32.mrf.mxu0
        %v3254 = vadd.f32 0.0, %v3253
        %v3255 = vpop.f32.mrf.mxu0
        %v3256 = vadd.f32 0.0, %v3255
        %3257 = vmatmul.bf16.gmra.mxu0 %v3166
        %v3258 = vpop.f32.mrf.mxu0
        %v3259 = vadd.f32 0.0, %v3258
        %v3260 = vpop.f32.mrf.mxu0
        %v3261 = vadd.f32 0.0, %v3260
        %3262 = vmatmul.bf16.gmra.mxu0 %v3174
        %v3263 = vpop.f32.mrf.mxu0
        %v3264 = vadd.f32 0.0, %v3263
        %v3265 = vpop.f32.mrf.mxu0
        %v3266 = vadd.f32 0.0, %v3265
        %3267 = vdwg.mxu0
        %v3268 = vadd.f32 %v3048, %v3239
        %v3269 = vadd.f32 %v3049, %v3241
        %v3270 = vadd.f32 %v3050, %v3244
        %v3271 = vadd.f32 %v3051, %v3246
        %v3272 = vadd.f32 %v3052, %v3249
        %v3273 = vadd.f32 %v3053, %v3251
        %v3274 = vadd.f32 %v3054, %v3254
        %v3275 = vadd.f32 %v3055, %v3256
        %v3276 = vadd.f32 %v3056, %v3259
        %v3277 = vadd.f32 %v3057, %v3261
        %v3278 = vadd.f32 %v3058, %v3264
        %v3279 = vadd.f32 %v3059, %v3266
        %v3280 = vld [vmem:[%s1864 + $0xc] sm:$0xe]
        %s3281 = scalar_lea.vmem [#allocation4], 1088
        %v3282 = vld [vmem:[%s3281] sm:$0xf]
        %v3283 = vld [vmem:[%s3281 + $0x4] sm:$0xf]
        %v3284 = vld [vmem:[%s3281 + $0x8] sm:$0xf]
        %v3285 = vld [vmem:[%s3281 + $0xc] sm:$0xf]
        %v3286 = vld [vmem:[%s3281 + $0x10] sm:$0xf]
        %v3287 = vld [vmem:[%s3281 + $0x14] sm:$0xf]
        %v3288 = vld [vmem:[%s3281 + $0x18] sm:$0xf]
        %v3289 = vld [vmem:[%s3281 + $0x1c] sm:$0xf]
        %v3290 = vld [vmem:[%s3281 + $0x20] sm:$0xf]
        %v3291 = vld [vmem:[%s3281 + $0x24] sm:$0xf]
        %v3292 = vld [vmem:[%s3281 + $0x28] sm:$0xf]
        %v3293 = vld [vmem:[%s3281 + $0x2c] sm:$0xf]
        %v3294 = vld [vmem:[%s3281 + $0x30] sm:$0xf]
        %v3295 = vld [vmem:[%s3281 + $0x34] sm:$0xf]
        %v3296 = vld [vmem:[%s3281 + $0x38] sm:$0xf]
        %v3297 = vld [vmem:[%s3281 + $0x3c] sm:$0xf]
        %v3299 = vunpack.c.l.b16 %v3280
        %v3300 = vpack.c.b16 %v3104, %v3299
        %v3301 = vrot.slane %v3300, 1
        %v3302 = vrot.slane %v3117, 1
        %v3303 = vsel %vm707, %v3301, %v3302
        %v3304 = vrot.slane %v3118, 1
        %v3305 = vsel %vm707, %v3302, %v3304
        %v3306 = vrot.slane %v3119, 1
        %v3307 = vsel %vm707, %v3304, %v3306
        %v3308 = vrot.slane %v3120, 1
        %v3309 = vsel %vm707, %v3306, %v3308
        %v3310 = vrot.slane %v3121, 1
        %v3311 = vsel %vm707, %v3308, %v3310
        %v3312 = vrot.slane %v3122, 1
        %v3313 = vsel %vm707, %v3310, %v3312
        %v3336 = vunpack.c.l.b16 %v3282
        %v3337 = vunpack.c.l.b16 %v3283
        %v3338 = vunpack.c.l.b16 %v3284
        %v3339 = vunpack.c.l.b16 %v3285
        %v3340 = vunpack.c.l.b16 %v3286
        %v3341 = vunpack.c.l.b16 %v3287
        %v3342 = vunpack.c.l.b16 %v3288
        %v3343 = vunpack.c.l.b16 %v3289
        %v3344 = vunpack.c.l.b16 %v3290
        %v3345 = vunpack.c.l.b16 %v3291
        %v3346 = vunpack.c.l.b16 %v3292
        %v3347 = vunpack.c.l.b16 %v3293
        %v3348 = vunpack.c.l.b16 %v3294
        %v3349 = vunpack.c.l.b16 %v3295
        %v3350 = vunpack.c.l.b16 %v3296
        %v3351 = vunpack.c.l.b16 %v3297
        %v3352 = vpack.c.b16 %v3337, %v3336
        %v3353 = vpack.c.b16 %v3339, %v3338
        %v3354 = vpack.c.b16 %v3341, %v3340
        %v3355 = vpack.c.b16 %v3343, %v3342
        %v3356 = vpack.c.b16 %v3345, %v3344
        %v3357 = vpack.c.b16 %v3347, %v3346
        %v3358 = vpack.c.b16 %v3349, %v3348
        %v3359 = vpack.c.b16 %v3351, %v3350
        %3368 = vmatpush.bf16.msra.mxu0 %v3359
        %3369 = vmatpush.bf16.msra.mxu0 %v3358
        %3370 = vmatpush.bf16.msra.mxu0 %v3357
        %3371 = vmatpush.bf16.msra.mxu0 %v3356
        %3372 = vmatpush.bf16.msra.mxu0 %v3355
        %3373 = vmatpush.bf16.msra.mxu0 %v3354
        %3374 = vmatpush.bf16.msra.mxu0 %v3353
        %3375 = vmatpush.bf16.msra.mxu0 %v3352
        %3376 = vmatmul.bf16.gmra.mxu0 %v3303
        %v3377 = vpop.f32.mrf.mxu0
        %v3378 = vadd.f32 0.0, %v3377
        %v3379 = vpop.f32.mrf.mxu0
        %v3380 = vadd.f32 0.0, %v3379
        %3381 = vmatmul.bf16.gmra.mxu0 %v3305
        %v3382 = vpop.f32.mrf.mxu0
        %v3383 = vadd.f32 0.0, %v3382
        %v3384 = vpop.f32.mrf.mxu0
        %v3385 = vadd.f32 0.0, %v3384
        %3386 = vmatmul.bf16.gmra.mxu0 %v3307
        %v3387 = vpop.f32.mrf.mxu0
        %v3388 = vadd.f32 0.0, %v3387
        %v3389 = vpop.f32.mrf.mxu0
        %v3390 = vadd.f32 0.0, %v3389
        %3391 = vmatmul.bf16.gmra.mxu0 %v3309
        %v3392 = vpop.f32.mrf.mxu0
        %v3393 = vadd.f32 0.0, %v3392
        %v3394 = vpop.f32.mrf.mxu0
        %v3395 = vadd.f32 0.0, %v3394
        %3396 = vmatmul.bf16.gmra.mxu0 %v3311
        %v3397 = vpop.f32.mrf.mxu0
        %v3398 = vadd.f32 0.0, %v3397
        %v3399 = vpop.f32.mrf.mxu0
        %v3400 = vadd.f32 0.0, %v3399
        %3401 = vmatmul.bf16.gmra.mxu0 %v3313
        %v3402 = vpop.f32.mrf.mxu0
        %v3403 = vadd.f32 0.0, %v3402
        %v3404 = vpop.f32.mrf.mxu0
        %v3405 = vadd.f32 0.0, %v3404
        %3406 = vdwg.mxu0
        %v3407 = vadd.f32 %v3268, %v3378
        %v3408 = vadd.f32 %v3269, %v3380
        %v3409 = vadd.f32 %v3270, %v3383
        %v3410 = vadd.f32 %v3271, %v3385
        %v3411 = vadd.f32 %v3272, %v3388
        %v3412 = vadd.f32 %v3273, %v3390
        %v3413 = vadd.f32 %v3274, %v3393
        %v3414 = vadd.f32 %v3275, %v3395
        %v3415 = vadd.f32 %v3276, %v3398
        %v3416 = vadd.f32 %v3277, %v3400
        %v3417 = vadd.f32 %v3278, %v3403
        %v3418 = vadd.f32 %v3279, %v3405
        %s3419 = sadd.s32 %s25, 2
        %s3420 = sand.u32 %s3419, 3
        %s3421 = smul.u32 %s3420, 16
        %s3422 = smul.addr %s3421, 4
        %s3423 = scalar_lea.vmem [#allocation2], %s3422
        %v3424 = vld [vmem:[%s3423] sm:$0xf]
        %v3425 = vld [vmem:[%s3423 + $0x4] sm:$0xf]
        %v3426 = vld [vmem:[%s3423 + $0x8] sm:$0xf]
        %v3427 = vld [vmem:[%s3423 + $0xc] sm:$0xf]
        %v3428 = vld [vmem:[%s3423 + $0x10] sm:$0xf]
        %v3429 = vld [vmem:[%s3423 + $0x14] sm:$0xf]
        %v3430 = vld [vmem:[%s3423 + $0x18] sm:$0xf]
        %v3431 = vld [vmem:[%s3423 + $0x1c] sm:$0xf]
        %v3432 = vld [vmem:[%s3423 + $0x20] sm:$0xf]
        %v3433 = vld [vmem:[%s3423 + $0x24] sm:$0xf]
        %v3434 = vld [vmem:[%s3423 + $0x28] sm:$0xf]
        %v3435 = vld [vmem:[%s3423 + $0x2c] sm:$0xf]
        %s3436 = scalar_lea.vmem [#allocation4], 1152
        %v3437 = vld [vmem:[%s3436] sm:$0xf]
        %v3438 = vld [vmem:[%s3436 + $0x4] sm:$0xf]
        %v3439 = vld [vmem:[%s3436 + $0x8] sm:$0xf]
        %v3440 = vld [vmem:[%s3436 + $0xc] sm:$0xf]
        %v3441 = vld [vmem:[%s3436 + $0x10] sm:$0xf]
        %v3442 = vld [vmem:[%s3436 + $0x14] sm:$0xf]
        %v3443 = vld [vmem:[%s3436 + $0x18] sm:$0xf]
        %v3444 = vld [vmem:[%s3436 + $0x1c] sm:$0xf]
        %v3445 = vld [vmem:[%s3436 + $0x20] sm:$0xf]
        %v3446 = vld [vmem:[%s3436 + $0x24] sm:$0xf]
        %v3447 = vld [vmem:[%s3436 + $0x28] sm:$0xf]
        %v3448 = vld [vmem:[%s3436 + $0x2c] sm:$0xf]
        %v3449 = vld [vmem:[%s3436 + $0x30] sm:$0xf]
        %v3450 = vld [vmem:[%s3436 + $0x34] sm:$0xf]
        %v3451 = vld [vmem:[%s3436 + $0x38] sm:$0xf]
        %v3452 = vld [vmem:[%s3436 + $0x3c] sm:$0xf]
        %v3465 = vunpack.c.l.b16 %v3424
        %v3466 = vunpack.c.l.b16 %v3425
        %v3467 = vunpack.c.l.b16 %v3426
        %v3468 = vunpack.c.l.b16 %v3427
        %v3469 = vunpack.c.l.b16 %v3428
        %v3470 = vunpack.c.l.b16 %v3429
        %v3471 = vunpack.c.l.b16 %v3430
        %v3472 = vunpack.c.l.b16 %v3431
        %v3473 = vunpack.c.l.b16 %v3432
        %v3474 = vunpack.c.l.b16 %v3433
        %v3475 = vunpack.c.l.b16 %v3434
        %v3476 = vunpack.c.l.b16 %v3435
        %v3477 = vpack.c.b16 %v3466, %v3465
        %v3478 = vpack.c.b16 %v3468, %v3467
        %v3479 = vpack.c.b16 %v3470, %v3469
        %v3480 = vpack.c.b16 %v3472, %v3471
        %v3481 = vpack.c.b16 %v3474, %v3473
        %v3482 = vpack.c.b16 %v3476, %v3475
        %v3505 = vunpack.c.l.b16 %v3437
        %v3506 = vunpack.c.l.b16 %v3438
        %v3507 = vunpack.c.l.b16 %v3439
        %v3508 = vunpack.c.l.b16 %v3440
        %v3509 = vunpack.c.l.b16 %v3441
        %v3510 = vunpack.c.l.b16 %v3442
        %v3511 = vunpack.c.l.b16 %v3443
        %v3512 = vunpack.c.l.b16 %v3444
        %v3513 = vunpack.c.l.b16 %v3445
        %v3514 = vunpack.c.l.b16 %v3446
        %v3515 = vunpack.c.l.b16 %v3447
        %v3516 = vunpack.c.l.b16 %v3448
        %v3517 = vunpack.c.l.b16 %v3449
        %v3518 = vunpack.c.l.b16 %v3450
        %v3519 = vunpack.c.l.b16 %v3451
        %v3520 = vunpack.c.l.b16 %v3452
        %v3521 = vpack.c.b16 %v3506, %v3505
        %v3522 = vpack.c.b16 %v3508, %v3507
        %v3523 = vpack.c.b16 %v3510, %v3509
        %v3524 = vpack.c.b16 %v3512, %v3511
        %v3525 = vpack.c.b16 %v3514, %v3513
        %v3526 = vpack.c.b16 %v3516, %v3515
        %v3527 = vpack.c.b16 %v3518, %v3517
        %v3528 = vpack.c.b16 %v3520, %v3519
        %3537 = vmatpush.bf16.msra.mxu0 %v3528
        %3538 = vmatpush.bf16.msra.mxu0 %v3527
        %3539 = vmatpush.bf16.msra.mxu0 %v3526
        %3540 = vmatpush.bf16.msra.mxu0 %v3525
        %3541 = vmatpush.bf16.msra.mxu0 %v3524
        %3542 = vmatpush.bf16.msra.mxu0 %v3523
        %3543 = vmatpush.bf16.msra.mxu0 %v3522
        %3544 = vmatpush.bf16.msra.mxu0 %v3521
        %3545 = vmatmul.bf16.gmra.mxu0 %v3477
        %v3546 = vpop.f32.mrf.mxu0
        %v3547 = vadd.f32 0.0, %v3546
        %v3548 = vpop.f32.mrf.mxu0
        %v3549 = vadd.f32 0.0, %v3548
        %3550 = vmatmul.bf16.gmra.mxu0 %v3478
        %v3551 = vpop.f32.mrf.mxu0
        %v3552 = vadd.f32 0.0, %v3551
        %v3553 = vpop.f32.mrf.mxu0
        %v3554 = vadd.f32 0.0, %v3553
        %3555 = vmatmul.bf16.gmra.mxu0 %v3479
        %v3556 = vpop.f32.mrf.mxu0
        %v3557 = vadd.f32 0.0, %v3556
        %v3558 = vpop.f32.mrf.mxu0
        %v3559 = vadd.f32 0.0, %v3558
        %3560 = vmatmul.bf16.gmra.mxu0 %v3480
        %v3561 = vpop.f32.mrf.mxu0
        %v3562 = vadd.f32 0.0, %v3561
        %v3563 = vpop.f32.mrf.mxu0
        %v3564 = vadd.f32 0.0, %v3563
        %3565 = vmatmul.bf16.gmra.mxu0 %v3481
        %v3566 = vpop.f32.mrf.mxu0
        %v3567 = vadd.f32 0.0, %v3566
        %v3568 = vpop.f32.mrf.mxu0
        %v3569 = vadd.f32 0.0, %v3568
        %3570 = vmatmul.bf16.gmra.mxu0 %v3482
        %v3571 = vpop.f32.mrf.mxu0
        %v3572 = vadd.f32 0.0, %v3571
        %v3573 = vpop.f32.mrf.mxu0
        %v3574 = vadd.f32 0.0, %v3573
        %3575 = vdwg.mxu0
        %v3576 = vadd.f32 %v3407, %v3547
        %v3577 = vadd.f32 %v3408, %v3549
        %v3578 = vadd.f32 %v3409, %v3552
        %v3579 = vadd.f32 %v3410, %v3554
        %v3580 = vadd.f32 %v3411, %v3557
        %v3581 = vadd.f32 %v3412, %v3559
        %v3582 = vadd.f32 %v3413, %v3562
        %v3583 = vadd.f32 %v3414, %v3564
        %v3584 = vadd.f32 %v3415, %v3567
        %v3585 = vadd.f32 %v3416, %v3569
        %v3586 = vadd.f32 %v3417, %v3572
        %v3587 = vadd.f32 %v3418, %v3574
        %v3588 = vld [vmem:[%s3423] sm:$0xf]
        %v3589 = vld [vmem:[%s3423 + $0x4] sm:$0xf]
        %v3590 = vld [vmem:[%s3423 + $0x8] sm:$0xf]
        %v3591 = vld [vmem:[%s3423 + $0xc] sm:$0xf]
        %v3592 = vld [vmem:[%s3423 + $0x10] sm:$0xf]
        %v3593 = vld [vmem:[%s3423 + $0x14] sm:$0xf]
        %v3594 = vld [vmem:[%s3423 + $0x18] sm:$0xf]
        %v3595 = vld [vmem:[%s3423 + $0x1c] sm:$0xf]
        %v3596 = vld [vmem:[%s3423 + $0x20] sm:$0xf]
        %v3597 = vld [vmem:[%s3423 + $0x24] sm:$0xf]
        %v3598 = vld [vmem:[%s3423 + $0x28] sm:$0xf]
        %v3599 = vld [vmem:[%s3423 + $0x2c] sm:$0xf]
        %v3600 = vld [vmem:[%s3423 + $0x30] sm:$0x1]
        %s3601 = scalar_lea.vmem [#allocation4], 1216
        %v3602 = vld [vmem:[%s3601] sm:$0xf]
        %v3603 = vld [vmem:[%s3601 + $0x4] sm:$0xf]
        %v3604 = vld [vmem:[%s3601 + $0x8] sm:$0xf]
        %v3605 = vld [vmem:[%s3601 + $0xc] sm:$0xf]
        %v3606 = vld [vmem:[%s3601 + $0x10] sm:$0xf]
        %v3607 = vld [vmem:[%s3601 + $0x14] sm:$0xf]
        %v3608 = vld [vmem:[%s3601 + $0x18] sm:$0xf]
        %v3609 = vld [vmem:[%s3601 + $0x1c] sm:$0xf]
        %v3610 = vld [vmem:[%s3601 + $0x20] sm:$0xf]
        %v3611 = vld [vmem:[%s3601 + $0x24] sm:$0xf]
        %v3612 = vld [vmem:[%s3601 + $0x28] sm:$0xf]
        %v3613 = vld [vmem:[%s3601 + $0x2c] sm:$0xf]
        %v3614 = vld [vmem:[%s3601 + $0x30] sm:$0xf]
        %v3615 = vld [vmem:[%s3601 + $0x34] sm:$0xf]
        %v3616 = vld [vmem:[%s3601 + $0x38] sm:$0xf]
        %v3617 = vld [vmem:[%s3601 + $0x3c] sm:$0xf]
        %v3631 = vunpack.c.l.b16 %v3588
        %v3632 = vunpack.c.l.b16 %v3589
        %v3633 = vunpack.c.l.b16 %v3590
        %v3634 = vunpack.c.l.b16 %v3591
        %v3635 = vunpack.c.l.b16 %v3592
        %v3636 = vunpack.c.l.b16 %v3593
        %v3637 = vunpack.c.l.b16 %v3594
        %v3638 = vunpack.c.l.b16 %v3595
        %v3639 = vunpack.c.l.b16 %v3596
        %v3640 = vunpack.c.l.b16 %v3597
        %v3641 = vunpack.c.l.b16 %v3598
        %v3642 = vunpack.c.l.b16 %v3599
        %v3643 = vunpack.c.l.b16 %v3600
        %v3644 = vpack.c.b16 %v3632, %v3631
        %v3645 = vpack.c.b16 %v3634, %v3633
        %v3646 = vpack.c.b16 %v3636, %v3635
        %v3647 = vpack.c.b16 %v3638, %v3637
        %v3648 = vpack.c.b16 %v3640, %v3639
        %v3649 = vpack.c.b16 %v3642, %v3641
        %v3650 = vpack.c.b16 %v3643, %v3643
        %v3652 = vshrl.u32 %v3644, 16
        %v3654 = vshll.u32 %v3644, 16
        %v3656 = vrot.slane %v3654, 1
        %v3657 = vor.u32 %v3652, %v3656
        %v3659 = vshll.u32 %v3645, 16
        %v3661 = vrot.slane %v3659, 1
        %v3662 = vsel %vm528, %v3657, %v3661
        %v3663 = vshrl.u32 %v3645, 16
        %v3665 = vor.u32 %v3663, %v3661
        %v3667 = vshll.u32 %v3646, 16
        %v3669 = vrot.slane %v3667, 1
        %v3670 = vsel %vm528, %v3665, %v3669
        %v3671 = vshrl.u32 %v3646, 16
        %v3673 = vor.u32 %v3671, %v3669
        %v3675 = vshll.u32 %v3647, 16
        %v3677 = vrot.slane %v3675, 1
        %v3678 = vsel %vm528, %v3673, %v3677
        %v3679 = vshrl.u32 %v3647, 16
        %v3681 = vor.u32 %v3679, %v3677
        %v3683 = vshll.u32 %v3648, 16
        %v3685 = vrot.slane %v3683, 1
        %v3686 = vsel %vm528, %v3681, %v3685
        %v3687 = vshrl.u32 %v3648, 16
        %v3689 = vor.u32 %v3687, %v3685
        %v3691 = vshll.u32 %v3649, 16
        %v3693 = vrot.slane %v3691, 1
        %v3694 = vsel %vm528, %v3689, %v3693
        %v3695 = vshrl.u32 %v3649, 16
        %v3697 = vor.u32 %v3695, %v3693
        %v3699 = vshll.u32 %v3650, 16
        %v3701 = vrot.slane %v3699, 1
        %v3702 = vsel %vm528, %v3697, %v3701
        %v3725 = vunpack.c.l.b16 %v3602
        %v3726 = vunpack.c.l.b16 %v3603
        %v3727 = vunpack.c.l.b16 %v3604
        %v3728 = vunpack.c.l.b16 %v3605
        %v3729 = vunpack.c.l.b16 %v3606
        %v3730 = vunpack.c.l.b16 %v3607
        %v3731 = vunpack.c.l.b16 %v3608
        %v3732 = vunpack.c.l.b16 %v3609
        %v3733 = vunpack.c.l.b16 %v3610
        %v3734 = vunpack.c.l.b16 %v3611
        %v3735 = vunpack.c.l.b16 %v3612
        %v3736 = vunpack.c.l.b16 %v3613
        %v3737 = vunpack.c.l.b16 %v3614
        %v3738 = vunpack.c.l.b16 %v3615
        %v3739 = vunpack.c.l.b16 %v3616
        %v3740 = vunpack.c.l.b16 %v3617
        %v3741 = vpack.c.b16 %v3726, %v3725
        %v3742 = vpack.c.b16 %v3728, %v3727
        %v3743 = vpack.c.b16 %v3730, %v3729
        %v3744 = vpack.c.b16 %v3732, %v3731
        %v3745 = vpack.c.b16 %v3734, %v3733
        %v3746 = vpack.c.b16 %v3736, %v3735
        %v3747 = vpack.c.b16 %v3738, %v3737
        %v3748 = vpack.c.b16 %v3740, %v3739
        %3757 = vmatpush.bf16.msra.mxu0 %v3748
        %3758 = vmatpush.bf16.msra.mxu0 %v3747
        %3759 = vmatpush.bf16.msra.mxu0 %v3746
        %3760 = vmatpush.bf16.msra.mxu0 %v3745
        %3761 = vmatpush.bf16.msra.mxu0 %v3744
        %3762 = vmatpush.bf16.msra.mxu0 %v3743
        %3763 = vmatpush.bf16.msra.mxu0 %v3742
        %3764 = vmatpush.bf16.msra.mxu0 %v3741
        %3765 = vmatmul.bf16.gmra.mxu0 %v3662
        %v3766 = vpop.f32.mrf.mxu0
        %v3767 = vadd.f32 0.0, %v3766
        %v3768 = vpop.f32.mrf.mxu0
        %v3769 = vadd.f32 0.0, %v3768
        %3770 = vmatmul.bf16.gmra.mxu0 %v3670
        %v3771 = vpop.f32.mrf.mxu0
        %v3772 = vadd.f32 0.0, %v3771
        %v3773 = vpop.f32.mrf.mxu0
        %v3774 = vadd.f32 0.0, %v3773
        %3775 = vmatmul.bf16.gmra.mxu0 %v3678
        %v3776 = vpop.f32.mrf.mxu0
        %v3777 = vadd.f32 0.0, %v3776
        %v3778 = vpop.f32.mrf.mxu0
        %v3779 = vadd.f32 0.0, %v3778
        %3780 = vmatmul.bf16.gmra.mxu0 %v3686
        %v3781 = vpop.f32.mrf.mxu0
        %v3782 = vadd.f32 0.0, %v3781
        %v3783 = vpop.f32.mrf.mxu0
        %v3784 = vadd.f32 0.0, %v3783
        %3785 = vmatmul.bf16.gmra.mxu0 %v3694
        %v3786 = vpop.f32.mrf.mxu0
        %v3787 = vadd.f32 0.0, %v3786
        %v3788 = vpop.f32.mrf.mxu0
        %v3789 = vadd.f32 0.0, %v3788
        %3790 = vmatmul.bf16.gmra.mxu0 %v3702
        %v3791 = vpop.f32.mrf.mxu0
        %v3792 = vadd.f32 0.0, %v3791
        %v3793 = vpop.f32.mrf.mxu0
        %v3794 = vadd.f32 0.0, %v3793
        %3795 = vdwg.mxu0
        %v3796 = vadd.f32 %v3576, %v3767
        %v3797 = vadd.f32 %v3577, %v3769
        %v3798 = vadd.f32 %v3578, %v3772
        %v3799 = vadd.f32 %v3579, %v3774
        %v3800 = vadd.f32 %v3580, %v3777
        %v3801 = vadd.f32 %v3581, %v3779
        %v3802 = vadd.f32 %v3582, %v3782
        %v3803 = vadd.f32 %v3583, %v3784
        %v3804 = vadd.f32 %v3584, %v3787
        %v3805 = vadd.f32 %v3585, %v3789
        %v3806 = vadd.f32 %v3586, %v3792
        %v3807 = vadd.f32 %v3587, %v3794
        %v3808 = vld [vmem:[%s3423] sm:$0xe]
        %s3809 = scalar_lea.vmem [#allocation4], 1280
        %v3810 = vld [vmem:[%s3809] sm:$0xf]
        %v3811 = vld [vmem:[%s3809 + $0x4] sm:$0xf]
        %v3812 = vld [vmem:[%s3809 + $0x8] sm:$0xf]
        %v3813 = vld [vmem:[%s3809 + $0xc] sm:$0xf]
        %v3814 = vld [vmem:[%s3809 + $0x10] sm:$0xf]
        %v3815 = vld [vmem:[%s3809 + $0x14] sm:$0xf]
        %v3816 = vld [vmem:[%s3809 + $0x18] sm:$0xf]
        %v3817 = vld [vmem:[%s3809 + $0x1c] sm:$0xf]
        %v3818 = vld [vmem:[%s3809 + $0x20] sm:$0xf]
        %v3819 = vld [vmem:[%s3809 + $0x24] sm:$0xf]
        %v3820 = vld [vmem:[%s3809 + $0x28] sm:$0xf]
        %v3821 = vld [vmem:[%s3809 + $0x2c] sm:$0xf]
        %v3822 = vld [vmem:[%s3809 + $0x30] sm:$0xf]
        %v3823 = vld [vmem:[%s3809 + $0x34] sm:$0xf]
        %v3824 = vld [vmem:[%s3809 + $0x38] sm:$0xf]
        %v3825 = vld [vmem:[%s3809 + $0x3c] sm:$0xf]
        %v3827 = vunpack.c.l.b16 %v3808
        %v3828 = vpack.c.b16 %v3632, %v3827
        %v3829 = vrot.slane %v3828, 1
        %v3830 = vrot.slane %v3645, 1
        %v3831 = vsel %vm707, %v3829, %v3830
        %v3832 = vrot.slane %v3646, 1
        %v3833 = vsel %vm707, %v3830, %v3832
        %v3834 = vrot.slane %v3647, 1
        %v3835 = vsel %vm707, %v3832, %v3834
        %v3836 = vrot.slane %v3648, 1
        %v3837 = vsel %vm707, %v3834, %v3836
        %v3838 = vrot.slane %v3649, 1
        %v3839 = vsel %vm707, %v3836, %v3838
        %v3840 = vrot.slane %v3650, 1
        %v3841 = vsel %vm707, %v3838, %v3840
        %v3864 = vunpack.c.l.b16 %v3810
        %v3865 = vunpack.c.l.b16 %v3811
        %v3866 = vunpack.c.l.b16 %v3812
        %v3867 = vunpack.c.l.b16 %v3813
        %v3868 = vunpack.c.l.b16 %v3814
        %v3869 = vunpack.c.l.b16 %v3815
        %v3870 = vunpack.c.l.b16 %v3816
        %v3871 = vunpack.c.l.b16 %v3817
        %v3872 = vunpack.c.l.b16 %v3818
        %v3873 = vunpack.c.l.b16 %v3819
        %v3874 = vunpack.c.l.b16 %v3820
        %v3875 = vunpack.c.l.b16 %v3821
        %v3876 = vunpack.c.l.b16 %v3822
        %v3877 = vunpack.c.l.b16 %v3823
        %v3878 = vunpack.c.l.b16 %v3824
        %v3879 = vunpack.c.l.b16 %v3825
        %v3880 = vpack.c.b16 %v3865, %v3864
        %v3881 = vpack.c.b16 %v3867, %v3866
        %v3882 = vpack.c.b16 %v3869, %v3868
        %v3883 = vpack.c.b16 %v3871, %v3870
        %v3884 = vpack.c.b16 %v3873, %v3872
        %v3885 = vpack.c.b16 %v3875, %v3874
        %v3886 = vpack.c.b16 %v3877, %v3876
        %v3887 = vpack.c.b16 %v3879, %v3878
        %3896 = vmatpush.bf16.msra.mxu0 %v3887
        %3897 = vmatpush.bf16.msra.mxu0 %v3886
        %3898 = vmatpush.bf16.msra.mxu0 %v3885
        %3899 = vmatpush.bf16.msra.mxu0 %v3884
        %3900 = vmatpush.bf16.msra.mxu0 %v3883
        %3901 = vmatpush.bf16.msra.mxu0 %v3882
        %3902 = vmatpush.bf16.msra.mxu0 %v3881
        %3903 = vmatpush.bf16.msra.mxu0 %v3880
        %3904 = vmatmul.bf16.gmra.mxu0 %v3831
        %v3905 = vpop.f32.mrf.mxu0
        %v3906 = vadd.f32 0.0, %v3905
        %v3907 = vpop.f32.mrf.mxu0
        %v3908 = vadd.f32 0.0, %v3907
        %3909 = vmatmul.bf16.gmra.mxu0 %v3833
        %v3910 = vpop.f32.mrf.mxu0
        %v3911 = vadd.f32 0.0, %v3910
        %v3912 = vpop.f32.mrf.mxu0
        %v3913 = vadd.f32 0.0, %v3912
        %3914 = vmatmul.bf16.gmra.mxu0 %v3835
        %v3915 = vpop.f32.mrf.mxu0
        %v3916 = vadd.f32 0.0, %v3915
        %v3917 = vpop.f32.mrf.mxu0
        %v3918 = vadd.f32 0.0, %v3917
        %3919 = vmatmul.bf16.gmra.mxu0 %v3837
        %v3920 = vpop.f32.mrf.mxu0
        %v3921 = vadd.f32 0.0, %v3920
        %v3922 = vpop.f32.mrf.mxu0
        %v3923 = vadd.f32 0.0, %v3922
        %3924 = vmatmul.bf16.gmra.mxu0 %v3839
        %v3925 = vpop.f32.mrf.mxu0
        %v3926 = vadd.f32 0.0, %v3925
        %v3927 = vpop.f32.mrf.mxu0
        %v3928 = vadd.f32 0.0, %v3927
        %3929 = vmatmul.bf16.gmra.mxu0 %v3841
        %v3930 = vpop.f32.mrf.mxu0
        %v3931 = vadd.f32 0.0, %v3930
        %v3932 = vpop.f32.mrf.mxu0
        %v3933 = vadd.f32 0.0, %v3932
        %3934 = vdwg.mxu0
        %v3935 = vadd.f32 %v3796, %v3906
        %v3936 = vadd.f32 %v3797, %v3908
        %v3937 = vadd.f32 %v3798, %v3911
        %v3938 = vadd.f32 %v3799, %v3913
        %v3939 = vadd.f32 %v3800, %v3916
        %v3940 = vadd.f32 %v3801, %v3918
        %v3941 = vadd.f32 %v3802, %v3921
        %v3942 = vadd.f32 %v3803, %v3923
        %v3943 = vadd.f32 %v3804, %v3926
        %v3944 = vadd.f32 %v3805, %v3928
        %v3945 = vadd.f32 %v3806, %v3931
        %v3946 = vadd.f32 %v3807, %v3933
        %v3947 = vld [vmem:[%s3423 + $0x4] sm:$0xc]
        %v3948 = vld [vmem:[%s3423 + $0x8] sm:$0xf]
        %v3949 = vld [vmem:[%s3423 + $0xc] sm:$0xf]
        %v3950 = vld [vmem:[%s3423 + $0x10] sm:$0xf]
        %v3951 = vld [vmem:[%s3423 + $0x14] sm:$0xf]
        %v3952 = vld [vmem:[%s3423 + $0x18] sm:$0xf]
        %v3953 = vld [vmem:[%s3423 + $0x1c] sm:$0xf]
        %v3954 = vld [vmem:[%s3423 + $0x20] sm:$0xf]
        %v3955 = vld [vmem:[%s3423 + $0x24] sm:$0xf]
        %v3956 = vld [vmem:[%s3423 + $0x28] sm:$0xf]
        %v3957 = vld [vmem:[%s3423 + $0x2c] sm:$0xf]
        %v3958 = vld [vmem:[%s3423 + $0x30] sm:$0xf]
        %v3959 = vld [vmem:[%s3423 + $0x34] sm:$0x3]
        %s3960 = scalar_lea.vmem [#allocation4], 1344
        %v3961 = vld [vmem:[%s3960] sm:$0xf]
        %v3962 = vld [vmem:[%s3960 + $0x4] sm:$0xf]
        %v3963 = vld [vmem:[%s3960 + $0x8] sm:$0xf]
        %v3964 = vld [vmem:[%s3960 + $0xc] sm:$0xf]
        %v3965 = vld [vmem:[%s3960 + $0x10] sm:$0xf]
        %v3966 = vld [vmem:[%s3960 + $0x14] sm:$0xf]
        %v3967 = vld [vmem:[%s3960 + $0x18] sm:$0xf]
        %v3968 = vld [vmem:[%s3960 + $0x1c] sm:$0xf]
        %v3969 = vld [vmem:[%s3960 + $0x20] sm:$0xf]
        %v3970 = vld [vmem:[%s3960 + $0x24] sm:$0xf]
        %v3971 = vld [vmem:[%s3960 + $0x28] sm:$0xf]
        %v3972 = vld [vmem:[%s3960 + $0x2c] sm:$0xf]
        %v3973 = vld [vmem:[%s3960 + $0x30] sm:$0xf]
        %v3974 = vld [vmem:[%s3960 + $0x34] sm:$0xf]
        %v3975 = vld [vmem:[%s3960 + $0x38] sm:$0xf]
        %v3976 = vld [vmem:[%s3960 + $0x3c] sm:$0xf]
        %v3990 = vunpack.c.l.b16 %v3947
        %v3991 = vunpack.c.l.b16 %v3948
        %v3992 = vunpack.c.l.b16 %v3949
        %v3993 = vunpack.c.l.b16 %v3950
        %v3994 = vunpack.c.l.b16 %v3951
        %v3995 = vunpack.c.l.b16 %v3952
        %v3996 = vunpack.c.l.b16 %v3953
        %v3997 = vunpack.c.l.b16 %v3954
        %v3998 = vunpack.c.l.b16 %v3955
        %v3999 = vunpack.c.l.b16 %v3956
        %v4000 = vunpack.c.l.b16 %v3957
        %v4001 = vunpack.c.l.b16 %v3958
        %v4002 = vunpack.c.l.b16 %v3959
        %v4003 = vpack.c.b16 %v3991, %v3990
        %v4004 = vpack.c.b16 %v3993, %v3992
        %v4005 = vpack.c.b16 %v3995, %v3994
        %v4006 = vpack.c.b16 %v3997, %v3996
        %v4007 = vpack.c.b16 %v3999, %v3998
        %v4008 = vpack.c.b16 %v4001, %v4000
        %v4009 = vpack.c.b16 %v4002, %v4002
        %v4010 = vrot.slane %v4003, 2
        %v4011 = vrot.slane %v4004, 2
        %v4012 = vsel %vm889, %v4010, %v4011
        %v4013 = vrot.slane %v4005, 2
        %v4014 = vsel %vm889, %v4011, %v4013
        %v4015 = vrot.slane %v4006, 2
        %v4016 = vsel %vm889, %v4013, %v4015
        %v4017 = vrot.slane %v4007, 2
        %v4018 = vsel %vm889, %v4015, %v4017
        %v4019 = vrot.slane %v4008, 2
        %v4020 = vsel %vm889, %v4017, %v4019
        %v4021 = vrot.slane %v4009, 2
        %v4022 = vsel %vm889, %v4019, %v4021
        %v4045 = vunpack.c.l.b16 %v3961
        %v4046 = vunpack.c.l.b16 %v3962
        %v4047 = vunpack.c.l.b16 %v3963
        %v4048 = vunpack.c.l.b16 %v3964
        %v4049 = vunpack.c.l.b16 %v3965
        %v4050 = vunpack.c.l.b16 %v3966
        %v4051 = vunpack.c.l.b16 %v3967
        %v4052 = vunpack.c.l.b16 %v3968
        %v4053 = vunpack.c.l.b16 %v3969
        %v4054 = vunpack.c.l.b16 %v3970
        %v4055 = vunpack.c.l.b16 %v3971
        %v4056 = vunpack.c.l.b16 %v3972
        %v4057 = vunpack.c.l.b16 %v3973
        %v4058 = vunpack.c.l.b16 %v3974
        %v4059 = vunpack.c.l.b16 %v3975
        %v4060 = vunpack.c.l.b16 %v3976
        %v4061 = vpack.c.b16 %v4046, %v4045
        %v4062 = vpack.c.b16 %v4048, %v4047
        %v4063 = vpack.c.b16 %v4050, %v4049
        %v4064 = vpack.c.b16 %v4052, %v4051
        %v4065 = vpack.c.b16 %v4054, %v4053
        %v4066 = vpack.c.b16 %v4056, %v4055
        %v4067 = vpack.c.b16 %v4058, %v4057
        %v4068 = vpack.c.b16 %v4060, %v4059
        %4077 = vmatpush.bf16.msra.mxu0 %v4068
        %4078 = vmatpush.bf16.msra.mxu0 %v4067
        %4079 = vmatpush.bf16.msra.mxu0 %v4066
        %4080 = vmatpush.bf16.msra.mxu0 %v4065
        %4081 = vmatpush.bf16.msra.mxu0 %v4064
        %4082 = vmatpush.bf16.msra.mxu0 %v4063
        %4083 = vmatpush.bf16.msra.mxu0 %v4062
        %4084 = vmatpush.bf16.msra.mxu0 %v4061
        %4085 = vmatmul.bf16.gmra.mxu0 %v4012
        %v4086 = vpop.f32.mrf.mxu0
        %v4087 = vadd.f32 0.0, %v4086
        %v4088 = vpop.f32.mrf.mxu0
        %v4089 = vadd.f32 0.0, %v4088
        %4090 = vmatmul.bf16.gmra.mxu0 %v4014
        %v4091 = vpop.f32.mrf.mxu0
        %v4092 = vadd.f32 0.0, %v4091
        %v4093 = vpop.f32.mrf.mxu0
        %v4094 = vadd.f32 0.0, %v4093
        %4095 = vmatmul.bf16.gmra.mxu0 %v4016
        %v4096 = vpop.f32.mrf.mxu0
        %v4097 = vadd.f32 0.0, %v4096
        %v4098 = vpop.f32.mrf.mxu0
        %v4099 = vadd.f32 0.0, %v4098
        %4100 = vmatmul.bf16.gmra.mxu0 %v4018
        %v4101 = vpop.f32.mrf.mxu0
        %v4102 = vadd.f32 0.0, %v4101
        %v4103 = vpop.f32.mrf.mxu0
        %v4104 = vadd.f32 0.0, %v4103
        %4105 = vmatmul.bf16.gmra.mxu0 %v4020
        %v4106 = vpop.f32.mrf.mxu0
        %v4107 = vadd.f32 0.0, %v4106
        %v4108 = vpop.f32.mrf.mxu0
        %v4109 = vadd.f32 0.0, %v4108
        %4110 = vmatmul.bf16.gmra.mxu0 %v4022
        %v4111 = vpop.f32.mrf.mxu0
        %v4112 = vadd.f32 0.0, %v4111
        %v4113 = vpop.f32.mrf.mxu0
        %v4114 = vadd.f32 0.0, %v4113
        %4115 = vdwg.mxu0
        %v4116 = vadd.f32 %v3935, %v4087
        %v4117 = vadd.f32 %v3936, %v4089
        %v4118 = vadd.f32 %v3937, %v4092
        %v4119 = vadd.f32 %v3938, %v4094
        %v4120 = vadd.f32 %v3939, %v4097
        %v4121 = vadd.f32 %v3940, %v4099
        %v4122 = vadd.f32 %v3941, %v4102
        %v4123 = vadd.f32 %v3942, %v4104
        %v4124 = vadd.f32 %v3943, %v4107
        %v4125 = vadd.f32 %v3944, %v4109
        %v4126 = vadd.f32 %v3945, %v4112
        %v4127 = vadd.f32 %v3946, %v4114
        %v4128 = vld [vmem:[%s3423 + $0x34] sm:$0x7]
        %s4129 = scalar_lea.vmem [#allocation4], 1408
        %v4130 = vld [vmem:[%s4129] sm:$0xf]
        %v4131 = vld [vmem:[%s4129 + $0x4] sm:$0xf]
        %v4132 = vld [vmem:[%s4129 + $0x8] sm:$0xf]
        %v4133 = vld [vmem:[%s4129 + $0xc] sm:$0xf]
        %v4134 = vld [vmem:[%s4129 + $0x10] sm:$0xf]
        %v4135 = vld [vmem:[%s4129 + $0x14] sm:$0xf]
        %v4136 = vld [vmem:[%s4129 + $0x18] sm:$0xf]
        %v4137 = vld [vmem:[%s4129 + $0x1c] sm:$0xf]
        %v4138 = vld [vmem:[%s4129 + $0x20] sm:$0xf]
        %v4139 = vld [vmem:[%s4129 + $0x24] sm:$0xf]
        %v4140 = vld [vmem:[%s4129 + $0x28] sm:$0xf]
        %v4141 = vld [vmem:[%s4129 + $0x2c] sm:$0xf]
        %v4142 = vld [vmem:[%s4129 + $0x30] sm:$0xf]
        %v4143 = vld [vmem:[%s4129 + $0x34] sm:$0xf]
        %v4144 = vld [vmem:[%s4129 + $0x38] sm:$0xf]
        %v4145 = vld [vmem:[%s4129 + $0x3c] sm:$0xf]
        %v4147 = vunpack.c.l.b16 %v4128
        %v4148 = vpack.c.b16 %v4147, %v4147
        %v4150 = vshrl.u32 %v4003, 16
        %v4152 = vrot.slane %v4150, 2
        %v4153 = vshll.u32 %v4003, 16
        %v4155 = vrot.slane %v4153, 3
        %v4156 = vor.u32 %v4152, %v4155
        %v4158 = vshrl.u32 %v4004, 16
        %v4160 = vrot.slane %v4158, 2
        %v4161 = vshll.u32 %v4004, 16
        %v4163 = vrot.slane %v4161, 3
        %v4164 = vor.u32 %v4160, %v4163
        %v4165 = vsel %vm1029, %v4156, %v4164
        %v4167 = vshrl.u32 %v4005, 16
        %v4169 = vrot.slane %v4167, 2
        %v4170 = vshll.u32 %v4005, 16
        %v4172 = vrot.slane %v4170, 3
        %v4173 = vor.u32 %v4169, %v4172
        %v4174 = vsel %vm1029, %v4164, %v4173
        %v4176 = vshrl.u32 %v4006, 16
        %v4178 = vrot.slane %v4176, 2
        %v4179 = vshll.u32 %v4006, 16
        %v4181 = vrot.slane %v4179, 3
        %v4182 = vor.u32 %v4178, %v4181
        %v4183 = vsel %vm1029, %v4173, %v4182
        %v4185 = vshrl.u32 %v4007, 16
        %v4187 = vrot.slane %v4185, 2
        %v4188 = vshll.u32 %v4007, 16
        %v4190 = vrot.slane %v4188, 3
        %v4191 = vor.u32 %v4187, %v4190
        %v4192 = vsel %vm1029, %v4182, %v4191
        %v4194 = vshrl.u32 %v4008, 16
        %v4196 = vrot.slane %v4194, 2
        %v4197 = vshll.u32 %v4008, 16
        %v4199 = vrot.slane %v4197, 3
        %v4200 = vor.u32 %v4196, %v4199
        %v4201 = vsel %vm1029, %v4191, %v4200
        %v4203 = vshrl.u32 %v4148, 16
        %v4205 = vrot.slane %v4203, 2
        %v4206 = vshll.u32 %v4148, 16
        %v4208 = vrot.slane %v4206, 3
        %v4209 = vor.u32 %v4205, %v4208
        %v4210 = vsel %vm1029, %v4200, %v4209
        %v4233 = vunpack.c.l.b16 %v4130
        %v4234 = vunpack.c.l.b16 %v4131
        %v4235 = vunpack.c.l.b16 %v4132
        %v4236 = vunpack.c.l.b16 %v4133
        %v4237 = vunpack.c.l.b16 %v4134
        %v4238 = vunpack.c.l.b16 %v4135
        %v4239 = vunpack.c.l.b16 %v4136
        %v4240 = vunpack.c.l.b16 %v4137
        %v4241 = vunpack.c.l.b16 %v4138
        %v4242 = vunpack.c.l.b16 %v4139
        %v4243 = vunpack.c.l.b16 %v4140
        %v4244 = vunpack.c.l.b16 %v4141
        %v4245 = vunpack.c.l.b16 %v4142
        %v4246 = vunpack.c.l.b16 %v4143
        %v4247 = vunpack.c.l.b16 %v4144
        %v4248 = vunpack.c.l.b16 %v4145
        %v4249 = vpack.c.b16 %v4234, %v4233
        %v4250 = vpack.c.b16 %v4236, %v4235
        %v4251 = vpack.c.b16 %v4238, %v4237
        %v4252 = vpack.c.b16 %v4240, %v4239
        %v4253 = vpack.c.b16 %v4242, %v4241
        %v4254 = vpack.c.b16 %v4244, %v4243
        %v4255 = vpack.c.b16 %v4246, %v4245
        %v4256 = vpack.c.b16 %v4248, %v4247
        %4265 = vmatpush.bf16.msra.mxu0 %v4256
        %4266 = vmatpush.bf16.msra.mxu0 %v4255
        %4267 = vmatpush.bf16.msra.mxu0 %v4254
        %4268 = vmatpush.bf16.msra.mxu0 %v4253
        %4269 = vmatpush.bf16.msra.mxu0 %v4252
        %4270 = vmatpush.bf16.msra.mxu0 %v4251
        %4271 = vmatpush.bf16.msra.mxu0 %v4250
        %4272 = vmatpush.bf16.msra.mxu0 %v4249
        %4273 = vmatmul.bf16.gmra.mxu0 %v4165
        %v4274 = vpop.f32.mrf.mxu0
        %v4275 = vadd.f32 0.0, %v4274
        %v4276 = vpop.f32.mrf.mxu0
        %v4277 = vadd.f32 0.0, %v4276
        %4278 = vmatmul.bf16.gmra.mxu0 %v4174
        %v4279 = vpop.f32.mrf.mxu0
        %v4280 = vadd.f32 0.0, %v4279
        %v4281 = vpop.f32.mrf.mxu0
        %v4282 = vadd.f32 0.0, %v4281
        %4283 = vmatmul.bf16.gmra.mxu0 %v4183
        %v4284 = vpop.f32.mrf.mxu0
        %v4285 = vadd.f32 0.0, %v4284
        %v4286 = vpop.f32.mrf.mxu0
        %v4287 = vadd.f32 0.0, %v4286
        %4288 = vmatmul.bf16.gmra.mxu0 %v4192
        %v4289 = vpop.f32.mrf.mxu0
        %v4290 = vadd.f32 0.0, %v4289
        %v4291 = vpop.f32.mrf.mxu0
        %v4292 = vadd.f32 0.0, %v4291
        %4293 = vmatmul.bf16.gmra.mxu0 %v4201
        %v4294 = vpop.f32.mrf.mxu0
        %v4295 = vadd.f32 0.0, %v4294
        %v4296 = vpop.f32.mrf.mxu0
        %v4297 = vadd.f32 0.0, %v4296
        %4298 = vmatmul.bf16.gmra.mxu0 %v4210
        %v4299 = vpop.f32.mrf.mxu0
        %v4300 = vadd.f32 0.0, %v4299
        %v4301 = vpop.f32.mrf.mxu0
        %v4302 = vadd.f32 0.0, %v4301
        %4303 = vdwg.mxu0
        %v4304 = vadd.f32 %v4116, %v4275
        %v4305 = vadd.f32 %v4117, %v4277
        %v4306 = vadd.f32 %v4118, %v4280
        %v4307 = vadd.f32 %v4119, %v4282
        %v4308 = vadd.f32 %v4120, %v4285
        %v4309 = vadd.f32 %v4121, %v4287
        %v4310 = vadd.f32 %v4122, %v4290
        %v4311 = vadd.f32 %v4123, %v4292
        %v4312 = vadd.f32 %v4124, %v4295
        %v4313 = vadd.f32 %v4125, %v4297
        %v4314 = vadd.f32 %v4126, %v4300
        %v4315 = vadd.f32 %v4127, %v4302
        %v4316 = vld [vmem:[%s3423 + $0x4] sm:$0x8]
        %s4317 = scalar_lea.vmem [#allocation4], 1472
        %v4318 = vld [vmem:[%s4317] sm:$0xf]
        %v4319 = vld [vmem:[%s4317 + $0x4] sm:$0xf]
        %v4320 = vld [vmem:[%s4317 + $0x8] sm:$0xf]
        %v4321 = vld [vmem:[%s4317 + $0xc] sm:$0xf]
        %v4322 = vld [vmem:[%s4317 + $0x10] sm:$0xf]
        %v4323 = vld [vmem:[%s4317 + $0x14] sm:$0xf]
        %v4324 = vld [vmem:[%s4317 + $0x18] sm:$0xf]
        %v4325 = vld [vmem:[%s4317 + $0x1c] sm:$0xf]
        %v4326 = vld [vmem:[%s4317 + $0x20] sm:$0xf]
        %v4327 = vld [vmem:[%s4317 + $0x24] sm:$0xf]
        %v4328 = vld [vmem:[%s4317 + $0x28] sm:$0xf]
        %v4329 = vld [vmem:[%s4317 + $0x2c] sm:$0xf]
        %v4330 = vld [vmem:[%s4317 + $0x30] sm:$0xf]
        %v4331 = vld [vmem:[%s4317 + $0x34] sm:$0xf]
        %v4332 = vld [vmem:[%s4317 + $0x38] sm:$0xf]
        %v4333 = vld [vmem:[%s4317 + $0x3c] sm:$0xf]
        %v4335 = vunpack.c.l.b16 %v4316
        %v4336 = vpack.c.b16 %v3991, %v4335
        %v4337 = vrot.slane %v4336, 3
        %v4338 = vrot.slane %v4004, 3
        %v4339 = vsel %vm1218, %v4337, %v4338
        %v4340 = vrot.slane %v4005, 3
        %v4341 = vsel %vm1218, %v4338, %v4340
        %v4342 = vrot.slane %v4006, 3
        %v4343 = vsel %vm1218, %v4340, %v4342
        %v4344 = vrot.slane %v4007, 3
        %v4345 = vsel %vm1218, %v4342, %v4344
        %v4346 = vrot.slane %v4008, 3
        %v4347 = vsel %vm1218, %v4344, %v4346
        %v4348 = vrot.slane %v4148, 3
        %v4349 = vsel %vm1218, %v4346, %v4348
        %v4372 = vunpack.c.l.b16 %v4318
        %v4373 = vunpack.c.l.b16 %v4319
        %v4374 = vunpack.c.l.b16 %v4320
        %v4375 = vunpack.c.l.b16 %v4321
        %v4376 = vunpack.c.l.b16 %v4322
        %v4377 = vunpack.c.l.b16 %v4323
        %v4378 = vunpack.c.l.b16 %v4324
        %v4379 = vunpack.c.l.b16 %v4325
        %v4380 = vunpack.c.l.b16 %v4326
        %v4381 = vunpack.c.l.b16 %v4327
        %v4382 = vunpack.c.l.b16 %v4328
        %v4383 = vunpack.c.l.b16 %v4329
        %v4384 = vunpack.c.l.b16 %v4330
        %v4385 = vunpack.c.l.b16 %v4331
        %v4386 = vunpack.c.l.b16 %v4332
        %v4387 = vunpack.c.l.b16 %v4333
        %v4388 = vpack.c.b16 %v4373, %v4372
        %v4389 = vpack.c.b16 %v4375, %v4374
        %v4390 = vpack.c.b16 %v4377, %v4376
        %v4391 = vpack.c.b16 %v4379, %v4378
        %v4392 = vpack.c.b16 %v4381, %v4380
        %v4393 = vpack.c.b16 %v4383, %v4382
        %v4394 = vpack.c.b16 %v4385, %v4384
        %v4395 = vpack.c.b16 %v4387, %v4386
        %4404 = vmatpush.bf16.msra.mxu0 %v4395
        %4405 = vmatpush.bf16.msra.mxu0 %v4394
        %4406 = vmatpush.bf16.msra.mxu0 %v4393
        %4407 = vmatpush.bf16.msra.mxu0 %v4392
        %4408 = vmatpush.bf16.msra.mxu0 %v4391
        %4409 = vmatpush.bf16.msra.mxu0 %v4390
        %4410 = vmatpush.bf16.msra.mxu0 %v4389
        %4411 = vmatpush.bf16.msra.mxu0 %v4388
        %4412 = vmatmul.bf16.gmra.mxu0 %v4339
        %v4413 = vpop.f32.mrf.mxu0
        %v4414 = vadd.f32 0.0, %v4413
        %v4415 = vpop.f32.mrf.mxu0
        %v4416 = vadd.f32 0.0, %v4415
        %4417 = vmatmul.bf16.gmra.mxu0 %v4341
        %v4418 = vpop.f32.mrf.mxu0
        %v4419 = vadd.f32 0.0, %v4418
        %v4420 = vpop.f32.mrf.mxu0
        %v4421 = vadd.f32 0.0, %v4420
        %4422 = vmatmul.bf16.gmra.mxu0 %v4343
        %v4423 = vpop.f32.mrf.mxu0
        %v4424 = vadd.f32 0.0, %v4423
        %v4425 = vpop.f32.mrf.mxu0
        %v4426 = vadd.f32 0.0, %v4425
        %4427 = vmatmul.bf16.gmra.mxu0 %v4345
        %v4428 = vpop.f32.mrf.mxu0
        %v4429 = vadd.f32 0.0, %v4428
        %v4430 = vpop.f32.mrf.mxu0
        %v4431 = vadd.f32 0.0, %v4430
        %4432 = vmatmul.bf16.gmra.mxu0 %v4347
        %v4433 = vpop.f32.mrf.mxu0
        %v4434 = vadd.f32 0.0, %v4433
        %v4435 = vpop.f32.mrf.mxu0
        %v4436 = vadd.f32 0.0, %v4435
        %4437 = vmatmul.bf16.gmra.mxu0 %v4349
        %v4438 = vpop.f32.mrf.mxu0
        %v4439 = vadd.f32 0.0, %v4438
        %v4440 = vpop.f32.mrf.mxu0
        %v4441 = vadd.f32 0.0, %v4440
        %4442 = vdwg.mxu0
        %v4443 = vadd.f32 %v4304, %v4414
        %v4444 = vadd.f32 %v4305, %v4416
        %v4445 = vadd.f32 %v4306, %v4419
        %v4446 = vadd.f32 %v4307, %v4421
        %v4447 = vadd.f32 %v4308, %v4424
        %v4448 = vadd.f32 %v4309, %v4426
        %v4449 = vadd.f32 %v4310, %v4429
        %v4450 = vadd.f32 %v4311, %v4431
        %v4451 = vadd.f32 %v4312, %v4434
        %v4452 = vadd.f32 %v4313, %v4436
        %v4453 = vadd.f32 %v4314, %v4439
        %v4454 = vadd.f32 %v4315, %v4441
        %v4455 = vld [vmem:[%s3423 + $0xc] sm:$0xf]
        %v4456 = vld [vmem:[%s3423 + $0x10] sm:$0xf]
        %v4457 = vld [vmem:[%s3423 + $0x14] sm:$0xf]
        %v4458 = vld [vmem:[%s3423 + $0x18] sm:$0xf]
        %v4459 = vld [vmem:[%s3423 + $0x1c] sm:$0xf]
        %v4460 = vld [vmem:[%s3423 + $0x20] sm:$0xf]
        %v4461 = vld [vmem:[%s3423 + $0x24] sm:$0xf]
        %v4462 = vld [vmem:[%s3423 + $0x28] sm:$0xf]
        %v4463 = vld [vmem:[%s3423 + $0x2c] sm:$0xf]
        %v4464 = vld [vmem:[%s3423 + $0x30] sm:$0xf]
        %v4465 = vld [vmem:[%s3423 + $0x34] sm:$0xf]
        %v4466 = vld [vmem:[%s3423 + $0x38] sm:$0xf]
        %s4467 = scalar_lea.vmem [#allocation4], 1536
        %v4468 = vld [vmem:[%s4467] sm:$0xf]
        %v4469 = vld [vmem:[%s4467 + $0x4] sm:$0xf]
        %v4470 = vld [vmem:[%s4467 + $0x8] sm:$0xf]
        %v4471 = vld [vmem:[%s4467 + $0xc] sm:$0xf]
        %v4472 = vld [vmem:[%s4467 + $0x10] sm:$0xf]
        %v4473 = vld [vmem:[%s4467 + $0x14] sm:$0xf]
        %v4474 = vld [vmem:[%s4467 + $0x18] sm:$0xf]
        %v4475 = vld [vmem:[%s4467 + $0x1c] sm:$0xf]
        %v4476 = vld [vmem:[%s4467 + $0x20] sm:$0xf]
        %v4477 = vld [vmem:[%s4467 + $0x24] sm:$0xf]
        %v4478 = vld [vmem:[%s4467 + $0x28] sm:$0xf]
        %v4479 = vld [vmem:[%s4467 + $0x2c] sm:$0xf]
        %v4480 = vld [vmem:[%s4467 + $0x30] sm:$0xf]
        %v4481 = vld [vmem:[%s4467 + $0x34] sm:$0xf]
        %v4482 = vld [vmem:[%s4467 + $0x38] sm:$0xf]
        %v4483 = vld [vmem:[%s4467 + $0x3c] sm:$0xf]
        %v4496 = vunpack.c.l.b16 %v4455
        %v4497 = vunpack.c.l.b16 %v4456
        %v4498 = vunpack.c.l.b16 %v4457
        %v4499 = vunpack.c.l.b16 %v4458
        %v4500 = vunpack.c.l.b16 %v4459
        %v4501 = vunpack.c.l.b16 %v4460
        %v4502 = vunpack.c.l.b16 %v4461
        %v4503 = vunpack.c.l.b16 %v4462
        %v4504 = vunpack.c.l.b16 %v4463
        %v4505 = vunpack.c.l.b16 %v4464
        %v4506 = vunpack.c.l.b16 %v4465
        %v4507 = vunpack.c.l.b16 %v4466
        %v4508 = vpack.c.b16 %v4497, %v4496
        %v4509 = vpack.c.b16 %v4499, %v4498
        %v4510 = vpack.c.b16 %v4501, %v4500
        %v4511 = vpack.c.b16 %v4503, %v4502
        %v4512 = vpack.c.b16 %v4505, %v4504
        %v4513 = vpack.c.b16 %v4507, %v4506
        %v4536 = vunpack.c.l.b16 %v4468
        %v4537 = vunpack.c.l.b16 %v4469
        %v4538 = vunpack.c.l.b16 %v4470
        %v4539 = vunpack.c.l.b16 %v4471
        %v4540 = vunpack.c.l.b16 %v4472
        %v4541 = vunpack.c.l.b16 %v4473
        %v4542 = vunpack.c.l.b16 %v4474
        %v4543 = vunpack.c.l.b16 %v4475
        %v4544 = vunpack.c.l.b16 %v4476
        %v4545 = vunpack.c.l.b16 %v4477
        %v4546 = vunpack.c.l.b16 %v4478
        %v4547 = vunpack.c.l.b16 %v4479
        %v4548 = vunpack.c.l.b16 %v4480
        %v4549 = vunpack.c.l.b16 %v4481
        %v4550 = vunpack.c.l.b16 %v4482
        %v4551 = vunpack.c.l.b16 %v4483
        %v4552 = vpack.c.b16 %v4537, %v4536
        %v4553 = vpack.c.b16 %v4539, %v4538
        %v4554 = vpack.c.b16 %v4541, %v4540
        %v4555 = vpack.c.b16 %v4543, %v4542
        %v4556 = vpack.c.b16 %v4545, %v4544
        %v4557 = vpack.c.b16 %v4547, %v4546
        %v4558 = vpack.c.b16 %v4549, %v4548
        %v4559 = vpack.c.b16 %v4551, %v4550
        %4568 = vmatpush.bf16.msra.mxu0 %v4559
        %4569 = vmatpush.bf16.msra.mxu0 %v4558
        %4570 = vmatpush.bf16.msra.mxu0 %v4557
        %4571 = vmatpush.bf16.msra.mxu0 %v4556
        %4572 = vmatpush.bf16.msra.mxu0 %v4555
        %4573 = vmatpush.bf16.msra.mxu0 %v4554
        %4574 = vmatpush.bf16.msra.mxu0 %v4553
        %4575 = vmatpush.bf16.msra.mxu0 %v4552
        %4576 = vmatmul.bf16.gmra.mxu0 %v4508
        %v4577 = vpop.f32.mrf.mxu0
        %v4578 = vadd.f32 0.0, %v4577
        %v4579 = vpop.f32.mrf.mxu0
        %v4580 = vadd.f32 0.0, %v4579
        %4581 = vmatmul.bf16.gmra.mxu0 %v4509
        %v4582 = vpop.f32.mrf.mxu0
        %v4583 = vadd.f32 0.0, %v4582
        %v4584 = vpop.f32.mrf.mxu0
        %v4585 = vadd.f32 0.0, %v4584
        %4586 = vmatmul.bf16.gmra.mxu0 %v4510
        %v4587 = vpop.f32.mrf.mxu0
        %v4588 = vadd.f32 0.0, %v4587
        %v4589 = vpop.f32.mrf.mxu0
        %v4590 = vadd.f32 0.0, %v4589
        %4591 = vmatmul.bf16.gmra.mxu0 %v4511
        %v4592 = vpop.f32.mrf.mxu0
        %v4593 = vadd.f32 0.0, %v4592
        %v4594 = vpop.f32.mrf.mxu0
        %v4595 = vadd.f32 0.0, %v4594
        %4596 = vmatmul.bf16.gmra.mxu0 %v4512
        %v4597 = vpop.f32.mrf.mxu0
        %v4598 = vadd.f32 0.0, %v4597
        %v4599 = vpop.f32.mrf.mxu0
        %v4600 = vadd.f32 0.0, %v4599
        %4601 = vmatmul.bf16.gmra.mxu0 %v4513
        %v4602 = vpop.f32.mrf.mxu0
        %v4603 = vadd.f32 0.0, %v4602
        %v4604 = vpop.f32.mrf.mxu0
        %v4605 = vadd.f32 0.0, %v4604
        %4606 = vdwg.mxu0
        %v4607 = vadd.f32 %v4443, %v4578
        %v4608 = vadd.f32 %v4444, %v4580
        %v4609 = vadd.f32 %v4445, %v4583
        %v4610 = vadd.f32 %v4446, %v4585
        %v4611 = vadd.f32 %v4447, %v4588
        %v4612 = vadd.f32 %v4448, %v4590
        %v4613 = vadd.f32 %v4449, %v4593
        %v4614 = vadd.f32 %v4450, %v4595
        %v4615 = vadd.f32 %v4451, %v4598
        %v4616 = vadd.f32 %v4452, %v4600
        %v4617 = vadd.f32 %v4453, %v4603
        %v4618 = vadd.f32 %v4454, %v4605
        %v4619 = vld [vmem:[%s3423 + $0xc] sm:$0xf]
        %v4620 = vld [vmem:[%s3423 + $0x10] sm:$0xf]
        %v4621 = vld [vmem:[%s3423 + $0x14] sm:$0xf]
        %v4622 = vld [vmem:[%s3423 + $0x18] sm:$0xf]
        %v4623 = vld [vmem:[%s3423 + $0x1c] sm:$0xf]
        %v4624 = vld [vmem:[%s3423 + $0x20] sm:$0xf]
        %v4625 = vld [vmem:[%s3423 + $0x24] sm:$0xf]
        %v4626 = vld [vmem:[%s3423 + $0x28] sm:$0xf]
        %v4627 = vld [vmem:[%s3423 + $0x2c] sm:$0xf]
        %v4628 = vld [vmem:[%s3423 + $0x30] sm:$0xf]
        %v4629 = vld [vmem:[%s3423 + $0x34] sm:$0xf]
        %v4630 = vld [vmem:[%s3423 + $0x38] sm:$0xf]
        %v4631 = vld [vmem:[%s3423 + $0x3c] sm:$0x1]
        %s4632 = scalar_lea.vmem [#allocation4], 1600
        %v4633 = vld [vmem:[%s4632] sm:$0xf]
        %v4634 = vld [vmem:[%s4632 + $0x4] sm:$0xf]
        %v4635 = vld [vmem:[%s4632 + $0x8] sm:$0xf]
        %v4636 = vld [vmem:[%s4632 + $0xc] sm:$0xf]
        %v4637 = vld [vmem:[%s4632 + $0x10] sm:$0xf]
        %v4638 = vld [vmem:[%s4632 + $0x14] sm:$0xf]
        %v4639 = vld [vmem:[%s4632 + $0x18] sm:$0xf]
        %v4640 = vld [vmem:[%s4632 + $0x1c] sm:$0xf]
        %v4641 = vld [vmem:[%s4632 + $0x20] sm:$0xf]
        %v4642 = vld [vmem:[%s4632 + $0x24] sm:$0xf]
        %v4643 = vld [vmem:[%s4632 + $0x28] sm:$0xf]
        %v4644 = vld [vmem:[%s4632 + $0x2c] sm:$0xf]
        %v4645 = vld [vmem:[%s4632 + $0x30] sm:$0xf]
        %v4646 = vld [vmem:[%s4632 + $0x34] sm:$0xf]
        %v4647 = vld [vmem:[%s4632 + $0x38] sm:$0xf]
        %v4648 = vld [vmem:[%s4632 + $0x3c] sm:$0xf]
        %v4662 = vunpack.c.l.b16 %v4619
        %v4663 = vunpack.c.l.b16 %v4620
        %v4664 = vunpack.c.l.b16 %v4621
        %v4665 = vunpack.c.l.b16 %v4622
        %v4666 = vunpack.c.l.b16 %v4623
        %v4667 = vunpack.c.l.b16 %v4624
        %v4668 = vunpack.c.l.b16 %v4625
        %v4669 = vunpack.c.l.b16 %v4626
        %v4670 = vunpack.c.l.b16 %v4627
        %v4671 = vunpack.c.l.b16 %v4628
        %v4672 = vunpack.c.l.b16 %v4629
        %v4673 = vunpack.c.l.b16 %v4630
        %v4674 = vunpack.c.l.b16 %v4631
        %v4675 = vpack.c.b16 %v4663, %v4662
        %v4676 = vpack.c.b16 %v4665, %v4664
        %v4677 = vpack.c.b16 %v4667, %v4666
        %v4678 = vpack.c.b16 %v4669, %v4668
        %v4679 = vpack.c.b16 %v4671, %v4670
        %v4680 = vpack.c.b16 %v4673, %v4672
        %v4681 = vpack.c.b16 %v4674, %v4674
        %v4683 = vshrl.u32 %v4675, 16
        %v4685 = vshll.u32 %v4675, 16
        %v4687 = vrot.slane %v4685, 1
        %v4688 = vor.u32 %v4683, %v4687
        %v4690 = vshll.u32 %v4676, 16
        %v4692 = vrot.slane %v4690, 1
        %v4693 = vsel %vm528, %v4688, %v4692
        %v4694 = vshrl.u32 %v4676, 16
        %v4696 = vor.u32 %v4694, %v4692
        %v4698 = vshll.u32 %v4677, 16
        %v4700 = vrot.slane %v4698, 1
        %v4701 = vsel %vm528, %v4696, %v4700
        %v4702 = vshrl.u32 %v4677, 16
        %v4704 = vor.u32 %v4702, %v4700
        %v4706 = vshll.u32 %v4678, 16
        %v4708 = vrot.slane %v4706, 1
        %v4709 = vsel %vm528, %v4704, %v4708
        %v4710 = vshrl.u32 %v4678, 16
        %v4712 = vor.u32 %v4710, %v4708
        %v4714 = vshll.u32 %v4679, 16
        %v4716 = vrot.slane %v4714, 1
        %v4717 = vsel %vm528, %v4712, %v4716
        %v4718 = vshrl.u32 %v4679, 16
        %v4720 = vor.u32 %v4718, %v4716
        %v4722 = vshll.u32 %v4680, 16
        %v4724 = vrot.slane %v4722, 1
        %v4725 = vsel %vm528, %v4720, %v4724
        %v4726 = vshrl.u32 %v4680, 16
        %v4728 = vor.u32 %v4726, %v4724
        %v4730 = vshll.u32 %v4681, 16
        %v4732 = vrot.slane %v4730, 1
        %v4733 = vsel %vm528, %v4728, %v4732
        %v4756 = vunpack.c.l.b16 %v4633
        %v4757 = vunpack.c.l.b16 %v4634
        %v4758 = vunpack.c.l.b16 %v4635
        %v4759 = vunpack.c.l.b16 %v4636
        %v4760 = vunpack.c.l.b16 %v4637
        %v4761 = vunpack.c.l.b16 %v4638
        %v4762 = vunpack.c.l.b16 %v4639
        %v4763 = vunpack.c.l.b16 %v4640
        %v4764 = vunpack.c.l.b16 %v4641
        %v4765 = vunpack.c.l.b16 %v4642
        %v4766 = vunpack.c.l.b16 %v4643
        %v4767 = vunpack.c.l.b16 %v4644
        %v4768 = vunpack.c.l.b16 %v4645
        %v4769 = vunpack.c.l.b16 %v4646
        %v4770 = vunpack.c.l.b16 %v4647
        %v4771 = vunpack.c.l.b16 %v4648
        %v4772 = vpack.c.b16 %v4757, %v4756
        %v4773 = vpack.c.b16 %v4759, %v4758
        %v4774 = vpack.c.b16 %v4761, %v4760
        %v4775 = vpack.c.b16 %v4763, %v4762
        %v4776 = vpack.c.b16 %v4765, %v4764
        %v4777 = vpack.c.b16 %v4767, %v4766
        %v4778 = vpack.c.b16 %v4769, %v4768
        %v4779 = vpack.c.b16 %v4771, %v4770
        %4788 = vmatpush.bf16.msra.mxu0 %v4779
        %4789 = vmatpush.bf16.msra.mxu0 %v4778
        %4790 = vmatpush.bf16.msra.mxu0 %v4777
        %4791 = vmatpush.bf16.msra.mxu0 %v4776
        %4792 = vmatpush.bf16.msra.mxu0 %v4775
        %4793 = vmatpush.bf16.msra.mxu0 %v4774
        %4794 = vmatpush.bf16.msra.mxu0 %v4773
        %4795 = vmatpush.bf16.msra.mxu0 %v4772
        %4796 = vmatmul.bf16.gmra.mxu0 %v4693
        %v4797 = vpop.f32.mrf.mxu0
        %v4798 = vadd.f32 0.0, %v4797
        %v4799 = vpop.f32.mrf.mxu0
        %v4800 = vadd.f32 0.0, %v4799
        %4801 = vmatmul.bf16.gmra.mxu0 %v4701
        %v4802 = vpop.f32.mrf.mxu0
        %v4803 = vadd.f32 0.0, %v4802
        %v4804 = vpop.f32.mrf.mxu0
        %v4805 = vadd.f32 0.0, %v4804
        %4806 = vmatmul.bf16.gmra.mxu0 %v4709
        %v4807 = vpop.f32.mrf.mxu0
        %v4808 = vadd.f32 0.0, %v4807
        %v4809 = vpop.f32.mrf.mxu0
        %v4810 = vadd.f32 0.0, %v4809
        %4811 = vmatmul.bf16.gmra.mxu0 %v4717
        %v4812 = vpop.f32.mrf.mxu0
        %v4813 = vadd.f32 0.0, %v4812
        %v4814 = vpop.f32.mrf.mxu0
        %v4815 = vadd.f32 0.0, %v4814
        %4816 = vmatmul.bf16.gmra.mxu0 %v4725
        %v4817 = vpop.f32.mrf.mxu0
        %v4818 = vadd.f32 0.0, %v4817
        %v4819 = vpop.f32.mrf.mxu0
        %v4820 = vadd.f32 0.0, %v4819
        %4821 = vmatmul.bf16.gmra.mxu0 %v4733
        %v4822 = vpop.f32.mrf.mxu0
        %v4823 = vadd.f32 0.0, %v4822
        %v4824 = vpop.f32.mrf.mxu0
        %v4825 = vadd.f32 0.0, %v4824
        %4826 = vdwg.mxu0
        %v4827 = vadd.f32 %v4607, %v4798
        %v4828 = vadd.f32 %v4608, %v4800
        %v4829 = vadd.f32 %v4609, %v4803
        %v4830 = vadd.f32 %v4610, %v4805
        %v4831 = vadd.f32 %v4611, %v4808
        %v4832 = vadd.f32 %v4612, %v4810
        %v4833 = vadd.f32 %v4613, %v4813
        %v4834 = vadd.f32 %v4614, %v4815
        %v4835 = vadd.f32 %v4615, %v4818
        %v4836 = vadd.f32 %v4616, %v4820
        %v4837 = vadd.f32 %v4617, %v4823
        %v4838 = vadd.f32 %v4618, %v4825
        %v4839 = vld [vmem:[%s3423 + $0xc] sm:$0xe]
        %s4840 = scalar_lea.vmem [#allocation4], 1664
        %v4841 = vld [vmem:[%s4840] sm:$0xf]
        %v4842 = vld [vmem:[%s4840 + $0x4] sm:$0xf]
        %v4843 = vld [vmem:[%s4840 + $0x8] sm:$0xf]
        %v4844 = vld [vmem:[%s4840 + $0xc] sm:$0xf]
        %v4845 = vld [vmem:[%s4840 + $0x10] sm:$0xf]
        %v4846 = vld [vmem:[%s4840 + $0x14] sm:$0xf]
        %v4847 = vld [vmem:[%s4840 + $0x18] sm:$0xf]
        %v4848 = vld [vmem:[%s4840 + $0x1c] sm:$0xf]
        %v4849 = vld [vmem:[%s4840 + $0x20] sm:$0xf]
        %v4850 = vld [vmem:[%s4840 + $0x24] sm:$0xf]
        %v4851 = vld [vmem:[%s4840 + $0x28] sm:$0xf]
        %v4852 = vld [vmem:[%s4840 + $0x2c] sm:$0xf]
        %v4853 = vld [vmem:[%s4840 + $0x30] sm:$0xf]
        %v4854 = vld [vmem:[%s4840 + $0x34] sm:$0xf]
        %v4855 = vld [vmem:[%s4840 + $0x38] sm:$0xf]
        %v4856 = vld [vmem:[%s4840 + $0x3c] sm:$0xf]
        %v4858 = vunpack.c.l.b16 %v4839
        %v4859 = vpack.c.b16 %v4663, %v4858
        %v4860 = vrot.slane %v4859, 1
        %v4861 = vrot.slane %v4676, 1
        %v4862 = vsel %vm707, %v4860, %v4861
        %v4863 = vrot.slane %v4677, 1
        %v4864 = vsel %vm707, %v4861, %v4863
        %v4865 = vrot.slane %v4678, 1
        %v4866 = vsel %vm707, %v4863, %v4865
        %v4867 = vrot.slane %v4679, 1
        %v4868 = vsel %vm707, %v4865, %v4867
        %v4869 = vrot.slane %v4680, 1
        %v4870 = vsel %vm707, %v4867, %v4869
        %v4871 = vrot.slane %v4681, 1
        %v4872 = vsel %vm707, %v4869, %v4871
        %v4895 = vunpack.c.l.b16 %v4841
        %v4896 = vunpack.c.l.b16 %v4842
        %v4897 = vunpack.c.l.b16 %v4843
        %v4898 = vunpack.c.l.b16 %v4844
        %v4899 = vunpack.c.l.b16 %v4845
        %v4900 = vunpack.c.l.b16 %v4846
        %v4901 = vunpack.c.l.b16 %v4847
        %v4902 = vunpack.c.l.b16 %v4848
        %v4903 = vunpack.c.l.b16 %v4849
        %v4904 = vunpack.c.l.b16 %v4850
        %v4905 = vunpack.c.l.b16 %v4851
        %v4906 = vunpack.c.l.b16 %v4852
        %v4907 = vunpack.c.l.b16 %v4853
        %v4908 = vunpack.c.l.b16 %v4854
        %v4909 = vunpack.c.l.b16 %v4855
        %v4910 = vunpack.c.l.b16 %v4856
        %v4911 = vpack.c.b16 %v4896, %v4895
        %v4912 = vpack.c.b16 %v4898, %v4897
        %v4913 = vpack.c.b16 %v4900, %v4899
        %v4914 = vpack.c.b16 %v4902, %v4901
        %v4915 = vpack.c.b16 %v4904, %v4903
        %v4916 = vpack.c.b16 %v4906, %v4905
        %v4917 = vpack.c.b16 %v4908, %v4907
        %v4918 = vpack.c.b16 %v4910, %v4909
        %4927 = vmatpush.bf16.msra.mxu0 %v4918
        %4928 = vmatpush.bf16.msra.mxu0 %v4917
        %4929 = vmatpush.bf16.msra.mxu0 %v4916
        %4930 = vmatpush.bf16.msra.mxu0 %v4915
        %4931 = vmatpush.bf16.msra.mxu0 %v4914
        %4932 = vmatpush.bf16.msra.mxu0 %v4913
        %4933 = vmatpush.bf16.msra.mxu0 %v4912
        %4934 = vmatpush.bf16.msra.mxu0 %v4911
        %4935 = vmatmul.bf16.gmra.mxu0 %v4862
        %v4936 = vpop.f32.mrf.mxu0
        %v4937 = vadd.f32 0.0, %v4936
        %v4938 = vpop.f32.mrf.mxu0
        %v4939 = vadd.f32 0.0, %v4938
        %4940 = vmatmul.bf16.gmra.mxu0 %v4864
        %v4941 = vpop.f32.mrf.mxu0
        %v4942 = vadd.f32 0.0, %v4941
        %v4943 = vpop.f32.mrf.mxu0
        %v4944 = vadd.f32 0.0, %v4943
        %4945 = vmatmul.bf16.gmra.mxu0 %v4866
        %v4946 = vpop.f32.mrf.mxu0
        %v4947 = vadd.f32 0.0, %v4946
        %v4948 = vpop.f32.mrf.mxu0
        %v4949 = vadd.f32 0.0, %v4948
        %4950 = vmatmul.bf16.gmra.mxu0 %v4868
        %v4951 = vpop.f32.mrf.mxu0
        %v4952 = vadd.f32 0.0, %v4951
        %v4953 = vpop.f32.mrf.mxu0
        %v4954 = vadd.f32 0.0, %v4953
        %4955 = vmatmul.bf16.gmra.mxu0 %v4870
        %v4956 = vpop.f32.mrf.mxu0
        %v4957 = vadd.f32 0.0, %v4956
        %v4958 = vpop.f32.mrf.mxu0
        %v4959 = vadd.f32 0.0, %v4958
        %4960 = vmatmul.bf16.gmra.mxu0 %v4872
        %v4961 = vpop.f32.mrf.mxu0
        %v4962 = vadd.f32 0.0, %v4961
        %v4963 = vpop.f32.mrf.mxu0
        %v4964 = vadd.f32 0.0, %v4963
        %4965 = vdwg.mxu0
        %v4966 = vadd.f32 %v4827, %v4937
        %v4967 = vadd.f32 %v4828, %v4939
        %v4968 = vadd.f32 %v4829, %v4942
        %v4969 = vadd.f32 %v4830, %v4944
        %v4970 = vadd.f32 %v4831, %v4947
        %v4971 = vadd.f32 %v4832, %v4949
        %v4972 = vadd.f32 %v4833, %v4952
        %v4973 = vadd.f32 %v4834, %v4954
        %v4974 = vadd.f32 %v4835, %v4957
        %v4975 = vadd.f32 %v4836, %v4959
        %v4976 = vadd.f32 %v4837, %v4962
        %v4977 = vadd.f32 %v4838, %v4964
        %4978 = vst [vmem:[%s180] sm:$0xff] %v4966
        %4979 = vst [vmem:[%s180 + $0x8] sm:$0xff] %v4967
        %4980 = vst [vmem:[%s180 + $0x10] sm:$0xff] %v4968
        %4981 = vst [vmem:[%s180 + $0x18] sm:$0xff] %v4969
        %4982 = vst [vmem:[%s180 + $0x20] sm:$0xff] %v4970
        %4983 = vst [vmem:[%s180 + $0x28] sm:$0xff] %v4971
        %4984 = vst [vmem:[%s180 + $0x30] sm:$0xff] %v4972
        %4985 = vst [vmem:[%s180 + $0x38] sm:$0xff] %v4973
        %4986 = vst [vmem:[%s180 + $0x40] sm:$0xff] %v4974
        %4987 = vst [vmem:[%s180 + $0x48] sm:$0xff] %v4975
        %4988 = vst [vmem:[%s180 + $0x50] sm:$0xff] %v4976
        %4989 = vst [vmem:[%s180 + $0x58] sm:$0xff] %v4977
        %s4990 = sand.u32 %s101, 1
        %s4991 = scalar_lea.sflag [#allocation6], %s4990
        %s4992 = sand.u32 %s101, 1
        %s4993 = smul.addr %s4992, 96
        %s4994 = scalar_lea.vmem [#allocation7], %s4993
        // Predicated region
        $region65: #{tpu_custom_call.1} parent=27 // pred_check
          %p4995 = pneg %p111
        $region66: #{tpu_custom_call.1} parent=27 // pred_check_branch
          %4997 = sbr.rel (%p4995) target = $region68
        $region67: #{tpu_custom_call.1} parent=27 // pred_region
          %4999 = vsyncadd %s4991, 0
          %s5000 = smul.addr %s25, 12
          %s5001 = sadd.s32 %s23, %s5000
          %s5002 = smul.addr %s24, 48
          %s5003 = sadd.s32 %s5001, %s5002
          %s5004 = smul.addr %s5003, 8
          %s5005 = scalar_lea.hbm %s3, %s5004
          %s5006 = sshll.u32 %s4994, 4
          %s5007 = int_to_ptr.vmem [resolvable:$true] %s5006
          %s5008 = sshll.u32 %s5005, 4
          %s5009 = int_to_ptr.hbm [resolvable:$true] %s5008
          %5014 = dma.vmem_to_hbm [thread:$0]  %s5007, 1536, %s5009, %s4991, 128, 128, 8
        $region68: #{tpu_custom_call.1} parent=27 // pred_fallthru
          _
      $region28: #{tpu_custom_call.1} parent=5 // pred_fallthru
        _
      %p5015 = scmp.le.s32.totalorder 2, %s13
      // Predicated region
      $region69: #{tpu_custom_call.1} parent=5 // pred_check
        %p5016 = pneg %p5015
      $region70: #{tpu_custom_call.1} parent=5 // pred_check_branch
        %5018 = sbr.rel (%p5016) target = $region72
      $region71: #{tpu_custom_call.1} parent=5 // pred_region
        %s5019 = ssub.s32 %s13, 2
        // Predicated region
        $region73: #{tpu_custom_call.1} parent=71 // pred_check
          %p5020 = pneg %p117
        $region74: #{tpu_custom_call.1} parent=71 // pred_check_branch
          %5022 = sbr.rel (%p5020) target = $region76
        $region75: #{tpu_custom_call.1} parent=71 // pred_region
          %s5023 = sand.u32 %s102, 1
          %s5024 = scalar_lea.sflag [#allocation6], %s5023
          %s5025 = sand.u32 %s102, 1
          %s5026 = smul.addr %s5025, 96
          %s5027 = scalar_lea.vmem [#allocation7], %s5026
          %5029 = dma.done %s5024, 1536
        $region76: #{tpu_custom_call.1} parent=71 // pred_fallthru
          _
      $region72: #{tpu_custom_call.1} parent=5 // pred_fallthru
        _
    $region6: #{tpu_custom_call.1} parent=1 // loop_footer
      %s17 = sadd.s32 1, %s13
    $region7: #{tpu_custom_call.1} parent=1 // loop_footer_branch
      %12 = sbr.rel target = $region3
    $region8: #{tpu_custom_call.1} parent=1 // loop_exit
      _
    %5030 = vsyncpa [#allocation5], 1
    %s5031 = scalar_lea.sflag [#allocation5], 1
    %5032 = vsyncpa %s5031, 1
    %5033 = vsyncpa [#allocation6], 1
    %s5034 = scalar_lea.sflag [#allocation6], 1
    %5035 = vsyncpa %s5034, 1
  %5036 = vsyncmov [#allocation3]
  %s5037 = vpop.sfrf %5036
  %p5038 = scmp.eq.s32.totalorder %s5037, 0
  %p5039 = pneg %p5038
  %5041 = shalt.err (%p5039)
  %s5042 = scalar_lea.sflag [#allocation3], 1
  %5043 = vsyncmov %s5042
  %s5044 = vpop.sfrf %5043
  %p5045 = scmp.eq.s32.totalorder %s5044, 0
  %p5046 = pneg %p5045
  %5048 = shalt.err (%p5046)
  %s5049 = scalar_lea.sflag [#allocation3], 2
  %5050 = vsyncmov %s5049
  %s5051 = vpop.sfrf %5050
  %p5052 = scmp.eq.s32.totalorder %s5051, 0
  %p5053 = pneg %p5052
  %5055 = shalt.err (%p5053)
  %s5056 = scalar_lea.sflag [#allocation3], 3
  %5057 = vsyncmov %s5056
  %s5058 = vpop.sfrf %5057
  %p5059 = scmp.eq.s32.totalorder %s5058, 0
  %p5060 = pneg %p5059
  %5062 = shalt.err (%p5060)

</llo_original>
